<compile_context>
chip_gen: v7x
topology: tpu7x:2x2x1
jax: 0.10.0
libtpu: 0.0.40
codegen_flags: <defaults>
</compile_context>

<pallas_src>
import functools

import jax
import jax.numpy as jnp
from jax.experimental import pallas as pl
from jax.experimental.pallas import tpu as pltpu

NEG_SLOPE = 0.2
EPS = 1e-8
VMEM_LIMIT = 48 * 1024 * 1024   # > default scoped limit, safe on v5e/v6e/v7x


def _leaky(x):
    return jnp.where(x > 0, x, NEG_SLOPE * x)


def _pick_tile(c):
    # 128-wide cout tiles match the MXU on v5e/v6e/v7x and give >=2 parallel
    # grid points at real channel counts; small counts fall back to full dim.
    return 128 if c % 128 == 0 else c


def _row_chunk(h, cap=32):
    # Largest even divisor of h that is <= cap (h is even by assertion).
    best = 2
    for c in range(2, min(h, cap) + 1, 2):
        if h % c == 0:
            best = c
    return best


# ----------------------------------------------------------------------------
# Shared conv body: 3x3 SAME conv for a chunk of output rows.
# ----------------------------------------------------------------------------
def _conv3x3_rows(x_ref, w_ref, r0, ch, valid_w):
    """x_ref: (1, H+2, Wp, Cin) bf16 (zero-padded, data at [1:H+1, 1:W+1]),
       w_ref: (3, 3*Cin, TC)   bf16 (row index = kh*Cin + c, leading dim = kw).
       Returns the conv output for rows [r0, r0+ch) as (ch, valid_w, TC) f32."""
    _, _, wp, cin = x_ref.shape
    tc = w_ref.shape[-1]
    # kh taps packed into the contraction dim via a lane-axis concat of three
    # aligned row views -- no shifted spatial slab copies are materialized.
    slab = jnp.concatenate(
        [x_ref[0, r0 + kh:r0 + kh + ch, :, :] for kh in range(3)], axis=-1)
    slab = slab.reshape(ch * wp, 3 * cin)                 # Wp % 8 == 0 -> cheap
    acc = None
    for kw in range(3):
        p = jnp.dot(slab, w_ref[kw], preferred_element_type=jnp.float32)
        # Realize the kw shift on the f32 partial (masked shifted add) + crop.
        p = p.reshape(ch, wp, tc)[:, kw:kw + valid_w, :]
        acc = p if acc is None else acc + p
    return acc


# ----------------------------------------------------------------------------
# Kernel A: conv1 + bias + LeakyReLU, output written already zero-padded.
#   grid = (N, Cmid tiles)   ["parallel", "parallel"]
# ----------------------------------------------------------------------------
def _conv1_kernel(xp_ref, w_ref, b_ref, y_ref, *, valid_w, row_chunk):
    h = xp_ref.shape[1] - 2
    tc = y_ref.shape[-1]
    y_ref[...] = jnp.zeros_like(y_ref)        # halo rows/cols (and pad cols) = 0
    b = b_ref[...].reshape(1, 1, tc)
    for r0 in range(0, h, row_chunk):
        out = _leaky(_conv3x3_rows(xp_ref, w_ref, r0, row_chunk, valid_w) + b)
        y_ref[0, 1 + r0:1 + r0 + row_chunk, 1:1 + valid_w, :] = (
            out.astype(y_ref.dtype))


def conv3x3_lrelu_padded(xp, w_pk, b, valid_w):
    n, hpad, wp, cin = xp.shape
    h = hpad - 2
    cout = w_pk.shape[-1]
    tc = _pick_tile(cout)
    rc = _row_chunk(h)
    kern = functools.partial(_conv1_kernel, valid_w=valid_w, row_chunk=rc)
    return pl.pallas_call(
        kern,
        out_shape=jax.ShapeDtypeStruct((n, hpad, wp, cout), jnp.bfloat16),
        grid=(n, cout // tc),
        in_specs=[
            pl.BlockSpec((1, hpad, wp, cin), lambda nb, j: (nb, 0, 0, 0)),
            pl.BlockSpec((3, 3 * cin, tc), lambda nb, j: (0, 0, j)),
            pl.BlockSpec((1, tc), lambda nb, j: (0, j)),
        ],
        out_specs=pl.BlockSpec((1, hpad, wp, tc), lambda nb, j: (nb, 0, 0, j)),
        compiler_params=pltpu.CompilerParams(
            dimension_semantics=("parallel", "parallel"),
            vmem_limit_bytes=VMEM_LIMIT),
    )(xp, w_pk, b)


# ----------------------------------------------------------------------------
# Kernel B: conv2 + bias + LeakyReLU + fused 2x2 average pool.
#   grid = (N, Cout tiles)   ["parallel", "parallel"]
# ----------------------------------------------------------------------------
def _conv2_pool_kernel(yp_ref, w_ref, b_ref, o_ref, hp_ref, *, valid_w,
                       row_chunk):
    # hp_ref: (row_chunk/2, W, TC) f32 -- chunk-sized H-pooled staging scratch.
    h = yp_ref.shape[1] - 2
    tc = o_ref.shape[-1]
    b = b_ref[...].reshape(1, 1, tc)
    for r0 in range(0, h, row_chunk):
        act = _leaky(_conv3x3_rows(yp_ref, w_ref, r0, row_chunk, valid_w) + b)
        # 2x2 average pool: H-pool on the value (leading-dim row pairs), then
        # W-pool via stride-2 sublane reads from the small chunk scratch.
        v = act.reshape(row_chunk // 2, 2, valid_w, tc)
        hp_ref[...] = v[:, 0, :, :] + v[:, 1, :, :]
        pooled = 0.25 * (hp_ref[:, pl.ds(0, valid_w // 2, stride=2), :]
                         + hp_ref[:, pl.ds(1, valid_w // 2, stride=2), :])
        o_ref[0, r0 // 2:(r0 + row_chunk) // 2, :, :] = pooled.astype(o_ref.dtype)


def conv3x3_lrelu_pool(yp, w_pk, b, valid_w):
    n, hpad, wp, cin = yp.shape
    h = hpad - 2
    cout = w_pk.shape[-1]
    tc = _pick_tile(cout)
    rc = _row_chunk(h)
    kern = functools.partial(_conv2_pool_kernel, valid_w=valid_w, row_chunk=rc)
    return pl.pallas_call(
        kern,
        out_shape=jax.ShapeDtypeStruct((n, h // 2, valid_w // 2, cout),
                                       jnp.float32),
        grid=(n, cout // tc),
        in_specs=[
            pl.BlockSpec((1, hpad, wp, cin), lambda nb, j: (nb, 0, 0, 0)),
            pl.BlockSpec((3, 3 * cin, tc), lambda nb, j: (0, 0, j)),
            pl.BlockSpec((1, tc), lambda nb, j: (0, j)),
        ],
        out_specs=pl.BlockSpec((1, h // 2, valid_w // 2, tc),
                               lambda nb, j: (nb, 0, 0, j)),
        scratch_shapes=[pltpu.VMEM((rc // 2, valid_w, tc), jnp.float32)],
        compiler_params=pltpu.CompilerParams(
            dimension_semantics=("parallel", "parallel"),
            vmem_limit_bytes=VMEM_LIMIT),
    )(yp, w_pk, b)


# ----------------------------------------------------------------------------
# Plain-JAX glue: phi_simple concat, minbatchstd, padding, layout plumbing
# ----------------------------------------------------------------------------
def _minbatchstd_nhwc(x, group_size=2):
    n, h, w, c = x.shape
    assert n % group_size == 0, "Batch size must be divisible by group size"
    g = group_size
    xg = x.reshape(n // g, g, h, w, c)
    y = jnp.sqrt(jnp.var(xg, axis=1, ddof=1) + EPS)      # unbiased, like torch
    y = y.reshape(n // g, -1).mean(axis=1)               # (n//g,)
    y = jnp.repeat(y, g)                                 # (n,)
    smap = jnp.broadcast_to(y[:, None, None, None], (n, h, w, 1))
    return jnp.concatenate([x, smap], axis=-1)


def discriminator_mid_block(a_prime, o, prepared):
    """a_prime: (N, img_c, H, W); o: (N, in_c, H, W) NCHW f32. Returns NCHW f32."""
    n, _, h, w = a_prime.shape
    assert h % 2 == 0 and w % 2 == 0
    # TODO(synk): generalize the fused in-kernel pooling to W not multiple of 8.
    assert w % 8 == 0
    w1, b1 = prepared["w1"], prepared["b1"]
    w2, b2 = prepared["w2"], prepared["b2"]

    x = jnp.concatenate(
        [jnp.transpose(a_prime, (0, 2, 3, 1)), jnp.transpose(o, (0, 2, 3, 1))],
        axis=-1)                                         # NHWC, phi_simple
    x = _minbatchstd_nhwc(x, group_size=2)               # +1 std channel
    # Zero-pad: 1 row top/bottom, 1 col left, and pad the right so the padded
    # width is a multiple of 8 (keeps in-kernel reshapes layout-preserving).
    wp = ((w + 2 + 7) // 8) * 8
    xp = jnp.pad(x, ((0, 0), (1, 1), (1, wp - w - 1), (0, 0))).astype(jnp.bfloat16)

    y1p = conv3x3_lrelu_padded(xp, w1, b1, w)            # (N, H+2, Wp, Cmid) bf16
    out3 = conv3x3_lrelu_pool(y1p, w2, b2, w)            # (N, H/2, W/2, Cout) f32
    # NOTE: downstream consumers could take the NHWC result directly; this
    # transpose only restores the PyTorch module's NCHW contract.
    return jnp.transpose(out3, (0, 3, 1, 2))


# ----------------------------------------------------------------------------
# Parameter handling
# ----------------------------------------------------------------------------
def prepare_params(p):
    """One-time repack: OIHW -> (kw, kh*Cin + c, Cout) bf16; biases (1, C) f32."""
    def conv_w(wt):
        o_c, i_c = wt.shape[0], wt.shape[1]
        return (jnp.transpose(wt, (3, 2, 1, 0))          # (kw, kh, I, O)
                .reshape(3, 3 * i_c, o_c)
                .astype(jnp.bfloat16))
    return dict(
        w1=conv_w(p["w_conv1"]),
        b1=p["b_conv1"].reshape(1, -1).astype(jnp.float32),
        w2=conv_w(p["w_conv2"]),
        b2=p["b_conv2"].reshape(1, -1).astype(jnp.float32),
    )


def init_params(key, in_channel, out_channel, img_channel=3):
    cin1 = img_channel + in_channel + 1
    k = jax.random.split(key, 4)
    w1 = jax.random.normal(k[0], (in_channel, cin1, 3, 3), jnp.float32) * jnp.sqrt(2.0 / (cin1 * 9))
    b1 = jax.random.uniform(k[1], (in_channel,), jnp.float32, -0.05, 0.05)
    w2 = jax.random.normal(k[2], (out_channel, in_channel, 3, 3), jnp.float32) * jnp.sqrt(2.0 / (in_channel * 9))
    b2 = jax.random.uniform(k[3], (out_channel,), jnp.float32, -0.05, 0.05)
    return dict(w_conv1=w1, b_conv1=b1, w_conv2=w2, b_conv2=b2)


# ----------------------------------------------------------------------------
# Pure-JAX reference (mirrors the kernel's bf16 operand rounding)
# ----------------------------------------------------------------------------
def reference(a_prime, o, p):
    def bf(t):
        return t.astype(jnp.bfloat16).astype(jnp.float32)

    x = jnp.concatenate([a_prime, o], axis=1)            # NCHW
    n, c, h, w = x.shape
    g = 2
    xg = x.reshape(n // g, g, c, h, w)
    s = jnp.sqrt(jnp.var(xg, axis=1, ddof=1) + EPS).reshape(n // g, -1).mean(axis=1)
    smap = jnp.broadcast_to(jnp.repeat(s, g)[:, None, None, None], (n, 1, h, w))
    x = jnp.concatenate([x, smap], axis=1)

    conv = functools.partial(
        jax.lax.conv_general_dilated,
        window_strides=(1, 1), padding=((1, 1), (1, 1)),
        dimension_numbers=("NCHW", "OIHW", "NCHW"),
        precision=jax.lax.Precision.HIGHEST)

    h1 = conv(bf(x), bf(p["w_conv1"])) + p["b_conv1"][None, :, None, None]
    h1 = bf(_leaky(h1))
    h2 = conv(h1, bf(p["w_conv2"])) + p["b_conv2"][None, :, None, None]
    h2 = _leaky(h2)
    out = h2.reshape(n, -1, h // 2, 2, w // 2, 2).mean(axis=(3, 5))
    return out


if __name__ == "__main__":
    # Small shapes consistent with the module (paper defaults shrunk).
    N, IN_C, OUT_C, IMG_C, H, W = 2, 16, 32, 3, 16, 16

    key = jax.random.PRNGKey(0)
    ka, ko, kp = jax.random.split(key, 3)
    a_prime = jax.random.normal(ka, (N, IMG_C, H, W), jnp.float32)
    o = jax.random.normal(ko, (N, IN_C, H, W), jnp.float32)

    raw = init_params(kp, IN_C, OUT_C, IMG_C)
    prepared = prepare_params(raw)

    fwd = jax.jit(discriminator_mid_block)
    out = jax.block_until_ready(fwd(a_prime, o, prepared))

    ref = reference(a_prime, o, raw)
    assert out.shape == (N, OUT_C, H // 2, W // 2), out.shape
    max_err = float(jnp.max(jnp.abs(out - ref)))
    assert jnp.allclose(out, ref, atol=2e-2, rtol=2e-2), max_err

    print("KERNEL_OK")
</pallas_src>

<mosaic_0001>
module attributes {stable_mosaic.version = 11 : i64} {
  func.func @_conv1_kernel(%arg0: i32, %arg1: i32, %arg2: memref<1x18x24x20xbf16, #tpu.memory_space<vmem>>, %arg3: memref<3x60x16xbf16, #tpu.memory_space<vmem>>, %arg4: memref<1x16xf32, #tpu.memory_space<vmem>>, %arg5: memref<1x18x24x16xbf16, #tpu.memory_space<vmem>>) attributes {dimension_semantics = [#tpu.dimension_semantics<parallel>, #tpu.dimension_semantics<parallel>], iteration_bounds = array<i64: 2, 1>, scalar_prefetch = 0 : i64, scratch_operands = 0 : i64, tpu.core_type = #tpu.core_type<tc>, window_params = [{transform_indices = @transform_0, window_bounds = array<i64: 1, 18, 24, 20>}, {transform_indices = @transform_1, window_bounds = array<i64: 3, 60, 16>}, {transform_indices = @transform_2, window_bounds = array<i64: 1, 16>}, {transform_indices = @transform_3, window_bounds = array<i64: 1, 18, 24, 16>}]} {
    %cst = arith.constant 0.000000e+00 : bf16
    %0 = vector.broadcast %cst : bf16 to vector<1x18x24x16xbf16>
    %c0 = arith.constant 0 : index
    %c0_0 = arith.constant 0 : index
    %c0_1 = arith.constant 0 : index
    %c0_2 = arith.constant 0 : index
    %1 = vector.load %arg5[%c0, %c0_0, %c0_1, %c0_2] : memref<1x18x24x16xbf16, #tpu.memory_space<vmem>>, vector<1x18x24x16xbf16>
    tpu.vector_store %arg5[%c0, %c0_0, %c0_1, %c0_2], %0 {strides = array<i32>} : memref<1x18x24x16xbf16, #tpu.memory_space<vmem>>, vector<1x18x24x16xbf16>,
    %c0_3 = arith.constant 0 : index
    %c0_4 = arith.constant 0 : index
    %2 = vector.load %arg4[%c0_3, %c0_4] : memref<1x16xf32, #tpu.memory_space<vmem>>, vector<1x16xf32>
    %3 = vector.shape_cast %2 : vector<1x16xf32> to vector<1x1x16xf32>
    %c0_5 = arith.constant 0 : index
    %c0_6 = arith.constant 0 : index
    %c0_7 = arith.constant 0 : index
    %c0_8 = arith.constant 0 : index
    %4 = vector.load %arg2[%c0_5, %c0_6, %c0_7, %c0_8] : memref<1x18x24x20xbf16, #tpu.memory_space<vmem>>, vector<1x16x24x20xbf16>
    %5 = vector.shape_cast %4 : vector<1x16x24x20xbf16> to vector<16x24x20xbf16>
    %c0_9 = arith.constant 0 : index
    %c1 = arith.constant 1 : index
    %c0_10 = arith.constant 0 : index
    %c0_11 = arith.constant 0 : index
    %6 = vector.load %arg2[%c0_9, %c1, %c0_10, %c0_11] : memref<1x18x24x20xbf16, #tpu.memory_space<vmem>>, vector<1x16x24x20xbf16>
    %7 = vector.shape_cast %6 : vector<1x16x24x20xbf16> to vector<16x24x20xbf16>
    %c0_12 = arith.constant 0 : index
    %c2 = arith.constant 2 : index
    %c0_13 = arith.constant 0 : index
    %c0_14 = arith.constant 0 : index
    %8 = vector.load %arg2[%c0_12, %c2, %c0_13, %c0_14] : memref<1x18x24x20xbf16, #tpu.memory_space<vmem>>, vector<1x16x24x20xbf16>
    %9 = vector.shape_cast %8 : vector<1x16x24x20xbf16> to vector<16x24x20xbf16>
    %10 = tpu.concatenate %5, %7, %9 in 2 : vector<16x24x20xbf16>, vector<16x24x20xbf16>, vector<16x24x20xbf16> -> vector<16x24x60xbf16>
    %11 = vector.shape_cast %10 : vector<16x24x60xbf16> to vector<384x60xbf16>
    %c0_15 = arith.constant 0 : index
    %c0_16 = arith.constant 0 : index
    %c0_17 = arith.constant 0 : index
    %12 = vector.load %arg3[%c0_15, %c0_16, %c0_17] : memref<3x60x16xbf16, #tpu.memory_space<vmem>>, vector<1x60x16xbf16>
    %13 = vector.shape_cast %12 : vector<1x60x16xbf16> to vector<60x16xbf16>
    %cst_18 = arith.constant dense<0.000000e+00> : vector<384x16xf32>
    %14 = tpu.matmul %11, %13, %cst_18 {dimension_numbers = #tpu.dot_dimension_numbers<[1], [0], [0], [1], [0, 0, 1, 1], [], []>} : vector<384x60xbf16>, vector<60x16xbf16>, vector<384x16xf32> -> vector<384x16xf32>
    %15 = vector.shape_cast %14 : vector<384x16xf32> to vector<16x24x16xf32>
    %16 = vector.extract_strided_slice %15 {offsets = [0, 0, 0], sizes = [16, 16, 16], strides = [1, 1, 1]} : vector<16x24x16xf32> to vector<16x16x16xf32>
    %c1_19 = arith.constant 1 : index
    %c0_20 = arith.constant 0 : index
    %c0_21 = arith.constant 0 : index
    %17 = vector.load %arg3[%c1_19, %c0_20, %c0_21] : memref<3x60x16xbf16, #tpu.memory_space<vmem>>, vector<1x60x16xbf16>
    %18 = vector.shape_cast %17 : vector<1x60x16xbf16> to vector<60x16xbf16>
    %cst_22 = arith.constant dense<0.000000e+00> : vector<384x16xf32>
    %19 = tpu.matmul %11, %18, %cst_22 {dimension_numbers = #tpu.dot_dimension_numbers<[1], [0], [0], [1], [0, 0, 1, 1], [], []>} : vector<384x60xbf16>, vector<60x16xbf16>, vector<384x16xf32> -> vector<384x16xf32>
    %20 = vector.shape_cast %19 : vector<384x16xf32> to vector<16x24x16xf32>
    %21 = vector.extract_strided_slice %20 {offsets = [0, 1, 0], sizes = [16, 16, 16], strides = [1, 1, 1]} : vector<16x24x16xf32> to vector<16x16x16xf32>
    %22 = arith.addf %16, %21 : vector<16x16x16xf32>
    %c2_23 = arith.constant 2 : index
    %c0_24 = arith.constant 0 : index
    %c0_25 = arith.constant 0 : index
    %23 = vector.load %arg3[%c2_23, %c0_24, %c0_25] : memref<3x60x16xbf16, #tpu.memory_space<vmem>>, vector<1x60x16xbf16>
    %24 = vector.shape_cast %23 : vector<1x60x16xbf16> to vector<60x16xbf16>
    %cst_26 = arith.constant dense<0.000000e+00> : vector<384x16xf32>
    %25 = tpu.matmul %11, %24, %cst_26 {dimension_numbers = #tpu.dot_dimension_numbers<[1], [0], [0], [1], [0, 0, 1, 1], [], []>} : vector<384x60xbf16>, vector<60x16xbf16>, vector<384x16xf32> -> vector<384x16xf32>
    %26 = vector.shape_cast %25 : vector<384x16xf32> to vector<16x24x16xf32>
    %27 = vector.extract_strided_slice %26 {offsets = [0, 2, 0], sizes = [16, 16, 16], strides = [1, 1, 1]} : vector<16x24x16xf32> to vector<16x16x16xf32>
    %28 = arith.addf %22, %27 : vector<16x16x16xf32>
    %29 = vector.broadcast %3 : vector<1x1x16xf32> to vector<16x16x16xf32>
    %30 = arith.addf %28, %29 : vector<16x16x16xf32>
    %cst_27 = arith.constant 0.000000e+00 : f32
    %31 = vector.broadcast %cst_27 : f32 to vector<16x16x16xf32>
    %32 = arith.cmpf ogt, %30, %31 : vector<16x16x16xf32>
    %cst_28 = arith.constant 2.000000e-01 : f32
    %33 = vector.broadcast %cst_28 : f32 to vector<16x16x16xf32>
    %34 = arith.mulf %33, %30 : vector<16x16x16xf32>
    %35 = arith.select %32, %30, %34 : vector<16x16x16xi1>, vector<16x16x16xf32>
    %36 = arith.truncf %35 : vector<16x16x16xf32> to vector<16x16x16xbf16>
    %c0_29 = arith.constant 0 : index
    %c1_30 = arith.constant 1 : index
    %c1_31 = arith.constant 1 : index
    %c0_32 = arith.constant 0 : index
    %37 = vector.load %arg5[%c0_29, %c1_30, %c1_31, %c0_32] : memref<1x18x24x16xbf16, #tpu.memory_space<vmem>>, vector<1x16x16x16xbf16>
    %38 = vector.shape_cast %37 : vector<1x16x16x16xbf16> to vector<16x16x16xbf16>
    %39 = vector.shape_cast %36 : vector<16x16x16xbf16> to vector<1x16x16x16xbf16>
    tpu.vector_store %arg5[%c0_29, %c1_30, %c1_31, %c0_32], %39 {strides = array<i32>} : memref<1x18x24x16xbf16, #tpu.memory_space<vmem>>, vector<1x16x16x16xbf16>,
    return
  }
  func.func @transform_0(%arg0: i32, %arg1: i32) -> (i32, i32, i32, i32) {
    %c0_i32 = arith.constant 0 : i32
    %c0_i32_0 = arith.constant 0 : i32
    %c0_i32_1 = arith.constant 0 : i32
    %c0_i32_2 = arith.constant 0 : i32
    return %arg0, %c0_i32, %c0_i32_0, %c0_i32_1 : i32, i32, i32, i32
  }
  func.func @transform_1(%arg0: i32, %arg1: i32) -> (i32, i32, i32) {
    %c0_i32 = arith.constant 0 : i32
    %c0_i32_0 = arith.constant 0 : i32
    %c0_i32_1 = arith.constant 0 : i32
    return %c0_i32, %c0_i32_0, %arg1 : i32, i32, i32
  }
  func.func @transform_2(%arg0: i32, %arg1: i32) -> (i32, i32) {
    %c0_i32 = arith.constant 0 : i32
    %c0_i32_0 = arith.constant 0 : i32
    return %c0_i32, %arg1 : i32, i32
  }
  func.func @transform_3(%arg0: i32, %arg1: i32) -> (i32, i32, i32, i32) {
    %c0_i32 = arith.constant 0 : i32
    %c0_i32_0 = arith.constant 0 : i32
    %c0_i32_1 = arith.constant 0 : i32
    return %arg0, %c0_i32, %c0_i32_0, %arg1 : i32, i32, i32, i32
  }
}

module attributes {stable_mosaic.version = 11 : i64} {
  func.func @_conv2_pool_kernel(%arg0: i32, %arg1: i32, %arg2: memref<1x18x24x16xbf16, #tpu.memory_space<vmem>>, %arg3: memref<3x48x32xbf16, #tpu.memory_space<vmem>>, %arg4: memref<1x32xf32, #tpu.memory_space<vmem>>, %arg5: memref<1x8x8x32xf32, #tpu.memory_space<vmem>>, %arg6: memref<8x16x32xf32, #tpu.memory_space<vmem>>) attributes {dimension_semantics = [#tpu.dimension_semantics<parallel>, #tpu.dimension_semantics<parallel>], iteration_bounds = array<i64: 2, 1>, scalar_prefetch = 0 : i64, scratch_operands = 1 : i64, tpu.core_type = #tpu.core_type<tc>, window_params = [{transform_indices = @transform_0, window_bounds = array<i64: 1, 18, 24, 16>}, {transform_indices = @transform_1, window_bounds = array<i64: 3, 48, 32>}, {transform_indices = @transform_2, window_bounds = array<i64: 1, 32>}, {transform_indices = @transform_3, window_bounds = array<i64: 1, 8, 8, 32>}]} {
    %c0 = arith.constant 0 : index
    %c0_0 = arith.constant 0 : index
    %0 = vector.load %arg4[%c0, %c0_0] : memref<1x32xf32, #tpu.memory_space<vmem>>, vector<1x32xf32>
    %1 = vector.shape_cast %0 : vector<1x32xf32> to vector<1x1x32xf32>
    %c0_1 = arith.constant 0 : index
    %c0_2 = arith.constant 0 : index
    %c0_3 = arith.constant 0 : index
    %c0_4 = arith.constant 0 : index
    %2 = vector.load %arg2[%c0_1, %c0_2, %c0_3, %c0_4] : memref<1x18x24x16xbf16, #tpu.memory_space<vmem>>, vector<1x16x24x16xbf16>
    %3 = vector.shape_cast %2 : vector<1x16x24x16xbf16> to vector<16x24x16xbf16>
    %c0_5 = arith.constant 0 : index
    %c1 = arith.constant 1 : index
    %c0_6 = arith.constant 0 : index
    %c0_7 = arith.constant 0 : index
    %4 = vector.load %arg2[%c0_5, %c1, %c0_6, %c0_7] : memref<1x18x24x16xbf16, #tpu.memory_space<vmem>>, vector<1x16x24x16xbf16>
    %5 = vector.shape_cast %4 : vector<1x16x24x16xbf16> to vector<16x24x16xbf16>
    %c0_8 = arith.constant 0 : index
    %c2 = arith.constant 2 : index
    %c0_9 = arith.constant 0 : index
    %c0_10 = arith.constant 0 : index
    %6 = vector.load %arg2[%c0_8, %c2, %c0_9, %c0_10] : memref<1x18x24x16xbf16, #tpu.memory_space<vmem>>, vector<1x16x24x16xbf16>
    %7 = vector.shape_cast %6 : vector<1x16x24x16xbf16> to vector<16x24x16xbf16>
    %8 = tpu.concatenate %3, %5, %7 in 2 : vector<16x24x16xbf16>, vector<16x24x16xbf16>, vector<16x24x16xbf16> -> vector<16x24x48xbf16>
    %9 = vector.shape_cast %8 : vector<16x24x48xbf16> to vector<384x48xbf16>
    %c0_11 = arith.constant 0 : index
    %c0_12 = arith.constant 0 : index
    %c0_13 = arith.constant 0 : index
    %10 = vector.load %arg3[%c0_11, %c0_12, %c0_13] : memref<3x48x32xbf16, #tpu.memory_space<vmem>>, vector<1x48x32xbf16>
    %11 = vector.shape_cast %10 : vector<1x48x32xbf16> to vector<48x32xbf16>
    %cst = arith.constant dense<0.000000e+00> : vector<384x32xf32>
    %12 = tpu.matmul %9, %11, %cst {dimension_numbers = #tpu.dot_dimension_numbers<[1], [0], [0], [1], [0, 0, 1, 1], [], []>} : vector<384x48xbf16>, vector<48x32xbf16>, vector<384x32xf32> -> vector<384x32xf32>
    %13 = vector.shape_cast %12 : vector<384x32xf32> to vector<16x24x32xf32>
    %14 = vector.extract_strided_slice %13 {offsets = [0, 0, 0], sizes = [16, 16, 32], strides = [1, 1, 1]} : vector<16x24x32xf32> to vector<16x16x32xf32>
    %c1_14 = arith.constant 1 : index
    %c0_15 = arith.constant 0 : index
    %c0_16 = arith.constant 0 : index
    %15 = vector.load %arg3[%c1_14, %c0_15, %c0_16] : memref<3x48x32xbf16, #tpu.memory_space<vmem>>, vector<1x48x32xbf16>
    %16 = vector.shape_cast %15 : vector<1x48x32xbf16> to vector<48x32xbf16>
    %cst_17 = arith.constant dense<0.000000e+00> : vector<384x32xf32>
    %17 = tpu.matmul %9, %16, %cst_17 {dimension_numbers = #tpu.dot_dimension_numbers<[1], [0], [0], [1], [0, 0, 1, 1], [], []>} : vector<384x48xbf16>, vector<48x32xbf16>, vector<384x32xf32> -> vector<384x32xf32>
    %18 = vector.shape_cast %17 : vector<384x32xf32> to vector<16x24x32xf32>
    %19 = vector.extract_strided_slice %18 {offsets = [0, 1, 0], sizes = [16, 16, 32], strides = [1, 1, 1]} : vector<16x24x32xf32> to vector<16x16x32xf32>
    %20 = arith.addf %14, %19 : vector<16x16x32xf32>
    %c2_18 = arith.constant 2 : index
    %c0_19 = arith.constant 0 : index
    %c0_20 = arith.constant 0 : index
    %21 = vector.load %arg3[%c2_18, %c0_19, %c0_20] : memref<3x48x32xbf16, #tpu.memory_space<vmem>>, vector<1x48x32xbf16>
    %22 = vector.shape_cast %21 : vector<1x48x32xbf16> to vector<48x32xbf16>
    %cst_21 = arith.constant dense<0.000000e+00> : vector<384x32xf32>
    %23 = tpu.matmul %9, %22, %cst_21 {dimension_numbers = #tpu.dot_dimension_numbers<[1], [0], [0], [1], [0, 0, 1, 1], [], []>} : vector<384x48xbf16>, vector<48x32xbf16>, vector<384x32xf32> -> vector<384x32xf32>
    %24 = vector.shape_cast %23 : vector<384x32xf32> to vector<16x24x32xf32>
    %25 = vector.extract_strided_slice %24 {offsets = [0, 2, 0], sizes = [16, 16, 32], strides = [1, 1, 1]} : vector<16x24x32xf32> to vector<16x16x32xf32>
    %26 = arith.addf %20, %25 : vector<16x16x32xf32>
    %27 = vector.broadcast %1 : vector<1x1x32xf32> to vector<16x16x32xf32>
    %28 = arith.addf %26, %27 : vector<16x16x32xf32>
    %cst_22 = arith.constant 0.000000e+00 : f32
    %29 = vector.broadcast %cst_22 : f32 to vector<16x16x32xf32>
    %30 = arith.cmpf ogt, %28, %29 : vector<16x16x32xf32>
    %cst_23 = arith.constant 2.000000e-01 : f32
    %31 = vector.broadcast %cst_23 : f32 to vector<16x16x32xf32>
    %32 = arith.mulf %31, %28 : vector<16x16x32xf32>
    %33 = arith.select %30, %28, %32 : vector<16x16x32xi1>, vector<16x16x32xf32>
    %34 = vector.shape_cast %33 : vector<16x16x32xf32> to vector<8x2x16x32xf32>
    %35 = vector.extract_strided_slice %34 {offsets = [0, 0, 0, 0], sizes = [8, 1, 16, 32], strides = [1, 1, 1, 1]} : vector<8x2x16x32xf32> to vector<8x1x16x32xf32>
    %36 = vector.shape_cast %35 : vector<8x1x16x32xf32> to vector<8x16x32xf32>
    %37 = vector.extract_strided_slice %34 {offsets = [0, 1, 0, 0], sizes = [8, 1, 16, 32], strides = [1, 1, 1, 1]} : vector<8x2x16x32xf32> to vector<8x1x16x32xf32>
    %38 = vector.shape_cast %37 : vector<8x1x16x32xf32> to vector<8x16x32xf32>
    %39 = arith.addf %36, %38 : vector<8x16x32xf32>
    %c0_24 = arith.constant 0 : index
    %c0_25 = arith.constant 0 : index
    %c0_26 = arith.constant 0 : index
    %40 = vector.load %arg6[%c0_24, %c0_25, %c0_26] : memref<8x16x32xf32, #tpu.memory_space<vmem>>, vector<8x16x32xf32>
    tpu.vector_store %arg6[%c0_24, %c0_25, %c0_26], %39 {strides = array<i32>} : memref<8x16x32xf32, #tpu.memory_space<vmem>>, vector<8x16x32xf32>,
    %c0_27 = arith.constant 0 : index
    %c0_28 = arith.constant 0 : index
    %c0_29 = arith.constant 0 : index
    %41 = tpu.strided_load %arg6[%c0_27, %c0_28, %c0_29] {strides = array<i32: 1, 2, 1>} : memref<8x16x32xf32, #tpu.memory_space<vmem>>, vector<8x8x32xf32>
    %c0_30 = arith.constant 0 : index
    %c1_31 = arith.constant 1 : index
    %c0_32 = arith.constant 0 : index
    %42 = tpu.strided_load %arg6[%c0_30, %c1_31, %c0_32] {strides = array<i32: 1, 2, 1>} : memref<8x16x32xf32, #tpu.memory_space<vmem>>, vector<8x8x32xf32>
    %43 = arith.addf %41, %42 : vector<8x8x32xf32>
    %cst_33 = arith.constant 2.500000e-01 : f32
    %44 = vector.broadcast %cst_33 : f32 to vector<8x8x32xf32>
    %45 = arith.mulf %44, %43 : vector<8x8x32xf32>
    %c0_34 = arith.constant 0 : index
    %c0_35 = arith.constant 0 : index
    %c0_36 = arith.constant 0 : index
    %c0_37 = arith.constant 0 : index
    %46 = vector.load %arg5[%c0_34, %c0_35, %c0_36, %c0_37] : memref<1x8x8x32xf32, #tpu.memory_space<vmem>>, vector<1x8x8x32xf32>
    %47 = vector.shape_cast %46 : vector<1x8x8x32xf32> to vector<8x8x32xf32>
    %48 = vector.shape_cast %45 : vector<8x8x32xf32> to vector<1x8x8x32xf32>
    tpu.vector_store %arg5[%c0_34, %c0_35, %c0_36, %c0_37], %48 {strides = array<i32>} : memref<1x8x8x32xf32, #tpu.memory_space<vmem>>, vector<1x8x8x32xf32>,
    return
  }
  func.func @transform_0(%arg0: i32, %arg1: i32) -> (i32, i32, i32, i32) {
    %c0_i32 = arith.constant 0 : i32
    %c0_i32_0 = arith.constant 0 : i32
    %c0_i32_1 = arith.constant 0 : i32
    %c0_i32_2 = arith.constant 0 : i32
    return %arg0, %c0_i32, %c0_i32_0, %c0_i32_1 : i32, i32, i32, i32
  }
  func.func @transform_1(%arg0: i32, %arg1: i32) -> (i32, i32, i32) {
    %c0_i32 = arith.constant 0 : i32
    %c0_i32_0 = arith.constant 0 : i32
    %c0_i32_1 = arith.constant 0 : i32
    return %c0_i32, %c0_i32_0, %arg1 : i32, i32, i32
  }
  func.func @transform_2(%arg0: i32, %arg1: i32) -> (i32, i32) {
    %c0_i32 = arith.constant 0 : i32
    %c0_i32_0 = arith.constant 0 : i32
    return %c0_i32, %arg1 : i32, i32
  }
  func.func @transform_3(%arg0: i32, %arg1: i32) -> (i32, i32, i32, i32) {
    %c0_i32 = arith.constant 0 : i32
    %c0_i32_0 = arith.constant 0 : i32
    %c0_i32_1 = arith.constant 0 : i32
    return %arg0, %c0_i32, %c0_i32_0, %arg1 : i32, i32, i32, i32
  }
}

</mosaic_0001>

<llo_original>
// kernel: discriminator_mid_block.3
$region0: #{discriminator_mid_block.3}
  #allocation0 [shape = 'u32[]', space=smem, size = 0x4, offset = 0x4, fixed_abs, tag = 'smem constant byte address 0x4 - core index']
  #allocation1 [shape = 'u32[144,128]{1,0:T(1,128)}', space=vmem, size = 0x12000, scoped, tag = 'internal scratch']
  #allocation2 [shape = 'f32[8,16,32]{2,1,0:T(8,128)}', space=vmem, size = 0x10000, scoped, tag = 'scratch operand']
  %s0 = inlined_call_operand.vmem [shape: bf16[2,18,24,16], index: 0, kind: input, shape index: {}]
  %s1 = inlined_call_operand.vmem [shape: bf16[3,48,32], index: 1, kind: input, shape index: {}]
  %s2 = inlined_call_operand.vmem [shape: f32[1,32], index: 2, kind: input, shape index: {}]
  %s3 = inlined_call_operand.hbm [shape: f32[2,8,8,32], index: 3, kind: output, shape index: {}]
  %s4 = sld [smem:[#allocation0]]
  $region45: #{discriminator_mid_block.3} parent=0
    _
  %s6 = ssub.s32 1, %s4
  %s7 = scalar_select 0, %s6, %s4
  $region1: #{discriminator_mid_block.3} parent=0
    #allocation3 [shape = 'u8[65536]{0}', space=vmem, size = 0x10000, scoped, tag = 'output window, operand 0']
    #allocation4 [shape = 's32[2]{0}', space=sflag, size = 0x8, scoped, tag = 'scoped memory for discriminator_mid_block.3']
    %8 = vsyncpa [#allocation4], 0
    %s9 = scalar_lea.sflag [#allocation4], 1
    %10 = vsyncpa %s9, 0
    loop: start=0, step=1, limit=4
    $region2: #{discriminator_mid_block.3} parent=1 // loop_pre_header
      _
    $region3: #{discriminator_mid_block.3} parent=1 // loop_header
      %s12 = sphi 0, %s16
      %p13 = scmp.ge.s32.totalorder %s12, 4
      %s19 = sphi 0, %s31
      %s20 = sphi 0, %s27
      %s21 = sphi 0, %s19
      %s22 = sphi 0, %s20
      %s23 = sphi 0, %s21
      %s24 = sphi 0, %s22
      %s34 = sphi 0, %s36
      %s37 = sphi 0, %s34
      %s38 = sphi 0, %s37
      %s54 = sphi 0, %s38
      %s60 = sphi 0, %s62
      %s63 = sphi 0, %s60
      %s64 = sphi 0, %s63
      %s80 = sphi 0, %s64
      %s86 = sphi 0, %s88
      %s89 = sphi 0, %s86
      %s90 = sphi 0, %s89
      %s106 = sphi 0, %s90
      %s114 = sphi 0, %s116
      %s117 = sphi 0, %s114
      %s118 = sphi 0, %s117
      %s134 = sphi 0, %s118
    $region4: #{discriminator_mid_block.3} parent=1 // loop_header_branch
      %15 = sbr.rel (%p13) target = $region8
    $region5: #{discriminator_mid_block.3} parent=1 // loop_body
      %s17 = ssub.s32 %s12, 1
      %s18 = ssub.s32 %s12, 2
      %s25 = sadd.s32 1, %s20
      %p26 = scmp.ge.s32.totalorder %s25, 1
      %s27 = scalar_select %p26, 0, %s25
      %s28 = sadd.s32 1, %s19
      %s29 = scalar_select %p26, %s28, %s19
      %p30 = scmp.ge.s32.totalorder %s29, 2
      %s31 = scalar_select %p30, 0, %s29
      %s32 = ssub.s32 %s19, %s31
      %p33 = scmp.eq.s32.totalorder %s32, 0
      %s35 = sadd.s32 %s34, 1
      %s36 = scalar_select %p33, %s34, %s35
      %p39 = pneg %p33
      %p40 = scmp.eq.s32.totalorder %s12, 1
      %p41 = por %p39, %p40
      %p42 = scmp.ne.s32.totalorder %s34, %s37
      %p43 = scmp.eq.s32.totalorder %s12, 0
      %p44 = por %p42, %p43
      %p45 = scmp.ne.s32.totalorder %s34, %s37
      %p46 = scmp.eq.s32.totalorder %s17, 1
      %p47 = por %p45, %p46
      %p48 = scmp.ne.s32.totalorder %s37, %s38
      %p49 = scmp.eq.s32.totalorder %s17, 0
      %p50 = por %p48, %p49
      %p51 = scmp.ne.s32.totalorder %s37, %s38
      %p52 = scmp.eq.s32.totalorder %s18, 1
      %p53 = por %p51, %p52
      %p55 = scmp.ne.s32.totalorder %s38, %s54
      %p56 = scmp.eq.s32.totalorder %s18, 0
      %p57 = por %p55, %p56
      %s58 = ssub.s32 %s20, %s27
      %p59 = scmp.eq.s32.totalorder %s58, 0
      %s61 = sadd.s32 %s60, 1
      %s62 = scalar_select %p59, %s60, %s61
      %p65 = pneg %p59
      %p66 = scmp.eq.s32.totalorder %s12, 1
      %p67 = por %p65, %p66
      %p68 = scmp.ne.s32.totalorder %s60, %s63
      %p69 = scmp.eq.s32.totalorder %s12, 0
      %p70 = por %p68, %p69
      %p71 = scmp.ne.s32.totalorder %s60, %s63
      %p72 = scmp.eq.s32.totalorder %s17, 1
      %p73 = por %p71, %p72
      %p74 = scmp.ne.s32.totalorder %s63, %s64
      %p75 = scmp.eq.s32.totalorder %s17, 0
      %p76 = por %p74, %p75
      %p77 = scmp.ne.s32.totalorder %s63, %s64
      %p78 = scmp.eq.s32.totalorder %s18, 1
      %p79 = por %p77, %p78
      %p81 = scmp.ne.s32.totalorder %s64, %s80
      %p82 = scmp.eq.s32.totalorder %s18, 0
      %p83 = por %p81, %p82
      %s84 = ssub.s32 %s20, %s27
      %p85 = scmp.eq.s32.totalorder %s84, 0
      %s87 = sadd.s32 %s86, 1
      %s88 = scalar_select %p85, %s86, %s87
      %p91 = pneg %p85
      %p92 = scmp.eq.s32.totalorder %s12, 1
      %p93 = por %p91, %p92
      %p94 = scmp.ne.s32.totalorder %s86, %s89
      %p95 = scmp.eq.s32.totalorder %s12, 0
      %p96 = por %p94, %p95
      %p97 = scmp.ne.s32.totalorder %s86, %s89
      %p98 = scmp.eq.s32.totalorder %s17, 1
      %p99 = por %p97, %p98
      %p100 = scmp.ne.s32.totalorder %s89, %s90
      %p101 = scmp.eq.s32.totalorder %s17, 0
      %p102 = por %p100, %p101
      %p103 = scmp.ne.s32.totalorder %s89, %s90
      %p104 = scmp.eq.s32.totalorder %s18, 1
      %p105 = por %p103, %p104
      %p107 = scmp.ne.s32.totalorder %s90, %s106
      %p108 = scmp.eq.s32.totalorder %s18, 0
      %p109 = por %p107, %p108
      %s110 = ssub.s32 %s19, %s31
      %s111 = ssub.s32 %s20, %s27
      %s112 = sor.u32 %s110, %s111
      %p113 = scmp.eq.s32.totalorder %s112, 0
      %s115 = sadd.s32 %s114, 1
      %s116 = scalar_select %p113, %s114, %s115
      %p119 = pneg %p113
      %p120 = scmp.eq.s32.totalorder %s12, 1
      %p121 = por %p119, %p120
      %p122 = scmp.ne.s32.totalorder %s114, %s117
      %p123 = scmp.eq.s32.totalorder %s12, 0
      %p124 = por %p122, %p123
      %p125 = scmp.ne.s32.totalorder %s114, %s117
      %p126 = scmp.eq.s32.totalorder %s17, 1
      %p127 = por %p125, %p126
      %p128 = scmp.ne.s32.totalorder %s117, %s118
      %p129 = scmp.eq.s32.totalorder %s17, 0
      %p130 = por %p128, %p129
      %p131 = scmp.ne.s32.totalorder %s117, %s118
      %p132 = scmp.eq.s32.totalorder %s18, 1
      %p133 = por %p131, %p132
      %p135 = scmp.ne.s32.totalorder %s118, %s134
      %p136 = scmp.eq.s32.totalorder %s18, 0
      %p137 = por %p135, %p136
      %p138 = scmp.le.s32.totalorder 1, %s12
      %p139 = scmp.lt.s32.totalorder %s12, 3
      %p140 = pnand %p138, %p139
      %p141 = pneg %p140
      // Predicated region
      $region9: #{discriminator_mid_block.3} parent=5 // pred_check
        _
      $region10: #{discriminator_mid_block.3} parent=5 // pred_check_branch
        %143 = sbr.rel (%p140) target = $region12
      $region11: #{discriminator_mid_block.3} parent=5 // pred_region
        %s144 = ssub.s32 %s12, 1
        // Predicated region
        $region13: #{discriminator_mid_block.3} parent=11 // pred_check
          %p145 = pneg %p76
        $region14: #{discriminator_mid_block.3} parent=11 // pred_check_branch
          %147 = sbr.rel (%p145) target = $region16
        $region15: #{discriminator_mid_block.3} parent=11 // pred_region
          %p148 = scmp.lt.s32.totalorder %s22, 0
          %s149 = scalar_select %p148, %s22, 0
          %s150 = smul.addr %s149, 4
          %s151 = scalar_lea.vmem %s1, %s150
        $region16: #{discriminator_mid_block.3} parent=11 // pred_fallthru
          _
        // Predicated region
        $region17: #{discriminator_mid_block.3} parent=11 // pred_check
          %p152 = pneg %p102
        $region18: #{discriminator_mid_block.3} parent=11 // pred_check_branch
          %154 = sbr.rel (%p152) target = $region20
        $region19: #{discriminator_mid_block.3} parent=11 // pred_region
          %p155 = scmp.lt.s32.totalorder %s22, 0
          %s156 = scalar_select %p155, %s22, 0
          %s157 = scalar_lea.vmem %s2, %s156
        $region20: #{discriminator_mid_block.3} parent=11 // pred_fallthru
          _
      $region12: #{discriminator_mid_block.3} parent=5 // pred_fallthru
        _
      %p158 = scmp.lt.s32.totalorder %s12, 2
      // Predicated region
      $region21: #{discriminator_mid_block.3} parent=5 // pred_check
        %p159 = pneg %p158
      $region22: #{discriminator_mid_block.3} parent=5 // pred_check_branch
        %161 = sbr.rel (%p159) target = $region24
      $region23: #{discriminator_mid_block.3} parent=5 // pred_region
        // Predicated region
        $region25: #{discriminator_mid_block.3} parent=23 // pred_check
          %p162 = pneg %p44
        $region26: #{discriminator_mid_block.3} parent=23 // pred_check_branch
          %164 = sbr.rel (%p162) target = $region28
        $region27: #{discriminator_mid_block.3} parent=23 // pred_region
          %p165 = scmp.lt.s32.totalorder %s19, 1
          %s166 = scalar_select %p165, %s19, 1
          %s167 = smul.addr %s166, 54
          %s168 = smul.addr %s167, 4
          %s169 = scalar_lea.vmem %s0, %s168
        $region28: #{discriminator_mid_block.3} parent=23 // pred_fallthru
          _
      $region24: #{discriminator_mid_block.3} parent=5 // pred_fallthru
        _
      %p170 = scmp.le.s32.totalorder 1, %s12
      %p171 = scmp.lt.s32.totalorder %s12, 3
      %p172 = pnand %p170, %p171
      %p173 = pneg %p172
      // Predicated region
      $region29: #{discriminator_mid_block.3} parent=5 // pred_check
        _
      $region30: #{discriminator_mid_block.3} parent=5 // pred_check_branch
        %175 = sbr.rel (%p172) target = $region32
      $region31: #{discriminator_mid_block.3} parent=5 // pred_region
        %s176 = ssub.s32 %s12, 1
        %p177 = scmp.lt.s32.totalorder %s21, 1
        %s178 = scalar_select %p177, %s21, 1
        %s179 = smul.addr %s178, 54
        %s180 = smul.addr %s179, 4
        %s181 = scalar_lea.vmem %s0, %s180
        %p182 = pneg %p50
        %p183 = pneg %p47
        %p184 = scmp.lt.s32.totalorder %s22, 0
        %s185 = scalar_select %p184, %s22, 0
        %s186 = smul.addr %s185, 4
        %s187 = scalar_lea.vmem %s1, %s186
        %p188 = pneg %p76
        %p189 = pneg %p73
        %p190 = scmp.lt.s32.totalorder %s22, 0
        %s191 = scalar_select %p190, %s22, 0
        %s192 = scalar_lea.vmem %s2, %s191
        %p193 = pneg %p102
        %p194 = pneg %p99
        %p195 = pneg %p130
        %p196 = pneg %p127
        %s197 = sand.u32 %s117, 1
        %s198 = scalar_lea.sflag [#allocation4], %s197
        %s199 = sand.u32 %s117, 1
        %s200 = smul.addr %s199, 64
        %s201 = scalar_lea.vmem [#allocation3], %s200
        %p202 = scmp.lt.s32.totalorder %s21, 1
        %s203 = scalar_select %p202, %s21, 1
        %s204 = smul.addr %s203, 54
        %s205 = smul.addr %s204, 4
        %s206 = scalar_lea.vmem %s0, %s205
        %p207 = scmp.lt.s32.totalorder %s22, 0
        %s208 = scalar_select %p207, %s22, 0
        %s209 = smul.addr %s208, 4
        %s210 = scalar_lea.vmem %s1, %s209
        %p211 = scmp.lt.s32.totalorder %s22, 0
        %s212 = scalar_select %p211, %s22, 0
        %s213 = scalar_lea.vmem %s2, %s212
        %v215 = vld [vmem:[%s213] sm:$0x1]
        %v216 = vld [vmem:[%s206] sm:$0xf]
        %v217 = vld [vmem:[%s206 + $0x4] sm:$0xf]
        %v218 = vld [vmem:[%s206 + $0x8] sm:$0xf]
        %v219 = vld [vmem:[%s206 + $0xc] sm:$0xf]
        %v220 = vld [vmem:[%s206 + $0x10] sm:$0xf]
        %v221 = vld [vmem:[%s206 + $0x14] sm:$0xf]
        %v222 = vld [vmem:[%s206 + $0x18] sm:$0xf]
        %v223 = vld [vmem:[%s206 + $0x1c] sm:$0xf]
        %v224 = vld [vmem:[%s206 + $0x20] sm:$0xf]
        %v225 = vld [vmem:[%s206 + $0x24] sm:$0xf]
        %v226 = vld [vmem:[%s206 + $0x28] sm:$0xf]
        %v227 = vld [vmem:[%s206 + $0x2c] sm:$0xf]
        %v228 = vld [vmem:[%s206 + $0x30] sm:$0xf]
        %v229 = vld [vmem:[%s206 + $0x34] sm:$0xf]
        %v230 = vld [vmem:[%s206 + $0x38] sm:$0xf]
        %v231 = vld [vmem:[%s206 + $0x3c] sm:$0xf]
        %v232 = vld [vmem:[%s206 + $0x40] sm:$0xf]
        %v233 = vld [vmem:[%s206 + $0x44] sm:$0xf]
        %v234 = vld [vmem:[%s206 + $0x48] sm:$0xf]
        %v235 = vld [vmem:[%s206 + $0x4c] sm:$0xf]
        %v236 = vld [vmem:[%s206 + $0x50] sm:$0xf]
        %v237 = vld [vmem:[%s206 + $0x54] sm:$0xf]
        %v238 = vld [vmem:[%s206 + $0x58] sm:$0xf]
        %v239 = vld [vmem:[%s206 + $0x5c] sm:$0xf]
        %v240 = vld [vmem:[%s206 + $0x60] sm:$0xf]
        %v241 = vld [vmem:[%s206 + $0x64] sm:$0xf]
        %v242 = vld [vmem:[%s206 + $0x68] sm:$0xf]
        %v243 = vld [vmem:[%s206 + $0x6c] sm:$0xf]
        %v244 = vld [vmem:[%s206 + $0x70] sm:$0xf]
        %v245 = vld [vmem:[%s206 + $0x74] sm:$0xf]
        %v246 = vld [vmem:[%s206 + $0x78] sm:$0xf]
        %v247 = vld [vmem:[%s206 + $0x7c] sm:$0xf]
        %v248 = vld [vmem:[%s206 + $0x80] sm:$0xf]
        %v249 = vld [vmem:[%s206 + $0x84] sm:$0xf]
        %v250 = vld [vmem:[%s206 + $0x88] sm:$0xf]
        %v251 = vld [vmem:[%s206 + $0x8c] sm:$0xf]
        %v252 = vld [vmem:[%s206 + $0x90] sm:$0xf]
        %v253 = vld [vmem:[%s206 + $0x94] sm:$0xf]
        %v254 = vld [vmem:[%s206 + $0x98] sm:$0xf]
        %v255 = vld [vmem:[%s206 + $0x9c] sm:$0xf]
        %v256 = vld [vmem:[%s206 + $0xa0] sm:$0xf]
        %v257 = vld [vmem:[%s206 + $0xa4] sm:$0xf]
        %v258 = vld [vmem:[%s206 + $0xa8] sm:$0xf]
        %v259 = vld [vmem:[%s206 + $0xac] sm:$0xf]
        %v260 = vld [vmem:[%s206 + $0xb0] sm:$0xf]
        %v261 = vld [vmem:[%s206 + $0xb4] sm:$0xf]
        %v262 = vld [vmem:[%s206 + $0xb8] sm:$0xf]
        %v263 = vld [vmem:[%s206 + $0xbc] sm:$0xf]
        %s264 = scalar_lea.vmem %s206, 12
        %v265 = vld [vmem:[%s264] sm:$0xf]
        %v266 = vld [vmem:[%s264 + $0x4] sm:$0xf]
        %v267 = vld [vmem:[%s264 + $0x8] sm:$0xf]
        %v268 = vld [vmem:[%s264 + $0xc] sm:$0xf]
        %v269 = vld [vmem:[%s264 + $0x10] sm:$0xf]
        %v270 = vld [vmem:[%s264 + $0x14] sm:$0xf]
        %v271 = vld [vmem:[%s264 + $0x18] sm:$0xf]
        %v272 = vld [vmem:[%s264 + $0x1c] sm:$0xf]
        %v273 = vld [vmem:[%s264 + $0x20] sm:$0xf]
        %v274 = vld [vmem:[%s264 + $0x24] sm:$0xf]
        %v275 = vld [vmem:[%s264 + $0x28] sm:$0xf]
        %v276 = vld [vmem:[%s264 + $0x2c] sm:$0xf]
        %v277 = vld [vmem:[%s264 + $0x30] sm:$0xf]
        %v278 = vld [vmem:[%s264 + $0x34] sm:$0xf]
        %v279 = vld [vmem:[%s264 + $0x38] sm:$0xf]
        %v280 = vld [vmem:[%s264 + $0x3c] sm:$0xf]
        %v281 = vld [vmem:[%s264 + $0x40] sm:$0xf]
        %v282 = vld [vmem:[%s264 + $0x44] sm:$0xf]
        %v283 = vld [vmem:[%s264 + $0x48] sm:$0xf]
        %v284 = vld [vmem:[%s264 + $0x4c] sm:$0xf]
        %v285 = vld [vmem:[%s264 + $0x50] sm:$0xf]
        %v286 = vld [vmem:[%s264 + $0x54] sm:$0xf]
        %v287 = vld [vmem:[%s264 + $0x58] sm:$0xf]
        %v288 = vld [vmem:[%s264 + $0x5c] sm:$0xf]
        %v289 = vld [vmem:[%s264 + $0x60] sm:$0xf]
        %v290 = vld [vmem:[%s264 + $0x64] sm:$0xf]
        %v291 = vld [vmem:[%s264 + $0x68] sm:$0xf]
        %v292 = vld [vmem:[%s264 + $0x6c] sm:$0xf]
        %v293 = vld [vmem:[%s264 + $0x70] sm:$0xf]
        %v294 = vld [vmem:[%s264 + $0x74] sm:$0xf]
        %v295 = vld [vmem:[%s264 + $0x78] sm:$0xf]
        %v296 = vld [vmem:[%s264 + $0x7c] sm:$0xf]
        %v297 = vld [vmem:[%s264 + $0x80] sm:$0xf]
        %v298 = vld [vmem:[%s264 + $0x84] sm:$0xf]
        %v299 = vld [vmem:[%s264 + $0x88] sm:$0xf]
        %v300 = vld [vmem:[%s264 + $0x8c] sm:$0xf]
        %v301 = vld [vmem:[%s264 + $0x90] sm:$0xf]
        %v302 = vld [vmem:[%s264 + $0x94] sm:$0xf]
        %v303 = vld [vmem:[%s264 + $0x98] sm:$0xf]
        %v304 = vld [vmem:[%s264 + $0x9c] sm:$0xf]
        %v305 = vld [vmem:[%s264 + $0xa0] sm:$0xf]
        %v306 = vld [vmem:[%s264 + $0xa4] sm:$0xf]
        %v307 = vld [vmem:[%s264 + $0xa8] sm:$0xf]
        %v308 = vld [vmem:[%s264 + $0xac] sm:$0xf]
        %v309 = vld [vmem:[%s264 + $0xb0] sm:$0xf]
        %v310 = vld [vmem:[%s264 + $0xb4] sm:$0xf]
        %v311 = vld [vmem:[%s264 + $0xb8] sm:$0xf]
        %v312 = vld [vmem:[%s264 + $0xbc] sm:$0xf]
        %s313 = scalar_lea.vmem %s206, 24
        %v314 = vld [vmem:[%s313] sm:$0xf]
        %v315 = vld [vmem:[%s313 + $0x4] sm:$0xf]
        %v316 = vld [vmem:[%s313 + $0x8] sm:$0xf]
        %v317 = vld [vmem:[%s313 + $0xc] sm:$0xf]
        %v318 = vld [vmem:[%s313 + $0x10] sm:$0xf]
        %v319 = vld [vmem:[%s313 + $0x14] sm:$0xf]
        %v320 = vld [vmem:[%s313 + $0x18] sm:$0xf]
        %v321 = vld [vmem:[%s313 + $0x1c] sm:$0xf]
        %v322 = vld [vmem:[%s313 + $0x20] sm:$0xf]
        %v323 = vld [vmem:[%s313 + $0x24] sm:$0xf]
        %v324 = vld [vmem:[%s313 + $0x28] sm:$0xf]
        %v325 = vld [vmem:[%s313 + $0x2c] sm:$0xf]
        %v326 = vld [vmem:[%s313 + $0x30] sm:$0xf]
        %v327 = vld [vmem:[%s313 + $0x34] sm:$0xf]
        %v328 = vld [vmem:[%s313 + $0x38] sm:$0xf]
        %v329 = vld [vmem:[%s313 + $0x3c] sm:$0xf]
        %v330 = vld [vmem:[%s313 + $0x40] sm:$0xf]
        %v331 = vld [vmem:[%s313 + $0x44] sm:$0xf]
        %v332 = vld [vmem:[%s313 + $0x48] sm:$0xf]
        %v333 = vld [vmem:[%s313 + $0x4c] sm:$0xf]
        %v334 = vld [vmem:[%s313 + $0x50] sm:$0xf]
        %v335 = vld [vmem:[%s313 + $0x54] sm:$0xf]
        %v336 = vld [vmem:[%s313 + $0x58] sm:$0xf]
        %v337 = vld [vmem:[%s313 + $0x5c] sm:$0xf]
        %v338 = vld [vmem:[%s313 + $0x60] sm:$0xf]
        %v339 = vld [vmem:[%s313 + $0x64] sm:$0xf]
        %v340 = vld [vmem:[%s313 + $0x68] sm:$0xf]
        %v341 = vld [vmem:[%s313 + $0x6c] sm:$0xf]
        %v342 = vld [vmem:[%s313 + $0x70] sm:$0xf]
        %v343 = vld [vmem:[%s313 + $0x74] sm:$0xf]
        %v344 = vld [vmem:[%s313 + $0x78] sm:$0xf]
        %v345 = vld [vmem:[%s313 + $0x7c] sm:$0xf]
        %v346 = vld [vmem:[%s313 + $0x80] sm:$0xf]
        %v347 = vld [vmem:[%s313 + $0x84] sm:$0xf]
        %v348 = vld [vmem:[%s313 + $0x88] sm:$0xf]
        %v349 = vld [vmem:[%s313 + $0x8c] sm:$0xf]
        %v350 = vld [vmem:[%s313 + $0x90] sm:$0xf]
        %v351 = vld [vmem:[%s313 + $0x94] sm:$0xf]
        %v352 = vld [vmem:[%s313 + $0x98] sm:$0xf]
        %v353 = vld [vmem:[%s313 + $0x9c] sm:$0xf]
        %v354 = vld [vmem:[%s313 + $0xa0] sm:$0xf]
        %v355 = vld [vmem:[%s313 + $0xa4] sm:$0xf]
        %v356 = vld [vmem:[%s313 + $0xa8] sm:$0xf]
        %v357 = vld [vmem:[%s313 + $0xac] sm:$0xf]
        %v358 = vld [vmem:[%s313 + $0xb0] sm:$0xf]
        %v359 = vld [vmem:[%s313 + $0xb4] sm:$0xf]
        %v360 = vld [vmem:[%s313 + $0xb8] sm:$0xf]
        %v361 = vld [vmem:[%s313 + $0xbc] sm:$0xf]
        %v410 = vunpack.c.l.b16 %v216
        %v411 = vunpack.c.l.b16 %v217
        %v412 = vunpack.c.l.b16 %v218
        %v413 = vunpack.c.l.b16 %v219
        %v414 = vunpack.c.l.b16 %v220
        %v415 = vunpack.c.l.b16 %v221
        %v416 = vunpack.c.l.b16 %v222
        %v417 = vunpack.c.l.b16 %v223
        %v418 = vunpack.c.l.b16 %v224
        %v419 = vunpack.c.l.b16 %v225
        %v420 = vunpack.c.l.b16 %v226
        %v421 = vunpack.c.l.b16 %v227
        %v422 = vunpack.c.l.b16 %v228
        %v423 = vunpack.c.l.b16 %v229
        %v424 = vunpack.c.l.b16 %v230
        %v425 = vunpack.c.l.b16 %v231
        %v426 = vunpack.c.l.b16 %v232
        %v427 = vunpack.c.l.b16 %v233
        %v428 = vunpack.c.l.b16 %v234
        %v429 = vunpack.c.l.b16 %v235
        %v430 = vunpack.c.l.b16 %v236
        %v431 = vunpack.c.l.b16 %v237
        %v432 = vunpack.c.l.b16 %v238
        %v433 = vunpack.c.l.b16 %v239
        %v434 = vunpack.c.l.b16 %v240
        %v435 = vunpack.c.l.b16 %v241
        %v436 = vunpack.c.l.b16 %v242
        %v437 = vunpack.c.l.b16 %v243
        %v438 = vunpack.c.l.b16 %v244
        %v439 = vunpack.c.l.b16 %v245
        %v440 = vunpack.c.l.b16 %v246
        %v441 = vunpack.c.l.b16 %v247
        %v442 = vunpack.c.l.b16 %v248
        %v443 = vunpack.c.l.b16 %v249
        %v444 = vunpack.c.l.b16 %v250
        %v445 = vunpack.c.l.b16 %v251
        %v446 = vunpack.c.l.b16 %v252
        %v447 = vunpack.c.l.b16 %v253
        %v448 = vunpack.c.l.b16 %v254
        %v449 = vunpack.c.l.b16 %v255
        %v450 = vunpack.c.l.b16 %v256
        %v451 = vunpack.c.l.b16 %v257
        %v452 = vunpack.c.l.b16 %v258
        %v453 = vunpack.c.l.b16 %v259
        %v454 = vunpack.c.l.b16 %v260
        %v455 = vunpack.c.l.b16 %v261
        %v456 = vunpack.c.l.b16 %v262
        %v457 = vunpack.c.l.b16 %v263
        %v458 = vpack.c.b16 %v411, %v410
        %v459 = vpack.c.b16 %v412, %v412
        %v460 = vpack.c.b16 %v414, %v413
        %v461 = vpack.c.b16 %v415, %v415
        %v462 = vpack.c.b16 %v417, %v416
        %v463 = vpack.c.b16 %v418, %v418
        %v464 = vpack.c.b16 %v420, %v419
        %v465 = vpack.c.b16 %v421, %v421
        %v466 = vpack.c.b16 %v423, %v422
        %v467 = vpack.c.b16 %v424, %v424
        %v468 = vpack.c.b16 %v426, %v425
        %v469 = vpack.c.b16 %v427, %v427
        %v470 = vpack.c.b16 %v429, %v428
        %v471 = vpack.c.b16 %v430, %v430
        %v472 = vpack.c.b16 %v432, %v431
        %v473 = vpack.c.b16 %v433, %v433
        %v474 = vpack.c.b16 %v435, %v434
        %v475 = vpack.c.b16 %v436, %v436
        %v476 = vpack.c.b16 %v438, %v437
        %v477 = vpack.c.b16 %v439, %v439
        %v478 = vpack.c.b16 %v441, %v440
        %v479 = vpack.c.b16 %v442, %v442
        %v480 = vpack.c.b16 %v444, %v443
        %v481 = vpack.c.b16 %v445, %v445
        %v482 = vpack.c.b16 %v447, %v446
        %v483 = vpack.c.b16 %v448, %v448
        %v484 = vpack.c.b16 %v450, %v449
        %v485 = vpack.c.b16 %v451, %v451
        %v486 = vpack.c.b16 %v453, %v452
        %v487 = vpack.c.b16 %v454, %v454
        %v488 = vpack.c.b16 %v456, %v455
        %v489 = vpack.c.b16 %v457, %v457
        %v538 = vunpack.c.l.b16 %v265
        %v539 = vunpack.c.l.b16 %v266
        %v540 = vunpack.c.l.b16 %v267
        %v541 = vunpack.c.l.b16 %v268
        %v542 = vunpack.c.l.b16 %v269
        %v543 = vunpack.c.l.b16 %v270
        %v544 = vunpack.c.l.b16 %v271
        %v545 = vunpack.c.l.b16 %v272
        %v546 = vunpack.c.l.b16 %v273
        %v547 = vunpack.c.l.b16 %v274
        %v548 = vunpack.c.l.b16 %v275
        %v549 = vunpack.c.l.b16 %v276
        %v550 = vunpack.c.l.b16 %v277
        %v551 = vunpack.c.l.b16 %v278
        %v552 = vunpack.c.l.b16 %v279
        %v553 = vunpack.c.l.b16 %v280
        %v554 = vunpack.c.l.b16 %v281
        %v555 = vunpack.c.l.b16 %v282
        %v556 = vunpack.c.l.b16 %v283
        %v557 = vunpack.c.l.b16 %v284
        %v558 = vunpack.c.l.b16 %v285
        %v559 = vunpack.c.l.b16 %v286
        %v560 = vunpack.c.l.b16 %v287
        %v561 = vunpack.c.l.b16 %v288
        %v562 = vunpack.c.l.b16 %v289
        %v563 = vunpack.c.l.b16 %v290
        %v564 = vunpack.c.l.b16 %v291
        %v565 = vunpack.c.l.b16 %v292
        %v566 = vunpack.c.l.b16 %v293
        %v567 = vunpack.c.l.b16 %v294
        %v568 = vunpack.c.l.b16 %v295
        %v569 = vunpack.c.l.b16 %v296
        %v570 = vunpack.c.l.b16 %v297
        %v571 = vunpack.c.l.b16 %v298
        %v572 = vunpack.c.l.b16 %v299
        %v573 = vunpack.c.l.b16 %v300
        %v574 = vunpack.c.l.b16 %v301
        %v575 = vunpack.c.l.b16 %v302
        %v576 = vunpack.c.l.b16 %v303
        %v577 = vunpack.c.l.b16 %v304
        %v578 = vunpack.c.l.b16 %v305
        %v579 = vunpack.c.l.b16 %v306
        %v580 = vunpack.c.l.b16 %v307
        %v581 = vunpack.c.l.b16 %v308
        %v582 = vunpack.c.l.b16 %v309
        %v583 = vunpack.c.l.b16 %v310
        %v584 = vunpack.c.l.b16 %v311
        %v585 = vunpack.c.l.b16 %v312
        %v586 = vpack.c.b16 %v539, %v538
        %v587 = vpack.c.b16 %v540, %v540
        %v588 = vpack.c.b16 %v542, %v541
        %v589 = vpack.c.b16 %v543, %v543
        %v590 = vpack.c.b16 %v545, %v544
        %v591 = vpack.c.b16 %v546, %v546
        %v592 = vpack.c.b16 %v548, %v547
        %v593 = vpack.c.b16 %v549, %v549
        %v594 = vpack.c.b16 %v551, %v550
        %v595 = vpack.c.b16 %v552, %v552
        %v596 = vpack.c.b16 %v554, %v553
        %v597 = vpack.c.b16 %v555, %v555
        %v598 = vpack.c.b16 %v557, %v556
        %v599 = vpack.c.b16 %v558, %v558
        %v600 = vpack.c.b16 %v560, %v559
        %v601 = vpack.c.b16 %v561, %v561
        %v602 = vpack.c.b16 %v563, %v562
        %v603 = vpack.c.b16 %v564, %v564
        %v604 = vpack.c.b16 %v566, %v565
        %v605 = vpack.c.b16 %v567, %v567
        %v606 = vpack.c.b16 %v569, %v568
        %v607 = vpack.c.b16 %v570, %v570
        %v608 = vpack.c.b16 %v572, %v571
        %v609 = vpack.c.b16 %v573, %v573
        %v610 = vpack.c.b16 %v575, %v574
        %v611 = vpack.c.b16 %v576, %v576
        %v612 = vpack.c.b16 %v578, %v577
        %v613 = vpack.c.b16 %v579, %v579
        %v614 = vpack.c.b16 %v581, %v580
        %v615 = vpack.c.b16 %v582, %v582
        %v616 = vpack.c.b16 %v584, %v583
        %v617 = vpack.c.b16 %v585, %v585
        %618 = vrot.lane.b32.xlu0 %v586, 16
        %v619 = vpop.permute.xlu0 %618
        %620 = vrot.lane.b32.xlu0 %v587, 16
        %v621 = vpop.permute.xlu0 %620
        %622 = vrot.lane.b32.xlu0 %v588, 16
        %v623 = vpop.permute.xlu0 %622
        %624 = vrot.lane.b32.xlu0 %v589, 16
        %v625 = vpop.permute.xlu0 %624
        %626 = vrot.lane.b32.xlu0 %v590, 16
        %v627 = vpop.permute.xlu0 %626
        %628 = vrot.lane.b32.xlu0 %v591, 16
        %v629 = vpop.permute.xlu0 %628
        %630 = vrot.lane.b32.xlu0 %v592, 16
        %v631 = vpop.permute.xlu0 %630
        %632 = vrot.lane.b32.xlu0 %v593, 16
        %v633 = vpop.permute.xlu0 %632
        %634 = vrot.lane.b32.xlu0 %v594, 16
        %v635 = vpop.permute.xlu0 %634
        %636 = vrot.lane.b32.xlu0 %v595, 16
        %v637 = vpop.permute.xlu0 %636
        %638 = vrot.lane.b32.xlu0 %v596, 16
        %v639 = vpop.permute.xlu0 %638
        %640 = vrot.lane.b32.xlu0 %v597, 16
        %v641 = vpop.permute.xlu0 %640
        %642 = vrot.lane.b32.xlu0 %v598, 16
        %v643 = vpop.permute.xlu0 %642
        %644 = vrot.lane.b32.xlu0 %v599, 16
        %v645 = vpop.permute.xlu0 %644
        %646 = vrot.lane.b32.xlu0 %v600, 16
        %v647 = vpop.permute.xlu0 %646
        %648 = vrot.lane.b32.xlu0 %v601, 16
        %v649 = vpop.permute.xlu0 %648
        %650 = vrot.lane.b32.xlu0 %v602, 16
        %v651 = vpop.permute.xlu0 %650
        %652 = vrot.lane.b32.xlu0 %v603, 16
        %v653 = vpop.permute.xlu0 %652
        %654 = vrot.lane.b32.xlu0 %v604, 16
        %v655 = vpop.permute.xlu0 %654
        %656 = vrot.lane.b32.xlu0 %v605, 16
        %v657 = vpop.permute.xlu0 %656
        %658 = vrot.lane.b32.xlu0 %v606, 16
        %v659 = vpop.permute.xlu0 %658
        %660 = vrot.lane.b32.xlu0 %v607, 16
        %v661 = vpop.permute.xlu0 %660
        %662 = vrot.lane.b32.xlu0 %v608, 16
        %v663 = vpop.permute.xlu0 %662
        %664 = vrot.lane.b32.xlu0 %v609, 16
        %v665 = vpop.permute.xlu0 %664
        %666 = vrot.lane.b32.xlu0 %v610, 16
        %v667 = vpop.permute.xlu0 %666
        %668 = vrot.lane.b32.xlu0 %v611, 16
        %v669 = vpop.permute.xlu0 %668
        %670 = vrot.lane.b32.xlu0 %v612, 16
        %v671 = vpop.permute.xlu0 %670
        %672 = vrot.lane.b32.xlu0 %v613, 16
        %v673 = vpop.permute.xlu0 %672
        %674 = vrot.lane.b32.xlu0 %v614, 16
        %v675 = vpop.permute.xlu0 %674
        %676 = vrot.lane.b32.xlu0 %v615, 16
        %v677 = vpop.permute.xlu0 %676
        %678 = vrot.lane.b32.xlu0 %v616, 16
        %v679 = vpop.permute.xlu0 %678
        %680 = vrot.lane.b32.xlu0 %v617, 16
        %v681 = vpop.permute.xlu0 %680
        %v730 = vunpack.c.l.b16 %v314
        %v731 = vunpack.c.l.b16 %v315
        %v732 = vunpack.c.l.b16 %v316
        %v733 = vunpack.c.l.b16 %v317
        %v734 = vunpack.c.l.b16 %v318
        %v735 = vunpack.c.l.b16 %v319
        %v736 = vunpack.c.l.b16 %v320
        %v737 = vunpack.c.l.b16 %v321
        %v738 = vunpack.c.l.b16 %v322
        %v739 = vunpack.c.l.b16 %v323
        %v740 = vunpack.c.l.b16 %v324
        %v741 = vunpack.c.l.b16 %v325
        %v742 = vunpack.c.l.b16 %v326
        %v743 = vunpack.c.l.b16 %v327
        %v744 = vunpack.c.l.b16 %v328
        %v745 = vunpack.c.l.b16 %v329
        %v746 = vunpack.c.l.b16 %v330
        %v747 = vunpack.c.l.b16 %v331
        %v748 = vunpack.c.l.b16 %v332
        %v749 = vunpack.c.l.b16 %v333
        %v750 = vunpack.c.l.b16 %v334
        %v751 = vunpack.c.l.b16 %v335
        %v752 = vunpack.c.l.b16 %v336
        %v753 = vunpack.c.l.b16 %v337
        %v754 = vunpack.c.l.b16 %v338
        %v755 = vunpack.c.l.b16 %v339
        %v756 = vunpack.c.l.b16 %v340
        %v757 = vunpack.c.l.b16 %v341
        %v758 = vunpack.c.l.b16 %v342
        %v759 = vunpack.c.l.b16 %v343
        %v760 = vunpack.c.l.b16 %v344
        %v761 = vunpack.c.l.b16 %v345
        %v762 = vunpack.c.l.b16 %v346
        %v763 = vunpack.c.l.b16 %v347
        %v764 = vunpack.c.l.b16 %v348
        %v765 = vunpack.c.l.b16 %v349
        %v766 = vunpack.c.l.b16 %v350
        %v767 = vunpack.c.l.b16 %v351
        %v768 = vunpack.c.l.b16 %v352
        %v769 = vunpack.c.l.b16 %v353
        %v770 = vunpack.c.l.b16 %v354
        %v771 = vunpack.c.l.b16 %v355
        %v772 = vunpack.c.l.b16 %v356
        %v773 = vunpack.c.l.b16 %v357
        %v774 = vunpack.c.l.b16 %v358
        %v775 = vunpack.c.l.b16 %v359
        %v776 = vunpack.c.l.b16 %v360
        %v777 = vunpack.c.l.b16 %v361
        %v778 = vpack.c.b16 %v731, %v730
        %v779 = vpack.c.b16 %v732, %v732
        %v780 = vpack.c.b16 %v734, %v733
        %v781 = vpack.c.b16 %v735, %v735
        %v782 = vpack.c.b16 %v737, %v736
        %v783 = vpack.c.b16 %v738, %v738
        %v784 = vpack.c.b16 %v740, %v739
        %v785 = vpack.c.b16 %v741, %v741
        %v786 = vpack.c.b16 %v743, %v742
        %v787 = vpack.c.b16 %v744, %v744
        %v788 = vpack.c.b16 %v746, %v745
        %v789 = vpack.c.b16 %v747, %v747
        %v790 = vpack.c.b16 %v749, %v748
        %v791 = vpack.c.b16 %v750, %v750
        %v792 = vpack.c.b16 %v752, %v751
        %v793 = vpack.c.b16 %v753, %v753
        %v794 = vpack.c.b16 %v755, %v754
        %v795 = vpack.c.b16 %v756, %v756
        %v796 = vpack.c.b16 %v758, %v757
        %v797 = vpack.c.b16 %v759, %v759
        %v798 = vpack.c.b16 %v761, %v760
        %v799 = vpack.c.b16 %v762, %v762
        %v800 = vpack.c.b16 %v764, %v763
        %v801 = vpack.c.b16 %v765, %v765
        %v802 = vpack.c.b16 %v767, %v766
        %v803 = vpack.c.b16 %v768, %v768
        %v804 = vpack.c.b16 %v770, %v769
        %v805 = vpack.c.b16 %v771, %v771
        %v806 = vpack.c.b16 %v773, %v772
        %v807 = vpack.c.b16 %v774, %v774
        %v808 = vpack.c.b16 %v776, %v775
        %v809 = vpack.c.b16 %v777, %v777
        %810 = vrot.lane.b32.xlu0 %v778, 32
        %v811 = vpop.permute.xlu0 %810
        %812 = vrot.lane.b32.xlu0 %v779, 32
        %v813 = vpop.permute.xlu0 %812
        %814 = vrot.lane.b32.xlu0 %v780, 32
        %v815 = vpop.permute.xlu0 %814
        %816 = vrot.lane.b32.xlu0 %v781, 32
        %v817 = vpop.permute.xlu0 %816
        %818 = vrot.lane.b32.xlu0 %v782, 32
        %v819 = vpop.permute.xlu0 %818
        %820 = vrot.lane.b32.xlu0 %v783, 32
        %v821 = vpop.permute.xlu0 %820
        %822 = vrot.lane.b32.xlu0 %v784, 32
        %v823 = vpop.permute.xlu0 %822
        %824 = vrot.lane.b32.xlu0 %v785, 32
        %v825 = vpop.permute.xlu0 %824
        %826 = vrot.lane.b32.xlu0 %v786, 32
        %v827 = vpop.permute.xlu0 %826
        %828 = vrot.lane.b32.xlu0 %v787, 32
        %v829 = vpop.permute.xlu0 %828
        %830 = vrot.lane.b32.xlu0 %v788, 32
        %v831 = vpop.permute.xlu0 %830
        %832 = vrot.lane.b32.xlu0 %v789, 32
        %v833 = vpop.permute.xlu0 %832
        %834 = vrot.lane.b32.xlu0 %v790, 32
        %v835 = vpop.permute.xlu0 %834
        %836 = vrot.lane.b32.xlu0 %v791, 32
        %v837 = vpop.permute.xlu0 %836
        %838 = vrot.lane.b32.xlu0 %v792, 32
        %v839 = vpop.permute.xlu0 %838
        %840 = vrot.lane.b32.xlu0 %v793, 32
        %v841 = vpop.permute.xlu0 %840
        %842 = vrot.lane.b32.xlu0 %v794, 32
        %v843 = vpop.permute.xlu0 %842
        %844 = vrot.lane.b32.xlu0 %v795, 32
        %v845 = vpop.permute.xlu0 %844
        %846 = vrot.lane.b32.xlu0 %v796, 32
        %v847 = vpop.permute.xlu0 %846
        %848 = vrot.lane.b32.xlu0 %v797, 32
        %v849 = vpop.permute.xlu0 %848
        %850 = vrot.lane.b32.xlu0 %v798, 32
        %v851 = vpop.permute.xlu0 %850
        %852 = vrot.lane.b32.xlu0 %v799, 32
        %v853 = vpop.permute.xlu0 %852
        %854 = vrot.lane.b32.xlu0 %v800, 32
        %v855 = vpop.permute.xlu0 %854
        %856 = vrot.lane.b32.xlu0 %v801, 32
        %v857 = vpop.permute.xlu0 %856
        %858 = vrot.lane.b32.xlu0 %v802, 32
        %v859 = vpop.permute.xlu0 %858
        %860 = vrot.lane.b32.xlu0 %v803, 32
        %v861 = vpop.permute.xlu0 %860
        %862 = vrot.lane.b32.xlu0 %v804, 32
        %v863 = vpop.permute.xlu0 %862
        %864 = vrot.lane.b32.xlu0 %v805, 32
        %v865 = vpop.permute.xlu0 %864
        %866 = vrot.lane.b32.xlu0 %v806, 32
        %v867 = vpop.permute.xlu0 %866
        %868 = vrot.lane.b32.xlu0 %v807, 32
        %v869 = vpop.permute.xlu0 %868
        %870 = vrot.lane.b32.xlu0 %v808, 32
        %v871 = vpop.permute.xlu0 %870
        %872 = vrot.lane.b32.xlu0 %v809, 32
        %v873 = vpop.permute.xlu0 %872
        %vm874 = vcmask 130048
        %v877 = vsel %vm874, %v458, %v619
        %v880 = vsel %vm874, %v459, %v621
        %v883 = vsel %vm874, %v460, %v623
        %v886 = vsel %vm874, %v461, %v625
        %v889 = vsel %vm874, %v462, %v627
        %v892 = vsel %vm874, %v463, %v629
        %v895 = vsel %vm874, %v464, %v631
        %v898 = vsel %vm874, %v465, %v633
        %v901 = vsel %vm874, %v466, %v635
        %v904 = vsel %vm874, %v467, %v637
        %v907 = vsel %vm874, %v468, %v639
        %v910 = vsel %vm874, %v469, %v641
        %v913 = vsel %vm874, %v470, %v643
        %v916 = vsel %vm874, %v471, %v645
        %v919 = vsel %vm874, %v472, %v647
        %v922 = vsel %vm874, %v473, %v649
        %v925 = vsel %vm874, %v474, %v651
        %v928 = vsel %vm874, %v475, %v653
        %v931 = vsel %vm874, %v476, %v655
        %v934 = vsel %vm874, %v477, %v657
        %v937 = vsel %vm874, %v478, %v659
        %v940 = vsel %vm874, %v479, %v661
        %v943 = vsel %vm874, %v480, %v663
        %v946 = vsel %vm874, %v481, %v665
        %v949 = vsel %vm874, %v482, %v667
        %v952 = vsel %vm874, %v483, %v669
        %v955 = vsel %vm874, %v484, %v671
        %v958 = vsel %vm874, %v485, %v673
        %v961 = vsel %vm874, %v486, %v675
        %v964 = vsel %vm874, %v487, %v677
        %v967 = vsel %vm874, %v488, %v679
        %v970 = vsel %vm874, %v489, %v681
        %vm971 = vcmask 261120
        %v973 = vsel %vm971, %v877, %v811
        %v975 = vsel %vm971, %v880, %v813
        %v977 = vsel %vm971, %v883, %v815
        %v979 = vsel %vm971, %v886, %v817
        %v981 = vsel %vm971, %v889, %v819
        %v983 = vsel %vm971, %v892, %v821
        %v985 = vsel %vm971, %v895, %v823
        %v987 = vsel %vm971, %v898, %v825
        %v989 = vsel %vm971, %v901, %v827
        %v991 = vsel %vm971, %v904, %v829
        %v993 = vsel %vm971, %v907, %v831
        %v995 = vsel %vm971, %v910, %v833
        %v997 = vsel %vm971, %v913, %v835
        %v999 = vsel %vm971, %v916, %v837
        %v1001 = vsel %vm971, %v919, %v839
        %v1003 = vsel %vm971, %v922, %v841
        %v1005 = vsel %vm971, %v925, %v843
        %v1007 = vsel %vm971, %v928, %v845
        %v1009 = vsel %vm971, %v931, %v847
        %v1011 = vsel %vm971, %v934, %v849
        %v1013 = vsel %vm971, %v937, %v851
        %v1015 = vsel %vm971, %v940, %v853
        %v1017 = vsel %vm971, %v943, %v855
        %v1019 = vsel %vm971, %v946, %v857
        %v1021 = vsel %vm971, %v949, %v859
        %v1023 = vsel %vm971, %v952, %v861
        %v1025 = vsel %vm971, %v955, %v863
        %v1027 = vsel %vm971, %v958, %v865
        %v1029 = vsel %vm971, %v961, %v867
        %v1031 = vsel %vm971, %v964, %v869
        %v1033 = vsel %vm971, %v967, %v871
        %v1035 = vsel %vm971, %v970, %v873
        %v1068 = vunpack.c.l.b16 %v973
        %v1069 = vunpack.c.h.b16 %v973
        %v1070 = vunpack.c.l.b16 %v975
        %v1071 = vunpack.c.l.b16 %v977
        %v1072 = vunpack.c.h.b16 %v977
        %v1073 = vunpack.c.l.b16 %v979
        %v1074 = vunpack.c.l.b16 %v981
        %v1075 = vunpack.c.h.b16 %v981
        %v1076 = vunpack.c.l.b16 %v983
        %v1077 = vunpack.c.l.b16 %v985
        %v1078 = vunpack.c.h.b16 %v985
        %v1079 = vunpack.c.l.b16 %v987
        %v1080 = vunpack.c.l.b16 %v989
        %v1081 = vunpack.c.h.b16 %v989
        %v1082 = vunpack.c.l.b16 %v991
        %v1083 = vunpack.c.l.b16 %v993
        %v1084 = vunpack.c.h.b16 %v993
        %v1085 = vunpack.c.l.b16 %v995
        %v1086 = vunpack.c.l.b16 %v997
        %v1087 = vunpack.c.h.b16 %v997
        %v1088 = vunpack.c.l.b16 %v999
        %v1089 = vunpack.c.l.b16 %v1001
        %v1090 = vunpack.c.h.b16 %v1001
        %v1091 = vunpack.c.l.b16 %v1003
        %v1092 = vunpack.c.l.b16 %v1005
        %v1093 = vunpack.c.h.b16 %v1005
        %v1094 = vunpack.c.l.b16 %v1007
        %v1095 = vunpack.c.l.b16 %v1009
        %v1096 = vunpack.c.h.b16 %v1009
        %v1097 = vunpack.c.l.b16 %v1011
        %v1098 = vunpack.c.l.b16 %v1013
        %v1099 = vunpack.c.h.b16 %v1013
        %v1100 = vunpack.c.l.b16 %v1015
        %v1101 = vunpack.c.l.b16 %v1017
        %v1102 = vunpack.c.h.b16 %v1017
        %v1103 = vunpack.c.l.b16 %v1019
        %v1104 = vunpack.c.l.b16 %v1021
        %v1105 = vunpack.c.h.b16 %v1021
        %v1106 = vunpack.c.l.b16 %v1023
        %v1107 = vunpack.c.l.b16 %v1025
        %v1108 = vunpack.c.h.b16 %v1025
        %v1109 = vunpack.c.l.b16 %v1027
        %v1110 = vunpack.c.l.b16 %v1029
        %v1111 = vunpack.c.h.b16 %v1029
        %v1112 = vunpack.c.l.b16 %v1031
        %v1113 = vunpack.c.l.b16 %v1033
        %v1114 = vunpack.c.h.b16 %v1033
        %v1115 = vunpack.c.l.b16 %v1035
        %v1116 = vld [vmem:[%s210] sm:$0xf]
        %v1117 = vld [vmem:[%s210 + $0x4] sm:$0xf]
        %v1118 = vld [vmem:[%s210 + $0x8] sm:$0xf]
        %v1119 = vld [vmem:[%s210 + $0xc] sm:$0xf]
        %v1120 = vld [vmem:[%s210 + $0x10] sm:$0xf]
        %v1121 = vld [vmem:[%s210 + $0x14] sm:$0xf]
        %v1122 = vpack.c.b16 %v1069, %v1068
        %v1123 = vpack.c.b16 %v1071, %v1070
        %v1124 = vpack.c.b16 %v1073, %v1072
        %v1125 = vpack.c.b16 %v1075, %v1074
        %v1126 = vpack.c.b16 %v1077, %v1076
        %v1127 = vpack.c.b16 %v1079, %v1078
        %v1128 = vpack.c.b16 %v1081, %v1080
        %v1129 = vpack.c.b16 %v1083, %v1082
        %v1130 = vpack.c.b16 %v1085, %v1084
        %v1131 = vpack.c.b16 %v1087, %v1086
        %v1132 = vpack.c.b16 %v1089, %v1088
        %v1133 = vpack.c.b16 %v1091, %v1090
        %v1134 = vpack.c.b16 %v1093, %v1092
        %v1135 = vpack.c.b16 %v1095, %v1094
        %v1136 = vpack.c.b16 %v1097, %v1096
        %v1137 = vpack.c.b16 %v1099, %v1098
        %v1138 = vpack.c.b16 %v1101, %v1100
        %v1139 = vpack.c.b16 %v1103, %v1102
        %v1140 = vpack.c.b16 %v1105, %v1104
        %v1141 = vpack.c.b16 %v1107, %v1106
        %v1142 = vpack.c.b16 %v1109, %v1108
        %v1143 = vpack.c.b16 %v1111, %v1110
        %v1144 = vpack.c.b16 %v1113, %v1112
        %v1145 = vpack.c.b16 %v1115, %v1114
        %v1152 = vunpack.c.l.b16 %v1116
        %v1153 = vunpack.c.l.b16 %v1117
        %v1154 = vunpack.c.l.b16 %v1118
        %v1155 = vunpack.c.l.b16 %v1119
        %v1156 = vunpack.c.l.b16 %v1120
        %v1157 = vunpack.c.l.b16 %v1121
        %v1158 = vpack.c.b16 %v1153, %v1152
        %v1159 = vpack.c.b16 %v1155, %v1154
        %v1160 = vpack.c.b16 %v1157, %v1156
        %vm1164 = vcmask 392192
        %v1166 = vsel %vm1164, %v1122, 0
        %v1169 = vsel %vm1164, %v1123, 0
        %v1172 = vsel %vm1164, %v1124, 0
        %v1175 = vsel %vm1164, %v1125, 0
        %v1178 = vsel %vm1164, %v1126, 0
        %v1181 = vsel %vm1164, %v1127, 0
        %v1184 = vsel %vm1164, %v1128, 0
        %v1187 = vsel %vm1164, %v1129, 0
        %v1190 = vsel %vm1164, %v1130, 0
        %v1193 = vsel %vm1164, %v1131, 0
        %v1196 = vsel %vm1164, %v1132, 0
        %v1199 = vsel %vm1164, %v1133, 0
        %v1202 = vsel %vm1164, %v1134, 0
        %v1205 = vsel %vm1164, %v1135, 0
        %v1208 = vsel %vm1164, %v1136, 0
        %v1211 = vsel %vm1164, %v1137, 0
        %v1214 = vsel %vm1164, %v1138, 0
        %v1217 = vsel %vm1164, %v1139, 0
        %v1220 = vsel %vm1164, %v1140, 0
        %v1223 = vsel %vm1164, %v1141, 0
        %v1226 = vsel %vm1164, %v1142, 0
        %v1229 = vsel %vm1164, %v1143, 0
        %v1232 = vsel %vm1164, %v1144, 0
        %v1235 = vsel %vm1164, %v1145, 0
        %1237 = vmatprep.subr.bf16.mxu0 0
        %1238 = vmatpush1.bf16.msra.mxu0 %v1158
        %1239 = vmatprep.subr.bf16.mxu0 0
        %1240 = vmatpush1.bf16.msra.mxu0 %v1159
        %1241 = vmatprep.subr.bf16.mxu0 0
        %1242 = vmatpush1.bf16.msra.mxu0 %v1160
        %1243 = vmatprep.subr.bf16.mxu0 0
        %1244 = vmatpush1.bf16.msra.mxu0 0
        %1245 = vmatprep.subr.bf16.mxu0 0
        %1246 = vmatpush1.bf16.msra.mxu0 0
        %1247 = vmatprep.subr.bf16.mxu0 0
        %1248 = vmatpush1.bf16.msra.mxu0 0
        %1249 = vmatprep.subr.bf16.mxu0 0
        %1250 = vmatpush1.bf16.msra.mxu0 0
        %1251 = vmatprep.subr.bf16.mxu0 0
        %1252 = vmatpush1.bf16.msra.mxu0 0
        %1253 = vmatprep.subr.bf16.mxu0 0
        %1254 = vmatpush1.bf16.msra.mxu0 0
        %1255 = vmatprep.subr.bf16.mxu0 0
        %1256 = vmatpush1.bf16.msra.mxu0 0
        %1257 = vmatprep.subr.bf16.mxu0 0
        %1258 = vmatpush1.bf16.msra.mxu0 0
        %1259 = vmatprep.subr.bf16.mxu0 0
        %1260 = vmatpush1.bf16.msra.mxu0 0
        %1261 = vmatprep.subr.bf16.mxu0 0
        %1262 = vmatpush1.bf16.msra.mxu0 0
        %1263 = vmatprep.subr.bf16.mxu0 0
        %1264 = vmatpush1.bf16.msra.mxu0 0
        %1265 = vmatprep.subr.bf16.mxu0 0
        %1266 = vmatpush1.bf16.msra.mxu0 0
        %1267 = vmatprep.subr.bf16.mxu0 0
        %1268 = vmatpush1.bf16.msra.mxu0 0
        %1269 = vmatprep.mubr.bf16.mxu0 0
        %1270 = vmatmul.mubr.bf16.gmra.mrb[0].mxu0 %v1166
        %v1271 = vpop.f32.mrb[0].mxu0
        %v1272 = vadd.f32 0.0, %v1271
        %v1273 = vpop.f32.mrb[0].mxu0
        %v1274 = vpop.f32.mrb[0].mxu0
        %v1275 = vadd.f32 0.0, %v1274
        %v1276 = vpop.f32.mrb[0].mxu0
        %1277 = vmatprep.mubr.bf16.mxu0 0
        %1278 = vmatmul.mubr.bf16.gmra.mrb[0].mxu0 %v1169
        %v1279 = vpop.f32.mrb[0].mxu0
        %v1280 = vpop.f32.mrb[0].mxu0
        %v1281 = vpop.f32.mrb[0].mxu0
        %v1282 = vadd.f32 0.0, %v1281
        %v1283 = vpop.f32.mrb[0].mxu0
        %1284 = vmatprep.mubr.bf16.mxu0 0
        %1285 = vmatmul.mubr.bf16.gmra.mrb[0].mxu0 %v1172
        %v1286 = vpop.f32.mrb[0].mxu0
        %v1287 = vadd.f32 0.0, %v1286
        %v1288 = vpop.f32.mrb[0].mxu0
        %v1289 = vpop.f32.mrb[0].mxu0
        %v1290 = vpop.f32.mrb[0].mxu0
        %1291 = vmatprep.mubr.bf16.mxu0 0
        %1292 = vmatmul.mubr.bf16.gmra.mrb[0].mxu0 %v1175
        %v1293 = vpop.f32.mrb[0].mxu0
        %v1294 = vadd.f32 0.0, %v1293
        %v1295 = vpop.f32.mrb[0].mxu0
        %v1296 = vpop.f32.mrb[0].mxu0
        %v1297 = vadd.f32 0.0, %v1296
        %v1298 = vpop.f32.mrb[0].mxu0
        %1299 = vmatprep.mubr.bf16.mxu0 0
        %1300 = vmatmul.mubr.bf16.gmra.mrb[0].mxu0 %v1178
        %v1301 = vpop.f32.mrb[0].mxu0
        %v1302 = vpop.f32.mrb[0].mxu0
        %v1303 = vpop.f32.mrb[0].mxu0
        %v1304 = vadd.f32 0.0, %v1303
        %v1305 = vpop.f32.mrb[0].mxu0
        %1306 = vmatprep.mubr.bf16.mxu0 0
        %1307 = vmatmul.mubr.bf16.gmra.mrb[0].mxu0 %v1181
        %v1308 = vpop.f32.mrb[0].mxu0
        %v1309 = vadd.f32 0.0, %v1308
        %v1310 = vpop.f32.mrb[0].mxu0
        %v1311 = vpop.f32.mrb[0].mxu0
        %v1312 = vpop.f32.mrb[0].mxu0
        %1313 = vmatprep.mubr.bf16.mxu0 0
        %1314 = vmatmul.mubr.bf16.gmra.mrb[0].mxu0 %v1184
        %v1315 = vpop.f32.mrb[0].mxu0
        %v1316 = vadd.f32 0.0, %v1315
        %v1317 = vpop.f32.mrb[0].mxu0
        %v1318 = vpop.f32.mrb[0].mxu0
        %v1319 = vadd.f32 0.0, %v1318
        %v1320 = vpop.f32.mrb[0].mxu0
        %1321 = vmatprep.mubr.bf16.mxu0 0
        %1322 = vmatmul.mubr.bf16.gmra.mrb[0].mxu0 %v1187
        %v1323 = vpop.f32.mrb[0].mxu0
        %v1324 = vpop.f32.mrb[0].mxu0
        %v1325 = vpop.f32.mrb[0].mxu0
        %v1326 = vadd.f32 0.0, %v1325
        %v1327 = vpop.f32.mrb[0].mxu0
        %1328 = vmatprep.mubr.bf16.mxu0 0
        %1329 = vmatmul.mubr.bf16.gmra.mrb[0].mxu0 %v1190
        %v1330 = vpop.f32.mrb[0].mxu0
        %v1331 = vadd.f32 0.0, %v1330
        %v1332 = vpop.f32.mrb[0].mxu0
        %v1333 = vpop.f32.mrb[0].mxu0
        %v1334 = vpop.f32.mrb[0].mxu0
        %1335 = vmatprep.mubr.bf16.mxu0 0
        %1336 = vmatmul.mubr.bf16.gmra.mrb[0].mxu0 %v1193
        %v1337 = vpop.f32.mrb[0].mxu0
        %v1338 = vadd.f32 0.0, %v1337
        %v1339 = vpop.f32.mrb[0].mxu0
        %v1340 = vpop.f32.mrb[0].mxu0
        %v1341 = vadd.f32 0.0, %v1340
        %v1342 = vpop.f32.mrb[0].mxu0
        %1343 = vmatprep.mubr.bf16.mxu0 0
        %1344 = vmatmul.mubr.bf16.gmra.mrb[0].mxu0 %v1196
        %v1345 = vpop.f32.mrb[0].mxu0
        %v1346 = vpop.f32.mrb[0].mxu0
        %v1347 = vpop.f32.mrb[0].mxu0
        %v1348 = vadd.f32 0.0, %v1347
        %v1349 = vpop.f32.mrb[0].mxu0
        %1350 = vmatprep.mubr.bf16.mxu0 0
        %1351 = vmatmul.mubr.bf16.gmra.mrb[0].mxu0 %v1199
        %v1352 = vpop.f32.mrb[0].mxu0
        %v1353 = vadd.f32 0.0, %v1352
        %v1354 = vpop.f32.mrb[0].mxu0
        %v1355 = vpop.f32.mrb[0].mxu0
        %v1356 = vpop.f32.mrb[0].mxu0
        %1357 = vmatprep.mubr.bf16.mxu0 0
        %1358 = vmatmul.mubr.bf16.gmra.mrb[0].mxu0 %v1202
        %v1359 = vpop.f32.mrb[0].mxu0
        %v1360 = vadd.f32 0.0, %v1359
        %v1361 = vpop.f32.mrb[0].mxu0
        %v1362 = vpop.f32.mrb[0].mxu0
        %v1363 = vadd.f32 0.0, %v1362
        %v1364 = vpop.f32.mrb[0].mxu0
        %1365 = vmatprep.mubr.bf16.mxu0 0
        %1366 = vmatmul.mubr.bf16.gmra.mrb[0].mxu0 %v1205
        %v1367 = vpop.f32.mrb[0].mxu0
        %v1368 = vpop.f32.mrb[0].mxu0
        %v1369 = vpop.f32.mrb[0].mxu0
        %v1370 = vadd.f32 0.0, %v1369
        %v1371 = vpop.f32.mrb[0].mxu0
        %1372 = vmatprep.mubr.bf16.mxu0 0
        %1373 = vmatmul.mubr.bf16.gmra.mrb[0].mxu0 %v1208
        %v1374 = vpop.f32.mrb[0].mxu0
        %v1375 = vadd.f32 0.0, %v1374
        %v1376 = vpop.f32.mrb[0].mxu0
        %v1377 = vpop.f32.mrb[0].mxu0
        %v1378 = vpop.f32.mrb[0].mxu0
        %1379 = vmatprep.mubr.bf16.mxu0 0
        %1380 = vmatmul.mubr.bf16.gmra.mrb[0].mxu0 %v1211
        %v1381 = vpop.f32.mrb[0].mxu0
        %v1382 = vadd.f32 0.0, %v1381
        %v1383 = vpop.f32.mrb[0].mxu0
        %v1384 = vpop.f32.mrb[0].mxu0
        %v1385 = vadd.f32 0.0, %v1384
        %v1386 = vpop.f32.mrb[0].mxu0
        %1387 = vmatprep.mubr.bf16.mxu0 0
        %1388 = vmatmul.mubr.bf16.gmra.mrb[0].mxu0 %v1214
        %v1389 = vpop.f32.mrb[0].mxu0
        %v1390 = vpop.f32.mrb[0].mxu0
        %v1391 = vpop.f32.mrb[0].mxu0
        %v1392 = vadd.f32 0.0, %v1391
        %v1393 = vpop.f32.mrb[0].mxu0
        %1394 = vmatprep.mubr.bf16.mxu0 0
        %1395 = vmatmul.mubr.bf16.gmra.mrb[0].mxu0 %v1217
        %v1396 = vpop.f32.mrb[0].mxu0
        %v1397 = vadd.f32 0.0, %v1396
        %v1398 = vpop.f32.mrb[0].mxu0
        %v1399 = vpop.f32.mrb[0].mxu0
        %v1400 = vpop.f32.mrb[0].mxu0
        %1401 = vmatprep.mubr.bf16.mxu0 0
        %1402 = vmatmul.mubr.bf16.gmra.mrb[0].mxu0 %v1220
        %v1403 = vpop.f32.mrb[0].mxu0
        %v1404 = vadd.f32 0.0, %v1403
        %v1405 = vpop.f32.mrb[0].mxu0
        %v1406 = vpop.f32.mrb[0].mxu0
        %v1407 = vadd.f32 0.0, %v1406
        %v1408 = vpop.f32.mrb[0].mxu0
        %1409 = vmatprep.mubr.bf16.mxu0 0
        %1410 = vmatmul.mubr.bf16.gmra.mrb[0].mxu0 %v1223
        %v1411 = vpop.f32.mrb[0].mxu0
        %v1412 = vpop.f32.mrb[0].mxu0
        %v1413 = vpop.f32.mrb[0].mxu0
        %v1414 = vadd.f32 0.0, %v1413
        %v1415 = vpop.f32.mrb[0].mxu0
        %1416 = vmatprep.mubr.bf16.mxu0 0
        %1417 = vmatmul.mubr.bf16.gmra.mrb[0].mxu0 %v1226
        %v1418 = vpop.f32.mrb[0].mxu0
        %v1419 = vadd.f32 0.0, %v1418
        %v1420 = vpop.f32.mrb[0].mxu0
        %v1421 = vpop.f32.mrb[0].mxu0
        %v1422 = vpop.f32.mrb[0].mxu0
        %1423 = vmatprep.mubr.bf16.mxu0 0
        %1424 = vmatmul.mubr.bf16.gmra.mrb[0].mxu0 %v1229
        %v1425 = vpop.f32.mrb[0].mxu0
        %v1426 = vadd.f32 0.0, %v1425
        %v1427 = vpop.f32.mrb[0].mxu0
        %v1428 = vpop.f32.mrb[0].mxu0
        %v1429 = vadd.f32 0.0, %v1428
        %v1430 = vpop.f32.mrb[0].mxu0
        %1431 = vmatprep.mubr.bf16.mxu0 0
        %1432 = vmatmul.mubr.bf16.gmra.mrb[0].mxu0 %v1232
        %v1433 = vpop.f32.mrb[0].mxu0
        %v1434 = vpop.f32.mrb[0].mxu0
        %v1435 = vpop.f32.mrb[0].mxu0
        %v1436 = vadd.f32 0.0, %v1435
        %v1437 = vpop.f32.mrb[0].mxu0
        %1438 = vmatprep.mubr.bf16.mxu0 0
        %1439 = vmatmul.mubr.bf16.gmra.mrb[0].mxu0 %v1235
        %v1440 = vpop.f32.mrb[0].mxu0
        %v1441 = vadd.f32 0.0, %v1440
        %v1442 = vpop.f32.mrb[0].mxu0
        %v1443 = vpop.f32.mrb[0].mxu0
        %v1444 = vpop.f32.mrb[0].mxu0
        %1445 = vdwg.mxu0
        %s1446 = scalar_lea.vmem %s210, 24
        %v1447 = vld [vmem:[%s1446] sm:$0xf]
        %v1448 = vld [vmem:[%s1446 + $0x4] sm:$0xf]
        %v1449 = vld [vmem:[%s1446 + $0x8] sm:$0xf]
        %v1450 = vld [vmem:[%s1446 + $0xc] sm:$0xf]
        %v1451 = vld [vmem:[%s1446 + $0x10] sm:$0xf]
        %v1452 = vld [vmem:[%s1446 + $0x14] sm:$0xf]
        %v1459 = vunpack.c.l.b16 %v1447
        %v1460 = vunpack.c.l.b16 %v1448
        %v1461 = vunpack.c.l.b16 %v1449
        %v1462 = vunpack.c.l.b16 %v1450
        %v1463 = vunpack.c.l.b16 %v1451
        %v1464 = vunpack.c.l.b16 %v1452
        %v1465 = vpack.c.b16 %v1460, %v1459
        %v1466 = vpack.c.b16 %v1462, %v1461
        %v1467 = vpack.c.b16 %v1464, %v1463
        %1471 = vmatprep.subr.bf16.mxu0 0
        %1472 = vmatpush1.bf16.msra.mxu0 %v1465
        %1473 = vmatprep.subr.bf16.mxu0 0
        %1474 = vmatpush1.bf16.msra.mxu0 %v1466
        %1475 = vmatprep.subr.bf16.mxu0 0
        %1476 = vmatpush1.bf16.msra.mxu0 %v1467
        %1477 = vmatprep.subr.bf16.mxu0 0
        %1478 = vmatpush1.bf16.msra.mxu0 0
        %1479 = vmatprep.subr.bf16.mxu0 0
        %1480 = vmatpush1.bf16.msra.mxu0 0
        %1481 = vmatprep.subr.bf16.mxu0 0
        %1482 = vmatpush1.bf16.msra.mxu0 0
        %1483 = vmatprep.subr.bf16.mxu0 0
        %1484 = vmatpush1.bf16.msra.mxu0 0
        %1485 = vmatprep.subr.bf16.mxu0 0
        %1486 = vmatpush1.bf16.msra.mxu0 0
        %1487 = vmatprep.subr.bf16.mxu0 0
        %1488 = vmatpush1.bf16.msra.mxu0 0
        %1489 = vmatprep.subr.bf16.mxu0 0
        %1490 = vmatpush1.bf16.msra.mxu0 0
        %1491 = vmatprep.subr.bf16.mxu0 0
        %1492 = vmatpush1.bf16.msra.mxu0 0
        %1493 = vmatprep.subr.bf16.mxu0 0
        %1494 = vmatpush1.bf16.msra.mxu0 0
        %1495 = vmatprep.subr.bf16.mxu0 0
        %1496 = vmatpush1.bf16.msra.mxu0 0
        %1497 = vmatprep.subr.bf16.mxu0 0
        %1498 = vmatpush1.bf16.msra.mxu0 0
        %1499 = vmatprep.subr.bf16.mxu0 0
        %1500 = vmatpush1.bf16.msra.mxu0 0
        %1501 = vmatprep.subr.bf16.mxu0 0
        %1502 = vmatpush1.bf16.msra.mxu0 0
        %1503 = vmatprep.mubr.bf16.mxu0 0
        %1504 = vmatmul.mubr.bf16.gmra.mrb[0].mxu0 %v1166
        %v1505 = vpop.f32.mrb[0].mxu0
        %v1506 = vadd.f32 0.0, %v1505
        %v1507 = vpop.f32.mrb[0].mxu0
        %v1508 = vpop.f32.mrb[0].mxu0
        %v1509 = vadd.f32 0.0, %v1508
        %v1510 = vpop.f32.mrb[0].mxu0
        %1511 = vmatprep.mubr.bf16.mxu0 0
        %1512 = vmatmul.mubr.bf16.gmra.mrb[0].mxu0 %v1169
        %v1513 = vpop.f32.mrb[0].mxu0
        %v1514 = vadd.f32 0.0, %v1513
        %v1515 = vpop.f32.mrb[0].mxu0
        %v1516 = vpop.f32.mrb[0].mxu0
        %v1517 = vadd.f32 0.0, %v1516
        %v1518 = vpop.f32.mrb[0].mxu0
        %1519 = vmatprep.mubr.bf16.mxu0 0
        %1520 = vmatmul.mubr.bf16.gmra.mrb[0].mxu0 %v1172
        %v1521 = vpop.f32.mrb[0].mxu0
        %v1522 = vadd.f32 0.0, %v1521
        %v1523 = vpop.f32.mrb[0].mxu0
        %v1524 = vpop.f32.mrb[0].mxu0
        %v1525 = vadd.f32 0.0, %v1524
        %v1526 = vpop.f32.mrb[0].mxu0
        %1527 = vmatprep.mubr.bf16.mxu0 0
        %1528 = vmatmul.mubr.bf16.gmra.mrb[0].mxu0 %v1175
        %v1529 = vpop.f32.mrb[0].mxu0
        %v1530 = vadd.f32 0.0, %v1529
        %v1531 = vpop.f32.mrb[0].mxu0
        %v1532 = vpop.f32.mrb[0].mxu0
        %v1533 = vadd.f32 0.0, %v1532
        %v1534 = vpop.f32.mrb[0].mxu0
        %1535 = vmatprep.mubr.bf16.mxu0 0
        %1536 = vmatmul.mubr.bf16.gmra.mrb[0].mxu0 %v1178
        %v1537 = vpop.f32.mrb[0].mxu0
        %v1538 = vadd.f32 0.0, %v1537
        %v1539 = vpop.f32.mrb[0].mxu0
        %v1540 = vpop.f32.mrb[0].mxu0
        %v1541 = vadd.f32 0.0, %v1540
        %v1542 = vpop.f32.mrb[0].mxu0
        %1543 = vmatprep.mubr.bf16.mxu0 0
        %1544 = vmatmul.mubr.bf16.gmra.mrb[0].mxu0 %v1181
        %v1545 = vpop.f32.mrb[0].mxu0
        %v1546 = vadd.f32 0.0, %v1545
        %v1547 = vpop.f32.mrb[0].mxu0
        %v1548 = vpop.f32.mrb[0].mxu0
        %v1549 = vadd.f32 0.0, %v1548
        %v1550 = vpop.f32.mrb[0].mxu0
        %1551 = vmatprep.mubr.bf16.mxu0 0
        %1552 = vmatmul.mubr.bf16.gmra.mrb[0].mxu0 %v1184
        %v1553 = vpop.f32.mrb[0].mxu0
        %v1554 = vadd.f32 0.0, %v1553
        %v1555 = vpop.f32.mrb[0].mxu0
        %v1556 = vpop.f32.mrb[0].mxu0
        %v1557 = vadd.f32 0.0, %v1556
        %v1558 = vpop.f32.mrb[0].mxu0
        %1559 = vmatprep.mubr.bf16.mxu0 0
        %1560 = vmatmul.mubr.bf16.gmra.mrb[0].mxu0 %v1187
        %v1561 = vpop.f32.mrb[0].mxu0
        %v1562 = vadd.f32 0.0, %v1561
        %v1563 = vpop.f32.mrb[0].mxu0
        %v1564 = vpop.f32.mrb[0].mxu0
        %v1565 = vadd.f32 0.0, %v1564
        %v1566 = vpop.f32.mrb[0].mxu0
        %1567 = vmatprep.mubr.bf16.mxu0 0
        %1568 = vmatmul.mubr.bf16.gmra.mrb[0].mxu0 %v1190
        %v1569 = vpop.f32.mrb[0].mxu0
        %v1570 = vadd.f32 0.0, %v1569
        %v1571 = vpop.f32.mrb[0].mxu0
        %v1572 = vpop.f32.mrb[0].mxu0
        %v1573 = vadd.f32 0.0, %v1572
        %v1574 = vpop.f32.mrb[0].mxu0
        %1575 = vmatprep.mubr.bf16.mxu0 0
        %1576 = vmatmul.mubr.bf16.gmra.mrb[0].mxu0 %v1193
        %v1577 = vpop.f32.mrb[0].mxu0
        %v1578 = vadd.f32 0.0, %v1577
        %v1579 = vpop.f32.mrb[0].mxu0
        %v1580 = vpop.f32.mrb[0].mxu0
        %v1581 = vadd.f32 0.0, %v1580
        %v1582 = vpop.f32.mrb[0].mxu0
        %1583 = vmatprep.mubr.bf16.mxu0 0
        %1584 = vmatmul.mubr.bf16.gmra.mrb[0].mxu0 %v1196
        %v1585 = vpop.f32.mrb[0].mxu0
        %v1586 = vadd.f32 0.0, %v1585
        %v1587 = vpop.f32.mrb[0].mxu0
        %v1588 = vpop.f32.mrb[0].mxu0
        %v1589 = vadd.f32 0.0, %v1588
        %v1590 = vpop.f32.mrb[0].mxu0
        %1591 = vmatprep.mubr.bf16.mxu0 0
        %1592 = vmatmul.mubr.bf16.gmra.mrb[0].mxu0 %v1199
        %v1593 = vpop.f32.mrb[0].mxu0
        %v1594 = vadd.f32 0.0, %v1593
        %v1595 = vpop.f32.mrb[0].mxu0
        %v1596 = vpop.f32.mrb[0].mxu0
        %v1597 = vadd.f32 0.0, %v1596
        %v1598 = vpop.f32.mrb[0].mxu0
        %1599 = vmatprep.mubr.bf16.mxu0 0
        %1600 = vmatmul.mubr.bf16.gmra.mrb[0].mxu0 %v1202
        %v1601 = vpop.f32.mrb[0].mxu0
        %v1602 = vadd.f32 0.0, %v1601
        %v1603 = vpop.f32.mrb[0].mxu0
        %v1604 = vpop.f32.mrb[0].mxu0
        %v1605 = vadd.f32 0.0, %v1604
        %v1606 = vpop.f32.mrb[0].mxu0
        %1607 = vmatprep.mubr.bf16.mxu0 0
        %1608 = vmatmul.mubr.bf16.gmra.mrb[0].mxu0 %v1205
        %v1609 = vpop.f32.mrb[0].mxu0
        %v1610 = vadd.f32 0.0, %v1609
        %v1611 = vpop.f32.mrb[0].mxu0
        %v1612 = vpop.f32.mrb[0].mxu0
        %v1613 = vadd.f32 0.0, %v1612
        %v1614 = vpop.f32.mrb[0].mxu0
        %1615 = vmatprep.mubr.bf16.mxu0 0
        %1616 = vmatmul.mubr.bf16.gmra.mrb[0].mxu0 %v1208
        %v1617 = vpop.f32.mrb[0].mxu0
        %v1618 = vadd.f32 0.0, %v1617
        %v1619 = vpop.f32.mrb[0].mxu0
        %v1620 = vpop.f32.mrb[0].mxu0
        %v1621 = vadd.f32 0.0, %v1620
        %v1622 = vpop.f32.mrb[0].mxu0
        %1623 = vmatprep.mubr.bf16.mxu0 0
        %1624 = vmatmul.mubr.bf16.gmra.mrb[0].mxu0 %v1211
        %v1625 = vpop.f32.mrb[0].mxu0
        %v1626 = vadd.f32 0.0, %v1625
        %v1627 = vpop.f32.mrb[0].mxu0
        %v1628 = vpop.f32.mrb[0].mxu0
        %v1629 = vadd.f32 0.0, %v1628
        %v1630 = vpop.f32.mrb[0].mxu0
        %1631 = vmatprep.mubr.bf16.mxu0 0
        %1632 = vmatmul.mubr.bf16.gmra.mrb[0].mxu0 %v1214
        %v1633 = vpop.f32.mrb[0].mxu0
        %v1634 = vadd.f32 0.0, %v1633
        %v1635 = vpop.f32.mrb[0].mxu0
        %v1636 = vpop.f32.mrb[0].mxu0
        %v1637 = vadd.f32 0.0, %v1636
        %v1638 = vpop.f32.mrb[0].mxu0
        %1639 = vmatprep.mubr.bf16.mxu0 0
        %1640 = vmatmul.mubr.bf16.gmra.mrb[0].mxu0 %v1217
        %v1641 = vpop.f32.mrb[0].mxu0
        %v1642 = vadd.f32 0.0, %v1641
        %v1643 = vpop.f32.mrb[0].mxu0
        %v1644 = vpop.f32.mrb[0].mxu0
        %v1645 = vadd.f32 0.0, %v1644
        %v1646 = vpop.f32.mrb[0].mxu0
        %1647 = vmatprep.mubr.bf16.mxu0 0
        %1648 = vmatmul.mubr.bf16.gmra.mrb[0].mxu0 %v1220
        %v1649 = vpop.f32.mrb[0].mxu0
        %v1650 = vadd.f32 0.0, %v1649
        %v1651 = vpop.f32.mrb[0].mxu0
        %v1652 = vpop.f32.mrb[0].mxu0
        %v1653 = vadd.f32 0.0, %v1652
        %v1654 = vpop.f32.mrb[0].mxu0
        %1655 = vmatprep.mubr.bf16.mxu0 0
        %1656 = vmatmul.mubr.bf16.gmra.mrb[0].mxu0 %v1223
        %v1657 = vpop.f32.mrb[0].mxu0
        %v1658 = vadd.f32 0.0, %v1657
        %v1659 = vpop.f32.mrb[0].mxu0
        %v1660 = vpop.f32.mrb[0].mxu0
        %v1661 = vadd.f32 0.0, %v1660
        %v1662 = vpop.f32.mrb[0].mxu0
        %1663 = vmatprep.mubr.bf16.mxu0 0
        %1664 = vmatmul.mubr.bf16.gmra.mrb[0].mxu0 %v1226
        %v1665 = vpop.f32.mrb[0].mxu0
        %v1666 = vadd.f32 0.0, %v1665
        %v1667 = vpop.f32.mrb[0].mxu0
        %v1668 = vpop.f32.mrb[0].mxu0
        %v1669 = vadd.f32 0.0, %v1668
        %v1670 = vpop.f32.mrb[0].mxu0
        %1671 = vmatprep.mubr.bf16.mxu0 0
        %1672 = vmatmul.mubr.bf16.gmra.mrb[0].mxu0 %v1229
        %v1673 = vpop.f32.mrb[0].mxu0
        %v1674 = vadd.f32 0.0, %v1673
        %v1675 = vpop.f32.mrb[0].mxu0
        %v1676 = vpop.f32.mrb[0].mxu0
        %v1677 = vadd.f32 0.0, %v1676
        %v1678 = vpop.f32.mrb[0].mxu0
        %1679 = vmatprep.mubr.bf16.mxu0 0
        %1680 = vmatmul.mubr.bf16.gmra.mrb[0].mxu0 %v1232
        %v1681 = vpop.f32.mrb[0].mxu0
        %v1682 = vadd.f32 0.0, %v1681
        %v1683 = vpop.f32.mrb[0].mxu0
        %v1684 = vpop.f32.mrb[0].mxu0
        %v1685 = vadd.f32 0.0, %v1684
        %v1686 = vpop.f32.mrb[0].mxu0
        %1687 = vmatprep.mubr.bf16.mxu0 0
        %1688 = vmatmul.mubr.bf16.gmra.mrb[0].mxu0 %v1235
        %v1689 = vpop.f32.mrb[0].mxu0
        %v1690 = vadd.f32 0.0, %v1689
        %v1691 = vpop.f32.mrb[0].mxu0
        %v1692 = vpop.f32.mrb[0].mxu0
        %v1693 = vadd.f32 0.0, %v1692
        %v1694 = vpop.f32.mrb[0].mxu0
        %1695 = vdwg.mxu0
        %vm1744 = vcmask 1046528
        %v1745 = vrot.slane %v1506, 1
        %v1746 = vrot.slane %v1509, 1
        %v1747 = vsel %vm1744, %v1745, %v1746
        %v1748 = vrot.slane %v1514, 1
        %v1749 = vsel %vm1744, %v1746, %v1748
        %v1750 = vrot.slane %v1517, 1
        %v1751 = vrot.slane %v1522, 1
        %v1752 = vsel %vm1744, %v1750, %v1751
        %v1753 = vrot.slane %v1525, 1
        %v1754 = vsel %vm1744, %v1751, %v1753
        %v1755 = vrot.slane %v1530, 1
        %v1756 = vrot.slane %v1533, 1
        %v1757 = vsel %vm1744, %v1755, %v1756
        %v1758 = vrot.slane %v1538, 1
        %v1759 = vsel %vm1744, %v1756, %v1758
        %v1760 = vrot.slane %v1541, 1
        %v1761 = vrot.slane %v1546, 1
        %v1762 = vsel %vm1744, %v1760, %v1761
        %v1763 = vrot.slane %v1549, 1
        %v1764 = vsel %vm1744, %v1761, %v1763
        %v1765 = vrot.slane %v1554, 1
        %v1766 = vrot.slane %v1557, 1
        %v1767 = vsel %vm1744, %v1765, %v1766
        %v1768 = vrot.slane %v1562, 1
        %v1769 = vsel %vm1744, %v1766, %v1768
        %v1770 = vrot.slane %v1565, 1
        %v1771 = vrot.slane %v1570, 1
        %v1772 = vsel %vm1744, %v1770, %v1771
        %v1773 = vrot.slane %v1573, 1
        %v1774 = vsel %vm1744, %v1771, %v1773
        %v1775 = vrot.slane %v1578, 1
        %v1776 = vrot.slane %v1581, 1
        %v1777 = vsel %vm1744, %v1775, %v1776
        %v1778 = vrot.slane %v1586, 1
        %v1779 = vsel %vm1744, %v1776, %v1778
        %v1780 = vrot.slane %v1589, 1
        %v1781 = vrot.slane %v1594, 1
        %v1782 = vsel %vm1744, %v1780, %v1781
        %v1783 = vrot.slane %v1597, 1
        %v1784 = vsel %vm1744, %v1781, %v1783
        %v1785 = vrot.slane %v1602, 1
        %v1786 = vrot.slane %v1605, 1
        %v1787 = vsel %vm1744, %v1785, %v1786
        %v1788 = vrot.slane %v1610, 1
        %v1789 = vsel %vm1744, %v1786, %v1788
        %v1790 = vrot.slane %v1613, 1
        %v1791 = vrot.slane %v1618, 1
        %v1792 = vsel %vm1744, %v1790, %v1791
        %v1793 = vrot.slane %v1621, 1
        %v1794 = vsel %vm1744, %v1791, %v1793
        %v1795 = vrot.slane %v1626, 1
        %v1796 = vrot.slane %v1629, 1
        %v1797 = vsel %vm1744, %v1795, %v1796
        %v1798 = vrot.slane %v1634, 1
        %v1799 = vsel %vm1744, %v1796, %v1798
        %v1800 = vrot.slane %v1637, 1
        %v1801 = vrot.slane %v1642, 1
        %v1802 = vsel %vm1744, %v1800, %v1801
        %v1803 = vrot.slane %v1645, 1
        %v1804 = vsel %vm1744, %v1801, %v1803
        %v1805 = vrot.slane %v1650, 1
        %v1806 = vrot.slane %v1653, 1
        %v1807 = vsel %vm1744, %v1805, %v1806
        %v1808 = vrot.slane %v1658, 1
        %v1809 = vsel %vm1744, %v1806, %v1808
        %v1810 = vrot.slane %v1661, 1
        %v1811 = vrot.slane %v1666, 1
        %v1812 = vsel %vm1744, %v1810, %v1811
        %v1813 = vrot.slane %v1669, 1
        %v1814 = vsel %vm1744, %v1811, %v1813
        %v1815 = vrot.slane %v1674, 1
        %v1816 = vrot.slane %v1677, 1
        %v1817 = vsel %vm1744, %v1815, %v1816
        %v1818 = vrot.slane %v1682, 1
        %v1819 = vsel %vm1744, %v1816, %v1818
        %v1820 = vrot.slane %v1685, 1
        %v1821 = vrot.slane %v1690, 1
        %v1822 = vsel %vm1744, %v1820, %v1821
        %v1823 = vrot.slane %v1693, 1
        %v1824 = vsel %vm1744, %v1821, %v1823
        %v1857 = vadd.f32 %v1272, %v1747
        %v1858 = vadd.f32 %v1275, %v1749
        %v1859 = vadd.f32 %v1282, %v1752
        %v1860 = vadd.f32 %v1287, %v1754
        %v1861 = vadd.f32 %v1294, %v1757
        %v1862 = vadd.f32 %v1297, %v1759
        %v1863 = vadd.f32 %v1304, %v1762
        %v1864 = vadd.f32 %v1309, %v1764
        %v1865 = vadd.f32 %v1316, %v1767
        %v1866 = vadd.f32 %v1319, %v1769
        %v1867 = vadd.f32 %v1326, %v1772
        %v1868 = vadd.f32 %v1331, %v1774
        %v1869 = vadd.f32 %v1338, %v1777
        %v1870 = vadd.f32 %v1341, %v1779
        %v1871 = vadd.f32 %v1348, %v1782
        %v1872 = vadd.f32 %v1353, %v1784
        %v1873 = vadd.f32 %v1360, %v1787
        %v1874 = vadd.f32 %v1363, %v1789
        %v1875 = vadd.f32 %v1370, %v1792
        %v1876 = vadd.f32 %v1375, %v1794
        %v1877 = vadd.f32 %v1382, %v1797
        %v1878 = vadd.f32 %v1385, %v1799
        %v1879 = vadd.f32 %v1392, %v1802
        %v1880 = vadd.f32 %v1397, %v1804
        %v1881 = vadd.f32 %v1404, %v1807
        %v1882 = vadd.f32 %v1407, %v1809
        %v1883 = vadd.f32 %v1414, %v1812
        %v1884 = vadd.f32 %v1419, %v1814
        %v1885 = vadd.f32 %v1426, %v1817
        %v1886 = vadd.f32 %v1429, %v1819
        %v1887 = vadd.f32 %v1436, %v1822
        %v1888 = vadd.f32 %v1441, %v1824
        %s1889 = scalar_lea.vmem %s210, 48
        %v1890 = vld [vmem:[%s1889] sm:$0xf]
        %v1891 = vld [vmem:[%s1889 + $0x4] sm:$0xf]
        %v1892 = vld [vmem:[%s1889 + $0x8] sm:$0xf]
        %v1893 = vld [vmem:[%s1889 + $0xc] sm:$0xf]
        %v1894 = vld [vmem:[%s1889 + $0x10] sm:$0xf]
        %v1895 = vld [vmem:[%s1889 + $0x14] sm:$0xf]
        %v1902 = vunpack.c.l.b16 %v1890
        %v1903 = vunpack.c.l.b16 %v1891
        %v1904 = vunpack.c.l.b16 %v1892
        %v1905 = vunpack.c.l.b16 %v1893
        %v1906 = vunpack.c.l.b16 %v1894
        %v1907 = vunpack.c.l.b16 %v1895
        %v1908 = vpack.c.b16 %v1903, %v1902
        %v1909 = vpack.c.b16 %v1905, %v1904
        %v1910 = vpack.c.b16 %v1907, %v1906
        %1914 = vmatprep.subr.bf16.mxu0 0
        %1915 = vmatpush1.bf16.msra.mxu0 %v1908
        %1916 = vmatprep.subr.bf16.mxu0 0
        %1917 = vmatpush1.bf16.msra.mxu0 %v1909
        %1918 = vmatprep.subr.bf16.mxu0 0
        %1919 = vmatpush1.bf16.msra.mxu0 %v1910
        %1920 = vmatprep.subr.bf16.mxu0 0
        %1921 = vmatpush1.bf16.msra.mxu0 0
        %1922 = vmatprep.subr.bf16.mxu0 0
        %1923 = vmatpush1.bf16.msra.mxu0 0
        %1924 = vmatprep.subr.bf16.mxu0 0
        %1925 = vmatpush1.bf16.msra.mxu0 0
        %1926 = vmatprep.subr.bf16.mxu0 0
        %1927 = vmatpush1.bf16.msra.mxu0 0
        %1928 = vmatprep.subr.bf16.mxu0 0
        %1929 = vmatpush1.bf16.msra.mxu0 0
        %1930 = vmatprep.subr.bf16.mxu0 0
        %1931 = vmatpush1.bf16.msra.mxu0 0
        %1932 = vmatprep.subr.bf16.mxu0 0
        %1933 = vmatpush1.bf16.msra.mxu0 0
        %1934 = vmatprep.subr.bf16.mxu0 0
        %1935 = vmatpush1.bf16.msra.mxu0 0
        %1936 = vmatprep.subr.bf16.mxu0 0
        %1937 = vmatpush1.bf16.msra.mxu0 0
        %1938 = vmatprep.subr.bf16.mxu0 0
        %1939 = vmatpush1.bf16.msra.mxu0 0
        %1940 = vmatprep.subr.bf16.mxu0 0
        %1941 = vmatpush1.bf16.msra.mxu0 0
        %1942 = vmatprep.subr.bf16.mxu0 0
        %1943 = vmatpush1.bf16.msra.mxu0 0
        %1944 = vmatprep.subr.bf16.mxu0 0
        %1945 = vmatpush1.bf16.msra.mxu0 0
        %1946 = vmatprep.mubr.bf16.mxu0 0
        %1947 = vmatmul.mubr.bf16.gmra.mrb[0].mxu0 %v1166
        %v1948 = vpop.f32.mrb[0].mxu0
        %v1949 = vadd.f32 0.0, %v1948
        %v1950 = vpop.f32.mrb[0].mxu0
        %v1951 = vpop.f32.mrb[0].mxu0
        %v1952 = vadd.f32 0.0, %v1951
        %v1953 = vpop.f32.mrb[0].mxu0
        %1954 = vmatprep.mubr.bf16.mxu0 0
        %1955 = vmatmul.mubr.bf16.gmra.mrb[0].mxu0 %v1169
        %v1956 = vpop.f32.mrb[0].mxu0
        %v1957 = vadd.f32 0.0, %v1956
        %v1958 = vpop.f32.mrb[0].mxu0
        %v1959 = vpop.f32.mrb[0].mxu0
        %v1960 = vadd.f32 0.0, %v1959
        %v1961 = vpop.f32.mrb[0].mxu0
        %1962 = vmatprep.mubr.bf16.mxu0 0
        %1963 = vmatmul.mubr.bf16.gmra.mrb[0].mxu0 %v1172
        %v1964 = vpop.f32.mrb[0].mxu0
        %v1965 = vadd.f32 0.0, %v1964
        %v1966 = vpop.f32.mrb[0].mxu0
        %v1967 = vpop.f32.mrb[0].mxu0
        %v1968 = vadd.f32 0.0, %v1967
        %v1969 = vpop.f32.mrb[0].mxu0
        %1970 = vmatprep.mubr.bf16.mxu0 0
        %1971 = vmatmul.mubr.bf16.gmra.mrb[0].mxu0 %v1175
        %v1972 = vpop.f32.mrb[0].mxu0
        %v1973 = vadd.f32 0.0, %v1972
        %v1974 = vpop.f32.mrb[0].mxu0
        %v1975 = vpop.f32.mrb[0].mxu0
        %v1976 = vadd.f32 0.0, %v1975
        %v1977 = vpop.f32.mrb[0].mxu0
        %1978 = vmatprep.mubr.bf16.mxu0 0
        %1979 = vmatmul.mubr.bf16.gmra.mrb[0].mxu0 %v1178
        %v1980 = vpop.f32.mrb[0].mxu0
        %v1981 = vadd.f32 0.0, %v1980
        %v1982 = vpop.f32.mrb[0].mxu0
        %v1983 = vpop.f32.mrb[0].mxu0
        %v1984 = vadd.f32 0.0, %v1983
        %v1985 = vpop.f32.mrb[0].mxu0
        %1986 = vmatprep.mubr.bf16.mxu0 0
        %1987 = vmatmul.mubr.bf16.gmra.mrb[0].mxu0 %v1181
        %v1988 = vpop.f32.mrb[0].mxu0
        %v1989 = vadd.f32 0.0, %v1988
        %v1990 = vpop.f32.mrb[0].mxu0
        %v1991 = vpop.f32.mrb[0].mxu0
        %v1992 = vadd.f32 0.0, %v1991
        %v1993 = vpop.f32.mrb[0].mxu0
        %1994 = vmatprep.mubr.bf16.mxu0 0
        %1995 = vmatmul.mubr.bf16.gmra.mrb[0].mxu0 %v1184
        %v1996 = vpop.f32.mrb[0].mxu0
        %v1997 = vadd.f32 0.0, %v1996
        %v1998 = vpop.f32.mrb[0].mxu0
        %v1999 = vpop.f32.mrb[0].mxu0
        %v2000 = vadd.f32 0.0, %v1999
        %v2001 = vpop.f32.mrb[0].mxu0
        %2002 = vmatprep.mubr.bf16.mxu0 0
        %2003 = vmatmul.mubr.bf16.gmra.mrb[0].mxu0 %v1187
        %v2004 = vpop.f32.mrb[0].mxu0
        %v2005 = vadd.f32 0.0, %v2004
        %v2006 = vpop.f32.mrb[0].mxu0
        %v2007 = vpop.f32.mrb[0].mxu0
        %v2008 = vadd.f32 0.0, %v2007
        %v2009 = vpop.f32.mrb[0].mxu0
        %2010 = vmatprep.mubr.bf16.mxu0 0
        %2011 = vmatmul.mubr.bf16.gmra.mrb[0].mxu0 %v1190
        %v2012 = vpop.f32.mrb[0].mxu0
        %v2013 = vadd.f32 0.0, %v2012
        %v2014 = vpop.f32.mrb[0].mxu0
        %v2015 = vpop.f32.mrb[0].mxu0
        %v2016 = vadd.f32 0.0, %v2015
        %v2017 = vpop.f32.mrb[0].mxu0
        %2018 = vmatprep.mubr.bf16.mxu0 0
        %2019 = vmatmul.mubr.bf16.gmra.mrb[0].mxu0 %v1193
        %v2020 = vpop.f32.mrb[0].mxu0
        %v2021 = vadd.f32 0.0, %v2020
        %v2022 = vpop.f32.mrb[0].mxu0
        %v2023 = vpop.f32.mrb[0].mxu0
        %v2024 = vadd.f32 0.0, %v2023
        %v2025 = vpop.f32.mrb[0].mxu0
        %2026 = vmatprep.mubr.bf16.mxu0 0
        %2027 = vmatmul.mubr.bf16.gmra.mrb[0].mxu0 %v1196
        %v2028 = vpop.f32.mrb[0].mxu0
        %v2029 = vadd.f32 0.0, %v2028
        %v2030 = vpop.f32.mrb[0].mxu0
        %v2031 = vpop.f32.mrb[0].mxu0
        %v2032 = vadd.f32 0.0, %v2031
        %v2033 = vpop.f32.mrb[0].mxu0
        %2034 = vmatprep.mubr.bf16.mxu0 0
        %2035 = vmatmul.mubr.bf16.gmra.mrb[0].mxu0 %v1199
        %v2036 = vpop.f32.mrb[0].mxu0
        %v2037 = vadd.f32 0.0, %v2036
        %v2038 = vpop.f32.mrb[0].mxu0
        %v2039 = vpop.f32.mrb[0].mxu0
        %v2040 = vadd.f32 0.0, %v2039
        %v2041 = vpop.f32.mrb[0].mxu0
        %2042 = vmatprep.mubr.bf16.mxu0 0
        %2043 = vmatmul.mubr.bf16.gmra.mrb[0].mxu0 %v1202
        %v2044 = vpop.f32.mrb[0].mxu0
        %v2045 = vadd.f32 0.0, %v2044
        %v2046 = vpop.f32.mrb[0].mxu0
        %v2047 = vpop.f32.mrb[0].mxu0
        %v2048 = vadd.f32 0.0, %v2047
        %v2049 = vpop.f32.mrb[0].mxu0
        %2050 = vmatprep.mubr.bf16.mxu0 0
        %2051 = vmatmul.mubr.bf16.gmra.mrb[0].mxu0 %v1205
        %v2052 = vpop.f32.mrb[0].mxu0
        %v2053 = vadd.f32 0.0, %v2052
        %v2054 = vpop.f32.mrb[0].mxu0
        %v2055 = vpop.f32.mrb[0].mxu0
        %v2056 = vadd.f32 0.0, %v2055
        %v2057 = vpop.f32.mrb[0].mxu0
        %2058 = vmatprep.mubr.bf16.mxu0 0
        %2059 = vmatmul.mubr.bf16.gmra.mrb[0].mxu0 %v1208
        %v2060 = vpop.f32.mrb[0].mxu0
        %v2061 = vadd.f32 0.0, %v2060
        %v2062 = vpop.f32.mrb[0].mxu0
        %v2063 = vpop.f32.mrb[0].mxu0
        %v2064 = vadd.f32 0.0, %v2063
        %v2065 = vpop.f32.mrb[0].mxu0
        %2066 = vmatprep.mubr.bf16.mxu0 0
        %2067 = vmatmul.mubr.bf16.gmra.mrb[0].mxu0 %v1211
        %v2068 = vpop.f32.mrb[0].mxu0
        %v2069 = vadd.f32 0.0, %v2068
        %v2070 = vpop.f32.mrb[0].mxu0
        %v2071 = vpop.f32.mrb[0].mxu0
        %v2072 = vadd.f32 0.0, %v2071
        %v2073 = vpop.f32.mrb[0].mxu0
        %2074 = vmatprep.mubr.bf16.mxu0 0
        %2075 = vmatmul.mubr.bf16.gmra.mrb[0].mxu0 %v1214
        %v2076 = vpop.f32.mrb[0].mxu0
        %v2077 = vadd.f32 0.0, %v2076
        %v2078 = vpop.f32.mrb[0].mxu0
        %v2079 = vpop.f32.mrb[0].mxu0
        %v2080 = vadd.f32 0.0, %v2079
        %v2081 = vpop.f32.mrb[0].mxu0
        %2082 = vmatprep.mubr.bf16.mxu0 0
        %2083 = vmatmul.mubr.bf16.gmra.mrb[0].mxu0 %v1217
        %v2084 = vpop.f32.mrb[0].mxu0
        %v2085 = vadd.f32 0.0, %v2084
        %v2086 = vpop.f32.mrb[0].mxu0
        %v2087 = vpop.f32.mrb[0].mxu0
        %v2088 = vadd.f32 0.0, %v2087
        %v2089 = vpop.f32.mrb[0].mxu0
        %2090 = vmatprep.mubr.bf16.mxu0 0
        %2091 = vmatmul.mubr.bf16.gmra.mrb[0].mxu0 %v1220
        %v2092 = vpop.f32.mrb[0].mxu0
        %v2093 = vadd.f32 0.0, %v2092
        %v2094 = vpop.f32.mrb[0].mxu0
        %v2095 = vpop.f32.mrb[0].mxu0
        %v2096 = vadd.f32 0.0, %v2095
        %v2097 = vpop.f32.mrb[0].mxu0
        %2098 = vmatprep.mubr.bf16.mxu0 0
        %2099 = vmatmul.mubr.bf16.gmra.mrb[0].mxu0 %v1223
        %v2100 = vpop.f32.mrb[0].mxu0
        %v2101 = vadd.f32 0.0, %v2100
        %v2102 = vpop.f32.mrb[0].mxu0
        %v2103 = vpop.f32.mrb[0].mxu0
        %v2104 = vadd.f32 0.0, %v2103
        %v2105 = vpop.f32.mrb[0].mxu0
        %2106 = vmatprep.mubr.bf16.mxu0 0
        %2107 = vmatmul.mubr.bf16.gmra.mrb[0].mxu0 %v1226
        %v2108 = vpop.f32.mrb[0].mxu0
        %v2109 = vadd.f32 0.0, %v2108
        %v2110 = vpop.f32.mrb[0].mxu0
        %v2111 = vpop.f32.mrb[0].mxu0
        %v2112 = vadd.f32 0.0, %v2111
        %v2113 = vpop.f32.mrb[0].mxu0
        %2114 = vmatprep.mubr.bf16.mxu0 0
        %2115 = vmatmul.mubr.bf16.gmra.mrb[0].mxu0 %v1229
        %v2116 = vpop.f32.mrb[0].mxu0
        %v2117 = vadd.f32 0.0, %v2116
        %v2118 = vpop.f32.mrb[0].mxu0
        %v2119 = vpop.f32.mrb[0].mxu0
        %v2120 = vadd.f32 0.0, %v2119
        %v2121 = vpop.f32.mrb[0].mxu0
        %2122 = vmatprep.mubr.bf16.mxu0 0
        %2123 = vmatmul.mubr.bf16.gmra.mrb[0].mxu0 %v1232
        %v2124 = vpop.f32.mrb[0].mxu0
        %v2125 = vadd.f32 0.0, %v2124
        %v2126 = vpop.f32.mrb[0].mxu0
        %v2127 = vpop.f32.mrb[0].mxu0
        %v2128 = vadd.f32 0.0, %v2127
        %v2129 = vpop.f32.mrb[0].mxu0
        %2130 = vmatprep.mubr.bf16.mxu0 0
        %2131 = vmatmul.mubr.bf16.gmra.mrb[0].mxu0 %v1235
        %v2132 = vpop.f32.mrb[0].mxu0
        %v2133 = vadd.f32 0.0, %v2132
        %v2134 = vpop.f32.mrb[0].mxu0
        %v2135 = vpop.f32.mrb[0].mxu0
        %v2136 = vadd.f32 0.0, %v2135
        %v2137 = vpop.f32.mrb[0].mxu0
        %2138 = vdwg.mxu0
        %vm2187 = vcmask 1045504
        %v2188 = vrot.slane %v1949, 2
        %v2189 = vrot.slane %v1952, 2
        %v2190 = vsel %vm2187, %v2188, %v2189
        %v2191 = vrot.slane %v1957, 2
        %v2192 = vsel %vm2187, %v2189, %v2191
        %v2193 = vrot.slane %v1960, 2
        %v2194 = vrot.slane %v1965, 2
        %v2195 = vsel %vm2187, %v2193, %v2194
        %v2196 = vrot.slane %v1968, 2
        %v2197 = vsel %vm2187, %v2194, %v2196
        %v2198 = vrot.slane %v1973, 2
        %v2199 = vrot.slane %v1976, 2
        %v2200 = vsel %vm2187, %v2198, %v2199
        %v2201 = vrot.slane %v1981, 2
        %v2202 = vsel %vm2187, %v2199, %v2201
        %v2203 = vrot.slane %v1984, 2
        %v2204 = vrot.slane %v1989, 2
        %v2205 = vsel %vm2187, %v2203, %v2204
        %v2206 = vrot.slane %v1992, 2
        %v2207 = vsel %vm2187, %v2204, %v2206
        %v2208 = vrot.slane %v1997, 2
        %v2209 = vrot.slane %v2000, 2
        %v2210 = vsel %vm2187, %v2208, %v2209
        %v2211 = vrot.slane %v2005, 2
        %v2212 = vsel %vm2187, %v2209, %v2211
        %v2213 = vrot.slane %v2008, 2
        %v2214 = vrot.slane %v2013, 2
        %v2215 = vsel %vm2187, %v2213, %v2214
        %v2216 = vrot.slane %v2016, 2
        %v2217 = vsel %vm2187, %v2214, %v2216
        %v2218 = vrot.slane %v2021, 2
        %v2219 = vrot.slane %v2024, 2
        %v2220 = vsel %vm2187, %v2218, %v2219
        %v2221 = vrot.slane %v2029, 2
        %v2222 = vsel %vm2187, %v2219, %v2221
        %v2223 = vrot.slane %v2032, 2
        %v2224 = vrot.slane %v2037, 2
        %v2225 = vsel %vm2187, %v2223, %v2224
        %v2226 = vrot.slane %v2040, 2
        %v2227 = vsel %vm2187, %v2224, %v2226
        %v2228 = vrot.slane %v2045, 2
        %v2229 = vrot.slane %v2048, 2
        %v2230 = vsel %vm2187, %v2228, %v2229
        %v2231 = vrot.slane %v2053, 2
        %v2232 = vsel %vm2187, %v2229, %v2231
        %v2233 = vrot.slane %v2056, 2
        %v2234 = vrot.slane %v2061, 2
        %v2235 = vsel %vm2187, %v2233, %v2234
        %v2236 = vrot.slane %v2064, 2
        %v2237 = vsel %vm2187, %v2234, %v2236
        %v2238 = vrot.slane %v2069, 2
        %v2239 = vrot.slane %v2072, 2
        %v2240 = vsel %vm2187, %v2238, %v2239
        %v2241 = vrot.slane %v2077, 2
        %v2242 = vsel %vm2187, %v2239, %v2241
        %v2243 = vrot.slane %v2080, 2
        %v2244 = vrot.slane %v2085, 2
        %v2245 = vsel %vm2187, %v2243, %v2244
        %v2246 = vrot.slane %v2088, 2
        %v2247 = vsel %vm2187, %v2244, %v2246
        %v2248 = vrot.slane %v2093, 2
        %v2249 = vrot.slane %v2096, 2
        %v2250 = vsel %vm2187, %v2248, %v2249
        %v2251 = vrot.slane %v2101, 2
        %v2252 = vsel %vm2187, %v2249, %v2251
        %v2253 = vrot.slane %v2104, 2
        %v2254 = vrot.slane %v2109, 2
        %v2255 = vsel %vm2187, %v2253, %v2254
        %v2256 = vrot.slane %v2112, 2
        %v2257 = vsel %vm2187, %v2254, %v2256
        %v2258 = vrot.slane %v2117, 2
        %v2259 = vrot.slane %v2120, 2
        %v2260 = vsel %vm2187, %v2258, %v2259
        %v2261 = vrot.slane %v2125, 2
        %v2262 = vsel %vm2187, %v2259, %v2261
        %v2263 = vrot.slane %v2128, 2
        %v2264 = vrot.slane %v2133, 2
        %v2265 = vsel %vm2187, %v2263, %v2264
        %v2266 = vrot.slane %v2136, 2
        %v2267 = vsel %vm2187, %v2264, %v2266
        %v2300 = vadd.f32 %v1857, %v2190
        %v2301 = vadd.f32 %v1858, %v2192
        %v2302 = vadd.f32 %v1859, %v2195
        %v2303 = vadd.f32 %v1860, %v2197
        %v2304 = vadd.f32 %v1861, %v2200
        %v2305 = vadd.f32 %v1862, %v2202
        %v2306 = vadd.f32 %v1863, %v2205
        %v2307 = vadd.f32 %v1864, %v2207
        %v2308 = vadd.f32 %v1865, %v2210
        %v2309 = vadd.f32 %v1866, %v2212
        %v2310 = vadd.f32 %v1867, %v2215
        %v2311 = vadd.f32 %v1868, %v2217
        %v2312 = vadd.f32 %v1869, %v2220
        %v2313 = vadd.f32 %v1870, %v2222
        %v2314 = vadd.f32 %v1871, %v2225
        %v2315 = vadd.f32 %v1872, %v2227
        %v2316 = vadd.f32 %v1873, %v2230
        %v2317 = vadd.f32 %v1874, %v2232
        %v2318 = vadd.f32 %v1875, %v2235
        %v2319 = vadd.f32 %v1876, %v2237
        %v2320 = vadd.f32 %v1877, %v2240
        %v2321 = vadd.f32 %v1878, %v2242
        %v2322 = vadd.f32 %v1879, %v2245
        %v2323 = vadd.f32 %v1880, %v2247
        %v2324 = vadd.f32 %v1881, %v2250
        %v2325 = vadd.f32 %v1882, %v2252
        %v2326 = vadd.f32 %v1883, %v2255
        %v2327 = vadd.f32 %v1884, %v2257
        %v2328 = vadd.f32 %v1885, %v2260
        %v2329 = vadd.f32 %v1886, %v2262
        %v2330 = vadd.f32 %v1887, %v2265
        %v2331 = vadd.f32 %v1888, %v2267
        %v2333 = vlaneseq
        %v2334 = vshrl.u32 %v2333, 7
        %v2335 = vsub.s32 0, %v2334
        %v2336 = vrot.slane %v215, %v2335
        %v2338 = vadd.f32 %v2300, %v2336
        %v2339 = vadd.f32 %v2301, %v2336
        %v2340 = vadd.f32 %v2302, %v2336
        %v2341 = vadd.f32 %v2303, %v2336
        %v2342 = vadd.f32 %v2304, %v2336
        %v2343 = vadd.f32 %v2305, %v2336
        %v2344 = vadd.f32 %v2306, %v2336
        %v2345 = vadd.f32 %v2307, %v2336
        %v2346 = vadd.f32 %v2308, %v2336
        %v2347 = vadd.f32 %v2309, %v2336
        %v2348 = vadd.f32 %v2310, %v2336
        %v2349 = vadd.f32 %v2311, %v2336
        %v2350 = vadd.f32 %v2312, %v2336
        %v2351 = vadd.f32 %v2313, %v2336
        %v2352 = vadd.f32 %v2314, %v2336
        %v2353 = vadd.f32 %v2315, %v2336
        %v2354 = vadd.f32 %v2316, %v2336
        %v2355 = vadd.f32 %v2317, %v2336
        %v2356 = vadd.f32 %v2318, %v2336
        %v2357 = vadd.f32 %v2319, %v2336
        %v2358 = vadd.f32 %v2320, %v2336
        %v2359 = vadd.f32 %v2321, %v2336
        %v2360 = vadd.f32 %v2322, %v2336
        %v2361 = vadd.f32 %v2323, %v2336
        %v2362 = vadd.f32 %v2324, %v2336
        %v2363 = vadd.f32 %v2325, %v2336
        %v2364 = vadd.f32 %v2326, %v2336
        %v2365 = vadd.f32 %v2327, %v2336
        %v2366 = vadd.f32 %v2328, %v2336
        %v2367 = vadd.f32 %v2329, %v2336
        %v2368 = vadd.f32 %v2330, %v2336
        %v2369 = vadd.f32 %v2331, %v2336
        %vm2370 = vcmp.gt.f32.partialorder %v2338, 0.0
        %vm2371 = vcmp.gt.f32.partialorder %v2339, 0.0
        %vm2372 = vcmp.gt.f32.partialorder %v2340, 0.0
        %vm2373 = vcmp.gt.f32.partialorder %v2341, 0.0
        %vm2374 = vcmp.gt.f32.partialorder %v2342, 0.0
        %vm2375 = vcmp.gt.f32.partialorder %v2343, 0.0
        %vm2376 = vcmp.gt.f32.partialorder %v2344, 0.0
        %vm2377 = vcmp.gt.f32.partialorder %v2345, 0.0
        %vm2378 = vcmp.gt.f32.partialorder %v2346, 0.0
        %vm2379 = vcmp.gt.f32.partialorder %v2347, 0.0
        %vm2380 = vcmp.gt.f32.partialorder %v2348, 0.0
        %vm2381 = vcmp.gt.f32.partialorder %v2349, 0.0
        %vm2382 = vcmp.gt.f32.partialorder %v2350, 0.0
        %vm2383 = vcmp.gt.f32.partialorder %v2351, 0.0
        %vm2384 = vcmp.gt.f32.partialorder %v2352, 0.0
        %vm2385 = vcmp.gt.f32.partialorder %v2353, 0.0
        %vm2386 = vcmp.gt.f32.partialorder %v2354, 0.0
        %vm2387 = vcmp.gt.f32.partialorder %v2355, 0.0
        %vm2388 = vcmp.gt.f32.partialorder %v2356, 0.0
        %vm2389 = vcmp.gt.f32.partialorder %v2357, 0.0
        %vm2390 = vcmp.gt.f32.partialorder %v2358, 0.0
        %vm2391 = vcmp.gt.f32.partialorder %v2359, 0.0
        %vm2392 = vcmp.gt.f32.partialorder %v2360, 0.0
        %vm2393 = vcmp.gt.f32.partialorder %v2361, 0.0
        %vm2394 = vcmp.gt.f32.partialorder %v2362, 0.0
        %vm2395 = vcmp.gt.f32.partialorder %v2363, 0.0
        %vm2396 = vcmp.gt.f32.partialorder %v2364, 0.0
        %vm2397 = vcmp.gt.f32.partialorder %v2365, 0.0
        %vm2398 = vcmp.gt.f32.partialorder %v2366, 0.0
        %vm2399 = vcmp.gt.f32.partialorder %v2367, 0.0
        %vm2400 = vcmp.gt.f32.partialorder %v2368, 0.0
        %vm2401 = vcmp.gt.f32.partialorder %v2369, 0.0
        %v2402 = vmul.f32 %v2338, 0.2
        %v2403 = vmul.f32 %v2339, 0.2
        %v2404 = vmul.f32 %v2340, 0.2
        %v2405 = vmul.f32 %v2341, 0.2
        %v2406 = vmul.f32 %v2342, 0.2
        %v2407 = vmul.f32 %v2343, 0.2
        %v2408 = vmul.f32 %v2344, 0.2
        %v2409 = vmul.f32 %v2345, 0.2
        %v2410 = vmul.f32 %v2346, 0.2
        %v2411 = vmul.f32 %v2347, 0.2
        %v2412 = vmul.f32 %v2348, 0.2
        %v2413 = vmul.f32 %v2349, 0.2
        %v2414 = vmul.f32 %v2350, 0.2
        %v2415 = vmul.f32 %v2351, 0.2
        %v2416 = vmul.f32 %v2352, 0.2
        %v2417 = vmul.f32 %v2353, 0.2
        %v2418 = vmul.f32 %v2354, 0.2
        %v2419 = vmul.f32 %v2355, 0.2
        %v2420 = vmul.f32 %v2356, 0.2
        %v2421 = vmul.f32 %v2357, 0.2
        %v2422 = vmul.f32 %v2358, 0.2
        %v2423 = vmul.f32 %v2359, 0.2
        %v2424 = vmul.f32 %v2360, 0.2
        %v2425 = vmul.f32 %v2361, 0.2
        %v2426 = vmul.f32 %v2362, 0.2
        %v2427 = vmul.f32 %v2363, 0.2
        %v2428 = vmul.f32 %v2364, 0.2
        %v2429 = vmul.f32 %v2365, 0.2
        %v2430 = vmul.f32 %v2366, 0.2
        %v2431 = vmul.f32 %v2367, 0.2
        %v2432 = vmul.f32 %v2368, 0.2
        %v2433 = vmul.f32 %v2369, 0.2
        %v2434 = vsel %vm2370, %v2338, %v2402
        %v2435 = vsel %vm2371, %v2339, %v2403
        %v2436 = vsel %vm2372, %v2340, %v2404
        %v2437 = vsel %vm2373, %v2341, %v2405
        %v2438 = vsel %vm2374, %v2342, %v2406
        %v2439 = vsel %vm2375, %v2343, %v2407
        %v2440 = vsel %vm2376, %v2344, %v2408
        %v2441 = vsel %vm2377, %v2345, %v2409
        %v2442 = vsel %vm2378, %v2346, %v2410
        %v2443 = vsel %vm2379, %v2347, %v2411
        %v2444 = vsel %vm2380, %v2348, %v2412
        %v2445 = vsel %vm2381, %v2349, %v2413
        %v2446 = vsel %vm2382, %v2350, %v2414
        %v2447 = vsel %vm2383, %v2351, %v2415
        %v2448 = vsel %vm2384, %v2352, %v2416
        %v2449 = vsel %vm2385, %v2353, %v2417
        %v2450 = vsel %vm2386, %v2354, %v2418
        %v2451 = vsel %vm2387, %v2355, %v2419
        %v2452 = vsel %vm2388, %v2356, %v2420
        %v2453 = vsel %vm2389, %v2357, %v2421
        %v2454 = vsel %vm2390, %v2358, %v2422
        %v2455 = vsel %vm2391, %v2359, %v2423
        %v2456 = vsel %vm2392, %v2360, %v2424
        %v2457 = vsel %vm2393, %v2361, %v2425
        %v2458 = vsel %vm2394, %v2362, %v2426
        %v2459 = vsel %vm2395, %v2363, %v2427
        %v2460 = vsel %vm2396, %v2364, %v2428
        %v2461 = vsel %vm2397, %v2365, %v2429
        %v2462 = vsel %vm2398, %v2366, %v2430
        %v2463 = vsel %vm2399, %v2367, %v2431
        %v2464 = vsel %vm2400, %v2368, %v2432
        %v2465 = vsel %vm2401, %v2369, %v2433
        %v2466 = vadd.f32 %v2434, %v2436
        %v2467 = vadd.f32 %v2435, %v2437
        %v2468 = vadd.f32 %v2438, %v2440
        %v2469 = vadd.f32 %v2439, %v2441
        %v2470 = vadd.f32 %v2442, %v2444
        %v2471 = vadd.f32 %v2443, %v2445
        %v2472 = vadd.f32 %v2446, %v2448
        %v2473 = vadd.f32 %v2447, %v2449
        %v2474 = vadd.f32 %v2450, %v2452
        %v2475 = vadd.f32 %v2451, %v2453
        %v2476 = vadd.f32 %v2454, %v2456
        %v2477 = vadd.f32 %v2455, %v2457
        %v2478 = vadd.f32 %v2458, %v2460
        %v2479 = vadd.f32 %v2459, %v2461
        %v2480 = vadd.f32 %v2462, %v2464
        %v2481 = vadd.f32 %v2463, %v2465
        %2482 = vst.msk [vmem:[#allocation2] sm:$0xff] %vm971, %v2466
        %2483 = vst.msk [vmem:[#allocation2 + $0x8] sm:$0xff] %vm971, %v2467
        %2484 = vst.msk [vmem:[#allocation2 + $0x10] sm:$0xff] %vm971, %v2468
        %2485 = vst.msk [vmem:[#allocation2 + $0x18] sm:$0xff] %vm971, %v2469
        %2486 = vst.msk [vmem:[#allocation2 + $0x20] sm:$0xff] %vm971, %v2470
        %2487 = vst.msk [vmem:[#allocation2 + $0x28] sm:$0xff] %vm971, %v2471
        %2488 = vst.msk [vmem:[#allocation2 + $0x30] sm:$0xff] %vm971, %v2472
        %2489 = vst.msk [vmem:[#allocation2 + $0x38] sm:$0xff] %vm971, %v2473
        %2490 = vst.msk [vmem:[#allocation2 + $0x40] sm:$0xff] %vm971, %v2474
        %2491 = vst.msk [vmem:[#allocation2 + $0x48] sm:$0xff] %vm971, %v2475
        %2492 = vst.msk [vmem:[#allocation2 + $0x50] sm:$0xff] %vm971, %v2476
        %2493 = vst.msk [vmem:[#allocation2 + $0x58] sm:$0xff] %vm971, %v2477
        %2494 = vst.msk [vmem:[#allocation2 + $0x60] sm:$0xff] %vm971, %v2478
        %2495 = vst.msk [vmem:[#allocation2 + $0x68] sm:$0xff] %vm971, %v2479
        %2496 = vst.msk [vmem:[#allocation2 + $0x70] sm:$0xff] %vm971, %v2480
        %2497 = vst.msk [vmem:[#allocation2 + $0x78] sm:$0xff] %vm971, %v2481
        %v2498 = vld [vmem:[#allocation2] ss:$2 sm:$0xff]
        %s2499 = scalar_lea.vmem [#allocation2], 16
        %v2500 = vld [vmem:[%s2499] ss:$2 sm:$0xff]
        %s2501 = scalar_lea.vmem [#allocation2], 32
        %v2502 = vld [vmem:[%s2501] ss:$2 sm:$0xff]
        %s2503 = scalar_lea.vmem [#allocation2], 48
        %v2504 = vld [vmem:[%s2503] ss:$2 sm:$0xff]
        %s2505 = scalar_lea.vmem [#allocation2], 64
        %v2506 = vld [vmem:[%s2505] ss:$2 sm:$0xff]
        %s2507 = scalar_lea.vmem [#allocation2], 80
        %v2508 = vld [vmem:[%s2507] ss:$2 sm:$0xff]
        %s2509 = scalar_lea.vmem [#allocation2], 96
        %v2510 = vld [vmem:[%s2509] ss:$2 sm:$0xff]
        %s2511 = scalar_lea.vmem [#allocation2], 112
        %v2512 = vld [vmem:[%s2511] ss:$2 sm:$0xff]
        %s2513 = scalar_lea.vmem [#allocation2], 1
        %v2514 = vld [vmem:[%s2513] ss:$2 sm:$0xff]
        %s2515 = scalar_lea.vmem [#allocation2], 17
        %v2516 = vld [vmem:[%s2515] ss:$2 sm:$0xff]
        %s2517 = scalar_lea.vmem [#allocation2], 33
        %v2518 = vld [vmem:[%s2517] ss:$2 sm:$0xff]
        %s2519 = scalar_lea.vmem [#allocation2], 49
        %v2520 = vld [vmem:[%s2519] ss:$2 sm:$0xff]
        %s2521 = scalar_lea.vmem [#allocation2], 65
        %v2522 = vld [vmem:[%s2521] ss:$2 sm:$0xff]
        %s2523 = scalar_lea.vmem [#allocation2], 81
        %v2524 = vld [vmem:[%s2523] ss:$2 sm:$0xff]
        %s2525 = scalar_lea.vmem [#allocation2], 97
        %v2526 = vld [vmem:[%s2525] ss:$2 sm:$0xff]
        %s2527 = scalar_lea.vmem [#allocation2], 113
        %v2528 = vld [vmem:[%s2527] ss:$2 sm:$0xff]
        %v2529 = vadd.f32 %v2498, %v2514
        %v2530 = vadd.f32 %v2500, %v2516
        %v2531 = vadd.f32 %v2502, %v2518
        %v2532 = vadd.f32 %v2504, %v2520
        %v2533 = vadd.f32 %v2506, %v2522
        %v2534 = vadd.f32 %v2508, %v2524
        %v2535 = vadd.f32 %v2510, %v2526
        %v2536 = vadd.f32 %v2512, %v2528
        %v2537 = vmul.f32 %v2529, 0.25
        %v2538 = vmul.f32 %v2530, 0.25
        %v2539 = vmul.f32 %v2531, 0.25
        %v2540 = vmul.f32 %v2532, 0.25
        %v2541 = vmul.f32 %v2533, 0.25
        %v2542 = vmul.f32 %v2534, 0.25
        %v2543 = vmul.f32 %v2535, 0.25
        %v2544 = vmul.f32 %v2536, 0.25
        %2545 = vst.msk [vmem:[%s201] sm:$0xff] %vm971, %v2537
        %2546 = vst.msk [vmem:[%s201 + $0x8] sm:$0xff] %vm971, %v2538
        %2547 = vst.msk [vmem:[%s201 + $0x10] sm:$0xff] %vm971, %v2539
        %2548 = vst.msk [vmem:[%s201 + $0x18] sm:$0xff] %vm971, %v2540
        %2549 = vst.msk [vmem:[%s201 + $0x20] sm:$0xff] %vm971, %v2541
        %2550 = vst.msk [vmem:[%s201 + $0x28] sm:$0xff] %vm971, %v2542
        %2551 = vst.msk [vmem:[%s201 + $0x30] sm:$0xff] %vm971, %v2543
        %2552 = vst.msk [vmem:[%s201 + $0x38] sm:$0xff] %vm971, %v2544
        %s2553 = sand.u32 %s117, 1
        %s2554 = scalar_lea.sflag [#allocation4], %s2553
        %s2555 = sand.u32 %s117, 1
        %s2556 = smul.addr %s2555, 64
        %s2557 = scalar_lea.vmem [#allocation3], %s2556
        // Predicated region
        $region33: #{discriminator_mid_block.3} parent=31 // pred_check
          %p2558 = pneg %p127
        $region34: #{discriminator_mid_block.3} parent=31 // pred_check_branch
          %2560 = sbr.rel (%p2558) target = $region36
        $region35: #{discriminator_mid_block.3} parent=31 // pred_region
          %s2562 = ssub.s32 1024, 1024
          %2563 = vsyncadd %s2554, %s2562
          %s2564 = smul.addr %s21, 8
          %s2565 = sadd.s32 %s22, %s2564
          %s2566 = smul.addr %s2565, 128
          %s2567 = scalar_lea.hbm %s3, %s2566
          %s2568 = sshll.u32 %s2557, 4
          %s2569 = int_to_ptr.vmem [resolvable:$true] %s2568
          %2574 = dma.vmem_to_hbm [thread:$0]  %s2569, 1024, %s2567, %s2554, 128, 128, 8
        $region36: #{discriminator_mid_block.3} parent=31 // pred_fallthru
          _
      $region32: #{discriminator_mid_block.3} parent=5 // pred_fallthru
        _
      %p2575 = scmp.le.s32.totalorder 2, %s12
      // Predicated region
      $region37: #{discriminator_mid_block.3} parent=5 // pred_check
        %p2576 = pneg %p2575
      $region38: #{discriminator_mid_block.3} parent=5 // pred_check_branch
        %2578 = sbr.rel (%p2576) target = $region40
      $region39: #{discriminator_mid_block.3} parent=5 // pred_region
        %s2579 = ssub.s32 %s12, 2
        // Predicated region
        $region41: #{discriminator_mid_block.3} parent=39 // pred_check
          %p2580 = pneg %p133
        $region42: #{discriminator_mid_block.3} parent=39 // pred_check_branch
          %2582 = sbr.rel (%p2580) target = $region44
        $region43: #{discriminator_mid_block.3} parent=39 // pred_region
          %s2583 = sand.u32 %s118, 1
          %s2584 = scalar_lea.sflag [#allocation4], %s2583
          %s2585 = sand.u32 %s118, 1
          %s2586 = smul.addr %s2585, 64
          %s2587 = scalar_lea.vmem [#allocation3], %s2586
          %2588 = dma.done %s2584, 1024
        $region44: #{discriminator_mid_block.3} parent=39 // pred_fallthru
          _
      $region40: #{discriminator_mid_block.3} parent=5 // pred_fallthru
        _
    $region6: #{discriminator_mid_block.3} parent=1 // loop_footer
      %s16 = sadd.s32 1, %s12
    $region7: #{discriminator_mid_block.3} parent=1 // loop_footer_branch
      %11 = sbr.rel target = $region3
    $region8: #{discriminator_mid_block.3} parent=1 // loop_exit
      _
    %2589 = vsyncpa [#allocation4], 1
    %s2590 = scalar_lea.sflag [#allocation4], 1
    %2591 = vsyncpa %s2590, 1

// kernel: discriminator_mid_block.2
$region0: #{discriminator_mid_block.2}
  #allocation0 [shape = 'u32[]', space=smem, size = 0x4, offset = 0x4, fixed_abs, tag = 'smem constant byte address 0x4 - core index']
  #allocation1 [shape = 'u32[144,128]{1,0:T(1,128)}', space=vmem, size = 0x12000, scoped, tag = 'internal scratch']
  %s0 = inlined_call_operand.vmem [shape: bf16[2,18,24,20], index: 0, kind: input, shape index: {}]
  %s1 = inlined_call_operand.vmem [shape: bf16[3,60,16], index: 1, kind: input, shape index: {}]
  %s2 = inlined_call_operand.vmem [shape: f32[1,16], index: 2, kind: input, shape index: {}]
  %s3 = inlined_call_operand.vmem [shape: bf16[2,18,24,16], index: 3, kind: output, shape index: {}]
  %s4 = sld [smem:[#allocation0]]
  $region45: #{discriminator_mid_block.2} parent=0
    _
  %s6 = ssub.s32 1, %s4
  %s7 = scalar_select 0, %s6, %s4
  loop: start=0, step=1, limit=4
  $region2: #{discriminator_mid_block.2} parent=0 // loop_pre_header
    _
  $region3: #{discriminator_mid_block.2} parent=0 // loop_header
    %s9 = sphi 0, %s13
    %p10 = scmp.ge.s32.totalorder %s9, 4
    %s16 = sphi 0, %s28
    %s17 = sphi 0, %s24
    %s18 = sphi 0, %s16
    %s19 = sphi 0, %s17
    %s20 = sphi 0, %s18
    %s21 = sphi 0, %s19
    %s31 = sphi 0, %s33
    %s34 = sphi 0, %s31
    %s35 = sphi 0, %s34
    %s51 = sphi 0, %s35
    %s57 = sphi 0, %s59
    %s60 = sphi 0, %s57
    %s61 = sphi 0, %s60
    %s77 = sphi 0, %s61
    %s83 = sphi 0, %s85
    %s86 = sphi 0, %s83
    %s87 = sphi 0, %s86
    %s103 = sphi 0, %s87
    %s111 = sphi 0, %s113
    %s114 = sphi 0, %s111
    %s115 = sphi 0, %s114
    %s131 = sphi 0, %s115
  $region4: #{discriminator_mid_block.2} parent=0 // loop_header_branch
    %12 = sbr.rel (%p10) target = $region8
  $region5: #{discriminator_mid_block.2} parent=0 // loop_body
    %s14 = ssub.s32 %s9, 1
    %s15 = ssub.s32 %s9, 2
    %s22 = sadd.s32 1, %s17
    %p23 = scmp.ge.s32.totalorder %s22, 1
    %s24 = scalar_select %p23, 0, %s22
    %s25 = sadd.s32 1, %s16
    %s26 = scalar_select %p23, %s25, %s16
    %p27 = scmp.ge.s32.totalorder %s26, 2
    %s28 = scalar_select %p27, 0, %s26
    %s29 = ssub.s32 %s16, %s28
    %p30 = scmp.eq.s32.totalorder %s29, 0
    %s32 = sadd.s32 %s31, 1
    %s33 = scalar_select %p30, %s31, %s32
    %p36 = pneg %p30
    %p37 = scmp.eq.s32.totalorder %s9, 1
    %p38 = por %p36, %p37
    %p39 = scmp.ne.s32.totalorder %s31, %s34
    %p40 = scmp.eq.s32.totalorder %s9, 0
    %p41 = por %p39, %p40
    %p42 = scmp.ne.s32.totalorder %s31, %s34
    %p43 = scmp.eq.s32.totalorder %s14, 1
    %p44 = por %p42, %p43
    %p45 = scmp.ne.s32.totalorder %s34, %s35
    %p46 = scmp.eq.s32.totalorder %s14, 0
    %p47 = por %p45, %p46
    %p48 = scmp.ne.s32.totalorder %s34, %s35
    %p49 = scmp.eq.s32.totalorder %s15, 1
    %p50 = por %p48, %p49
    %p52 = scmp.ne.s32.totalorder %s35, %s51
    %p53 = scmp.eq.s32.totalorder %s15, 0
    %p54 = por %p52, %p53
    %s55 = ssub.s32 %s17, %s24
    %p56 = scmp.eq.s32.totalorder %s55, 0
    %s58 = sadd.s32 %s57, 1
    %s59 = scalar_select %p56, %s57, %s58
    %p62 = pneg %p56
    %p63 = scmp.eq.s32.totalorder %s9, 1
    %p64 = por %p62, %p63
    %p65 = scmp.ne.s32.totalorder %s57, %s60
    %p66 = scmp.eq.s32.totalorder %s9, 0
    %p67 = por %p65, %p66
    %p68 = scmp.ne.s32.totalorder %s57, %s60
    %p69 = scmp.eq.s32.totalorder %s14, 1
    %p70 = por %p68, %p69
    %p71 = scmp.ne.s32.totalorder %s60, %s61
    %p72 = scmp.eq.s32.totalorder %s14, 0
    %p73 = por %p71, %p72
    %p74 = scmp.ne.s32.totalorder %s60, %s61
    %p75 = scmp.eq.s32.totalorder %s15, 1
    %p76 = por %p74, %p75
    %p78 = scmp.ne.s32.totalorder %s61, %s77
    %p79 = scmp.eq.s32.totalorder %s15, 0
    %p80 = por %p78, %p79
    %s81 = ssub.s32 %s17, %s24
    %p82 = scmp.eq.s32.totalorder %s81, 0
    %s84 = sadd.s32 %s83, 1
    %s85 = scalar_select %p82, %s83, %s84
    %p88 = pneg %p82
    %p89 = scmp.eq.s32.totalorder %s9, 1
    %p90 = por %p88, %p89
    %p91 = scmp.ne.s32.totalorder %s83, %s86
    %p92 = scmp.eq.s32.totalorder %s9, 0
    %p93 = por %p91, %p92
    %p94 = scmp.ne.s32.totalorder %s83, %s86
    %p95 = scmp.eq.s32.totalorder %s14, 1
    %p96 = por %p94, %p95
    %p97 = scmp.ne.s32.totalorder %s86, %s87
    %p98 = scmp.eq.s32.totalorder %s14, 0
    %p99 = por %p97, %p98
    %p100 = scmp.ne.s32.totalorder %s86, %s87
    %p101 = scmp.eq.s32.totalorder %s15, 1
    %p102 = por %p100, %p101
    %p104 = scmp.ne.s32.totalorder %s87, %s103
    %p105 = scmp.eq.s32.totalorder %s15, 0
    %p106 = por %p104, %p105
    %s107 = ssub.s32 %s16, %s28
    %s108 = ssub.s32 %s17, %s24
    %s109 = sor.u32 %s107, %s108
    %p110 = scmp.eq.s32.totalorder %s109, 0
    %s112 = sadd.s32 %s111, 1
    %s113 = scalar_select %p110, %s111, %s112
    %p116 = pneg %p110
    %p117 = scmp.eq.s32.totalorder %s9, 1
    %p118 = por %p116, %p117
    %p119 = scmp.ne.s32.totalorder %s111, %s114
    %p120 = scmp.eq.s32.totalorder %s9, 0
    %p121 = por %p119, %p120
    %p122 = scmp.ne.s32.totalorder %s111, %s114
    %p123 = scmp.eq.s32.totalorder %s14, 1
    %p124 = por %p122, %p123
    %p125 = scmp.ne.s32.totalorder %s114, %s115
    %p126 = scmp.eq.s32.totalorder %s14, 0
    %p127 = por %p125, %p126
    %p128 = scmp.ne.s32.totalorder %s114, %s115
    %p129 = scmp.eq.s32.totalorder %s15, 1
    %p130 = por %p128, %p129
    %p132 = scmp.ne.s32.totalorder %s115, %s131
    %p133 = scmp.eq.s32.totalorder %s15, 0
    %p134 = por %p132, %p133
    %p135 = scmp.le.s32.totalorder 1, %s9
    %p136 = scmp.lt.s32.totalorder %s9, 3
    %p137 = pnand %p135, %p136
    %p138 = pneg %p137
    // Predicated region
    $region9: #{discriminator_mid_block.2} parent=5 // pred_check
      _
    $region10: #{discriminator_mid_block.2} parent=5 // pred_check_branch
      %140 = sbr.rel (%p137) target = $region12
    $region11: #{discriminator_mid_block.2} parent=5 // pred_region
      %s141 = ssub.s32 %s9, 1
      // Predicated region
      $region13: #{discriminator_mid_block.2} parent=11 // pred_check
        %p142 = pneg %p73
      $region14: #{discriminator_mid_block.2} parent=11 // pred_check_branch
        %144 = sbr.rel (%p142) target = $region16
      $region15: #{discriminator_mid_block.2} parent=11 // pred_region
        %p145 = scmp.lt.s32.totalorder %s19, 0
        %s146 = scalar_select %p145, %s19, 0
        %s147 = smul.addr %s146, 4
        %s148 = scalar_lea.vmem %s1, %s147
      $region16: #{discriminator_mid_block.2} parent=11 // pred_fallthru
        _
      // Predicated region
      $region17: #{discriminator_mid_block.2} parent=11 // pred_check
        %p149 = pneg %p99
      $region18: #{discriminator_mid_block.2} parent=11 // pred_check_branch
        %151 = sbr.rel (%p149) target = $region20
      $region19: #{discriminator_mid_block.2} parent=11 // pred_region
        %p152 = scmp.lt.s32.totalorder %s19, 0
        %s153 = scalar_select %p152, %s19, 0
        %s154 = scalar_lea.vmem %s2, %s153
      $region20: #{discriminator_mid_block.2} parent=11 // pred_fallthru
        _
    $region12: #{discriminator_mid_block.2} parent=5 // pred_fallthru
      _
    %p155 = scmp.lt.s32.totalorder %s9, 2
    // Predicated region
    $region21: #{discriminator_mid_block.2} parent=5 // pred_check
      %p156 = pneg %p155
    $region22: #{discriminator_mid_block.2} parent=5 // pred_check_branch
      %158 = sbr.rel (%p156) target = $region24
    $region23: #{discriminator_mid_block.2} parent=5 // pred_region
      // Predicated region
      $region25: #{discriminator_mid_block.2} parent=23 // pred_check
        %p159 = pneg %p41
      $region26: #{discriminator_mid_block.2} parent=23 // pred_check_branch
        %161 = sbr.rel (%p159) target = $region28
      $region27: #{discriminator_mid_block.2} parent=23 // pred_region
        %p162 = scmp.lt.s32.totalorder %s16, 1
        %s163 = scalar_select %p162, %s16, 1
        %s164 = smul.addr %s163, 54
        %s165 = smul.addr %s164, 4
        %s166 = scalar_lea.vmem %s0, %s165
      $region28: #{discriminator_mid_block.2} parent=23 // pred_fallthru
        _
    $region24: #{discriminator_mid_block.2} parent=5 // pred_fallthru
      _
    %p167 = scmp.le.s32.totalorder 1, %s9
    %p168 = scmp.lt.s32.totalorder %s9, 3
    %p169 = pnand %p167, %p168
    %p170 = pneg %p169
    // Predicated region
    $region29: #{discriminator_mid_block.2} parent=5 // pred_check
      _
    $region30: #{discriminator_mid_block.2} parent=5 // pred_check_branch
      %172 = sbr.rel (%p169) target = $region32
    $region31: #{discriminator_mid_block.2} parent=5 // pred_region
      %s173 = ssub.s32 %s9, 1
      %p174 = scmp.lt.s32.totalorder %s18, 1
      %s175 = scalar_select %p174, %s18, 1
      %s176 = smul.addr %s175, 54
      %s177 = smul.addr %s176, 4
      %s178 = scalar_lea.vmem %s0, %s177
      %p179 = pneg %p47
      %p180 = pneg %p44
      %p181 = scmp.lt.s32.totalorder %s19, 0
      %s182 = scalar_select %p181, %s19, 0
      %s183 = smul.addr %s182, 4
      %s184 = scalar_lea.vmem %s1, %s183
      %p185 = pneg %p73
      %p186 = pneg %p70
      %p187 = scmp.lt.s32.totalorder %s19, 0
      %s188 = scalar_select %p187, %s19, 0
      %s189 = scalar_lea.vmem %s2, %s188
      %p190 = pneg %p99
      %p191 = pneg %p96
      %p192 = pneg %p127
      %p193 = pneg %p124
      %p194 = scmp.lt.s32.totalorder %s18, 1
      %s195 = scalar_select %p194, %s18, 1
      %p196 = scmp.lt.s32.totalorder %s19, 0
      %s197 = scalar_select %p196, %s19, 0
      %s198 = smul.addr %s195, 54
      %s199 = sadd.s32 %s197, %s198
      %s200 = smul.addr %s199, 4
      %s201 = scalar_lea.vmem %s3, %s200
      %p202 = scmp.lt.s32.totalorder %s18, 1
      %s203 = scalar_select %p202, %s18, 1
      %s204 = smul.addr %s203, 54
      %s205 = smul.addr %s204, 4
      %s206 = scalar_lea.vmem %s0, %s205
      %p207 = scmp.lt.s32.totalorder %s19, 0
      %s208 = scalar_select %p207, %s19, 0
      %s209 = smul.addr %s208, 4
      %s210 = scalar_lea.vmem %s1, %s209
      %p211 = scmp.lt.s32.totalorder %s19, 0
      %s212 = scalar_select %p211, %s19, 0
      %s213 = scalar_lea.vmem %s2, %s212
      %p214 = scmp.lt.s32.totalorder %s18, 1
      %s215 = scalar_select %p214, %s18, 1
      %p216 = scmp.lt.s32.totalorder %s19, 0
      %s217 = scalar_select %p216, %s19, 0
      %s218 = smul.addr %s215, 54
      %s219 = sadd.s32 %s217, %s218
      %s220 = smul.addr %s219, 4
      %s221 = scalar_lea.vmem %s3, %s220
      %vm223 = vcmask 125952
      %224 = vst.msk [vmem:[%s221] sm:$0xf] %vm223, 0
      %225 = vst.msk [vmem:[%s221 + $0x4] sm:$0xf] %vm223, 0
      %226 = vst.msk [vmem:[%s221 + $0x8] sm:$0xf] %vm223, 0
      %227 = vst.msk [vmem:[%s221 + $0xc] sm:$0xf] %vm223, 0
      %228 = vst.msk [vmem:[%s221 + $0x10] sm:$0xf] %vm223, 0
      %229 = vst.msk [vmem:[%s221 + $0x14] sm:$0xf] %vm223, 0
      %230 = vst.msk [vmem:[%s221 + $0x18] sm:$0xf] %vm223, 0
      %231 = vst.msk [vmem:[%s221 + $0x1c] sm:$0xf] %vm223, 0
      %232 = vst.msk [vmem:[%s221 + $0x20] sm:$0xf] %vm223, 0
      %233 = vst.msk [vmem:[%s221 + $0x24] sm:$0xf] %vm223, 0
      %234 = vst.msk [vmem:[%s221 + $0x28] sm:$0xf] %vm223, 0
      %235 = vst.msk [vmem:[%s221 + $0x2c] sm:$0xf] %vm223, 0
      %236 = vst.msk [vmem:[%s221 + $0x30] sm:$0xf] %vm223, 0
      %237 = vst.msk [vmem:[%s221 + $0x34] sm:$0xf] %vm223, 0
      %238 = vst.msk [vmem:[%s221 + $0x38] sm:$0xf] %vm223, 0
      %239 = vst.msk [vmem:[%s221 + $0x3c] sm:$0xf] %vm223, 0
      %240 = vst.msk [vmem:[%s221 + $0x40] sm:$0xf] %vm223, 0
      %241 = vst.msk [vmem:[%s221 + $0x44] sm:$0xf] %vm223, 0
      %242 = vst.msk [vmem:[%s221 + $0x48] sm:$0xf] %vm223, 0
      %243 = vst.msk [vmem:[%s221 + $0x4c] sm:$0xf] %vm223, 0
      %244 = vst.msk [vmem:[%s221 + $0x50] sm:$0xf] %vm223, 0
      %245 = vst.msk [vmem:[%s221 + $0x54] sm:$0xf] %vm223, 0
      %246 = vst.msk [vmem:[%s221 + $0x58] sm:$0xf] %vm223, 0
      %247 = vst.msk [vmem:[%s221 + $0x5c] sm:$0xf] %vm223, 0
      %248 = vst.msk [vmem:[%s221 + $0x60] sm:$0xf] %vm223, 0
      %249 = vst.msk [vmem:[%s221 + $0x64] sm:$0xf] %vm223, 0
      %250 = vst.msk [vmem:[%s221 + $0x68] sm:$0xf] %vm223, 0
      %251 = vst.msk [vmem:[%s221 + $0x6c] sm:$0xf] %vm223, 0
      %252 = vst.msk [vmem:[%s221 + $0x70] sm:$0xf] %vm223, 0
      %253 = vst.msk [vmem:[%s221 + $0x74] sm:$0xf] %vm223, 0
      %254 = vst.msk [vmem:[%s221 + $0x78] sm:$0xf] %vm223, 0
      %255 = vst.msk [vmem:[%s221 + $0x7c] sm:$0xf] %vm223, 0
      %256 = vst.msk [vmem:[%s221 + $0x80] sm:$0xf] %vm223, 0
      %257 = vst.msk [vmem:[%s221 + $0x84] sm:$0xf] %vm223, 0
      %258 = vst.msk [vmem:[%s221 + $0x88] sm:$0xf] %vm223, 0
      %259 = vst.msk [vmem:[%s221 + $0x8c] sm:$0xf] %vm223, 0
      %260 = vst.msk [vmem:[%s221 + $0x90] sm:$0xf] %vm223, 0
      %261 = vst.msk [vmem:[%s221 + $0x94] sm:$0xf] %vm223, 0
      %262 = vst.msk [vmem:[%s221 + $0x98] sm:$0xf] %vm223, 0
      %263 = vst.msk [vmem:[%s221 + $0x9c] sm:$0xf] %vm223, 0
      %264 = vst.msk [vmem:[%s221 + $0xa0] sm:$0xf] %vm223, 0
      %265 = vst.msk [vmem:[%s221 + $0xa4] sm:$0xf] %vm223, 0
      %266 = vst.msk [vmem:[%s221 + $0xa8] sm:$0xf] %vm223, 0
      %267 = vst.msk [vmem:[%s221 + $0xac] sm:$0xf] %vm223, 0
      %268 = vst.msk [vmem:[%s221 + $0xb0] sm:$0xf] %vm223, 0
      %269 = vst.msk [vmem:[%s221 + $0xb4] sm:$0xf] %vm223, 0
      %270 = vst.msk [vmem:[%s221 + $0xb8] sm:$0xf] %vm223, 0
      %271 = vst.msk [vmem:[%s221 + $0xbc] sm:$0xf] %vm223, 0
      %272 = vst.msk [vmem:[%s221 + $0xc0] sm:$0xf] %vm223, 0
      %273 = vst.msk [vmem:[%s221 + $0xc4] sm:$0xf] %vm223, 0
      %274 = vst.msk [vmem:[%s221 + $0xc8] sm:$0xf] %vm223, 0
      %275 = vst.msk [vmem:[%s221 + $0xcc] sm:$0xf] %vm223, 0
      %276 = vst.msk [vmem:[%s221 + $0xd0] sm:$0xf] %vm223, 0
      %277 = vst.msk [vmem:[%s221 + $0xd4] sm:$0xf] %vm223, 0
      %v278 = vld [vmem:[%s213] sm:$0x1]
      %v279 = vld [vmem:[%s206] sm:$0xf]
      %v280 = vld [vmem:[%s206 + $0x4] sm:$0xf]
      %v281 = vld [vmem:[%s206 + $0x8] sm:$0xf]
      %v282 = vld [vmem:[%s206 + $0xc] sm:$0xf]
      %v283 = vld [vmem:[%s206 + $0x10] sm:$0xf]
      %v284 = vld [vmem:[%s206 + $0x14] sm:$0xf]
      %v285 = vld [vmem:[%s206 + $0x18] sm:$0xf]
      %v286 = vld [vmem:[%s206 + $0x1c] sm:$0xf]
      %v287 = vld [vmem:[%s206 + $0x20] sm:$0xf]
      %v288 = vld [vmem:[%s206 + $0x24] sm:$0xf]
      %v289 = vld [vmem:[%s206 + $0x28] sm:$0xf]
      %v290 = vld [vmem:[%s206 + $0x2c] sm:$0xf]
      %v291 = vld [vmem:[%s206 + $0x30] sm:$0xf]
      %v292 = vld [vmem:[%s206 + $0x34] sm:$0xf]
      %v293 = vld [vmem:[%s206 + $0x38] sm:$0xf]
      %v294 = vld [vmem:[%s206 + $0x3c] sm:$0xf]
      %v295 = vld [vmem:[%s206 + $0x40] sm:$0xf]
      %v296 = vld [vmem:[%s206 + $0x44] sm:$0xf]
      %v297 = vld [vmem:[%s206 + $0x48] sm:$0xf]
      %v298 = vld [vmem:[%s206 + $0x4c] sm:$0xf]
      %v299 = vld [vmem:[%s206 + $0x50] sm:$0xf]
      %v300 = vld [vmem:[%s206 + $0x54] sm:$0xf]
      %v301 = vld [vmem:[%s206 + $0x58] sm:$0xf]
      %v302 = vld [vmem:[%s206 + $0x5c] sm:$0xf]
      %v303 = vld [vmem:[%s206 + $0x60] sm:$0xf]
      %v304 = vld [vmem:[%s206 + $0x64] sm:$0xf]
      %v305 = vld [vmem:[%s206 + $0x68] sm:$0xf]
      %v306 = vld [vmem:[%s206 + $0x6c] sm:$0xf]
      %v307 = vld [vmem:[%s206 + $0x70] sm:$0xf]
      %v308 = vld [vmem:[%s206 + $0x74] sm:$0xf]
      %v309 = vld [vmem:[%s206 + $0x78] sm:$0xf]
      %v310 = vld [vmem:[%s206 + $0x7c] sm:$0xf]
      %v311 = vld [vmem:[%s206 + $0x80] sm:$0xf]
      %v312 = vld [vmem:[%s206 + $0x84] sm:$0xf]
      %v313 = vld [vmem:[%s206 + $0x88] sm:$0xf]
      %v314 = vld [vmem:[%s206 + $0x8c] sm:$0xf]
      %v315 = vld [vmem:[%s206 + $0x90] sm:$0xf]
      %v316 = vld [vmem:[%s206 + $0x94] sm:$0xf]
      %v317 = vld [vmem:[%s206 + $0x98] sm:$0xf]
      %v318 = vld [vmem:[%s206 + $0x9c] sm:$0xf]
      %v319 = vld [vmem:[%s206 + $0xa0] sm:$0xf]
      %v320 = vld [vmem:[%s206 + $0xa4] sm:$0xf]
      %v321 = vld [vmem:[%s206 + $0xa8] sm:$0xf]
      %v322 = vld [vmem:[%s206 + $0xac] sm:$0xf]
      %v323 = vld [vmem:[%s206 + $0xb0] sm:$0xf]
      %v324 = vld [vmem:[%s206 + $0xb4] sm:$0xf]
      %v325 = vld [vmem:[%s206 + $0xb8] sm:$0xf]
      %v326 = vld [vmem:[%s206 + $0xbc] sm:$0xf]
      %s327 = scalar_lea.vmem %s206, 12
      %v328 = vld [vmem:[%s327] sm:$0xf]
      %v329 = vld [vmem:[%s327 + $0x4] sm:$0xf]
      %v330 = vld [vmem:[%s327 + $0x8] sm:$0xf]
      %v331 = vld [vmem:[%s327 + $0xc] sm:$0xf]
      %v332 = vld [vmem:[%s327 + $0x10] sm:$0xf]
      %v333 = vld [vmem:[%s327 + $0x14] sm:$0xf]
      %v334 = vld [vmem:[%s327 + $0x18] sm:$0xf]
      %v335 = vld [vmem:[%s327 + $0x1c] sm:$0xf]
      %v336 = vld [vmem:[%s327 + $0x20] sm:$0xf]
      %v337 = vld [vmem:[%s327 + $0x24] sm:$0xf]
      %v338 = vld [vmem:[%s327 + $0x28] sm:$0xf]
      %v339 = vld [vmem:[%s327 + $0x2c] sm:$0xf]
      %v340 = vld [vmem:[%s327 + $0x30] sm:$0xf]
      %v341 = vld [vmem:[%s327 + $0x34] sm:$0xf]
      %v342 = vld [vmem:[%s327 + $0x38] sm:$0xf]
      %v343 = vld [vmem:[%s327 + $0x3c] sm:$0xf]
      %v344 = vld [vmem:[%s327 + $0x40] sm:$0xf]
      %v345 = vld [vmem:[%s327 + $0x44] sm:$0xf]
      %v346 = vld [vmem:[%s327 + $0x48] sm:$0xf]
      %v347 = vld [vmem:[%s327 + $0x4c] sm:$0xf]
      %v348 = vld [vmem:[%s327 + $0x50] sm:$0xf]
      %v349 = vld [vmem:[%s327 + $0x54] sm:$0xf]
      %v350 = vld [vmem:[%s327 + $0x58] sm:$0xf]
      %v351 = vld [vmem:[%s327 + $0x5c] sm:$0xf]
      %v352 = vld [vmem:[%s327 + $0x60] sm:$0xf]
      %v353 = vld [vmem:[%s327 + $0x64] sm:$0xf]
      %v354 = vld [vmem:[%s327 + $0x68] sm:$0xf]
      %v355 = vld [vmem:[%s327 + $0x6c] sm:$0xf]
      %v356 = vld [vmem:[%s327 + $0x70] sm:$0xf]
      %v357 = vld [vmem:[%s327 + $0x74] sm:$0xf]
      %v358 = vld [vmem:[%s327 + $0x78] sm:$0xf]
      %v359 = vld [vmem:[%s327 + $0x7c] sm:$0xf]
      %v360 = vld [vmem:[%s327 + $0x80] sm:$0xf]
      %v361 = vld [vmem:[%s327 + $0x84] sm:$0xf]
      %v362 = vld [vmem:[%s327 + $0x88] sm:$0xf]
      %v363 = vld [vmem:[%s327 + $0x8c] sm:$0xf]
      %v364 = vld [vmem:[%s327 + $0x90] sm:$0xf]
      %v365 = vld [vmem:[%s327 + $0x94] sm:$0xf]
      %v366 = vld [vmem:[%s327 + $0x98] sm:$0xf]
      %v367 = vld [vmem:[%s327 + $0x9c] sm:$0xf]
      %v368 = vld [vmem:[%s327 + $0xa0] sm:$0xf]
      %v369 = vld [vmem:[%s327 + $0xa4] sm:$0xf]
      %v370 = vld [vmem:[%s327 + $0xa8] sm:$0xf]
      %v371 = vld [vmem:[%s327 + $0xac] sm:$0xf]
      %v372 = vld [vmem:[%s327 + $0xb0] sm:$0xf]
      %v373 = vld [vmem:[%s327 + $0xb4] sm:$0xf]
      %v374 = vld [vmem:[%s327 + $0xb8] sm:$0xf]
      %v375 = vld [vmem:[%s327 + $0xbc] sm:$0xf]
      %s376 = scalar_lea.vmem %s206, 24
      %v377 = vld [vmem:[%s376] sm:$0xf]
      %v378 = vld [vmem:[%s376 + $0x4] sm:$0xf]
      %v379 = vld [vmem:[%s376 + $0x8] sm:$0xf]
      %v380 = vld [vmem:[%s376 + $0xc] sm:$0xf]
      %v381 = vld [vmem:[%s376 + $0x10] sm:$0xf]
      %v382 = vld [vmem:[%s376 + $0x14] sm:$0xf]
      %v383 = vld [vmem:[%s376 + $0x18] sm:$0xf]
      %v384 = vld [vmem:[%s376 + $0x1c] sm:$0xf]
      %v385 = vld [vmem:[%s376 + $0x20] sm:$0xf]
      %v386 = vld [vmem:[%s376 + $0x24] sm:$0xf]
      %v387 = vld [vmem:[%s376 + $0x28] sm:$0xf]
      %v388 = vld [vmem:[%s376 + $0x2c] sm:$0xf]
      %v389 = vld [vmem:[%s376 + $0x30] sm:$0xf]
      %v390 = vld [vmem:[%s376 + $0x34] sm:$0xf]
      %v391 = vld [vmem:[%s376 + $0x38] sm:$0xf]
      %v392 = vld [vmem:[%s376 + $0x3c] sm:$0xf]
      %v393 = vld [vmem:[%s376 + $0x40] sm:$0xf]
      %v394 = vld [vmem:[%s376 + $0x44] sm:$0xf]
      %v395 = vld [vmem:[%s376 + $0x48] sm:$0xf]
      %v396 = vld [vmem:[%s376 + $0x4c] sm:$0xf]
      %v397 = vld [vmem:[%s376 + $0x50] sm:$0xf]
      %v398 = vld [vmem:[%s376 + $0x54] sm:$0xf]
      %v399 = vld [vmem:[%s376 + $0x58] sm:$0xf]
      %v400 = vld [vmem:[%s376 + $0x5c] sm:$0xf]
      %v401 = vld [vmem:[%s376 + $0x60] sm:$0xf]
      %v402 = vld [vmem:[%s376 + $0x64] sm:$0xf]
      %v403 = vld [vmem:[%s376 + $0x68] sm:$0xf]
      %v404 = vld [vmem:[%s376 + $0x6c] sm:$0xf]
      %v405 = vld [vmem:[%s376 + $0x70] sm:$0xf]
      %v406 = vld [vmem:[%s376 + $0x74] sm:$0xf]
      %v407 = vld [vmem:[%s376 + $0x78] sm:$0xf]
      %v408 = vld [vmem:[%s376 + $0x7c] sm:$0xf]
      %v409 = vld [vmem:[%s376 + $0x80] sm:$0xf]
      %v410 = vld [vmem:[%s376 + $0x84] sm:$0xf]
      %v411 = vld [vmem:[%s376 + $0x88] sm:$0xf]
      %v412 = vld [vmem:[%s376 + $0x8c] sm:$0xf]
      %v413 = vld [vmem:[%s376 + $0x90] sm:$0xf]
      %v414 = vld [vmem:[%s376 + $0x94] sm:$0xf]
      %v415 = vld [vmem:[%s376 + $0x98] sm:$0xf]
      %v416 = vld [vmem:[%s376 + $0x9c] sm:$0xf]
      %v417 = vld [vmem:[%s376 + $0xa0] sm:$0xf]
      %v418 = vld [vmem:[%s376 + $0xa4] sm:$0xf]
      %v419 = vld [vmem:[%s376 + $0xa8] sm:$0xf]
      %v420 = vld [vmem:[%s376 + $0xac] sm:$0xf]
      %v421 = vld [vmem:[%s376 + $0xb0] sm:$0xf]
      %v422 = vld [vmem:[%s376 + $0xb4] sm:$0xf]
      %v423 = vld [vmem:[%s376 + $0xb8] sm:$0xf]
      %v424 = vld [vmem:[%s376 + $0xbc] sm:$0xf]
      %v473 = vunpack.c.l.b16 %v279
      %v474 = vunpack.c.l.b16 %v280
      %v475 = vunpack.c.l.b16 %v281
      %v476 = vunpack.c.l.b16 %v282
      %v477 = vunpack.c.l.b16 %v283
      %v478 = vunpack.c.l.b16 %v284
      %v479 = vunpack.c.l.b16 %v285
      %v480 = vunpack.c.l.b16 %v286
      %v481 = vunpack.c.l.b16 %v287
      %v482 = vunpack.c.l.b16 %v288
      %v483 = vunpack.c.l.b16 %v289
      %v484 = vunpack.c.l.b16 %v290
      %v485 = vunpack.c.l.b16 %v291
      %v486 = vunpack.c.l.b16 %v292
      %v487 = vunpack.c.l.b16 %v293
      %v488 = vunpack.c.l.b16 %v294
      %v489 = vunpack.c.l.b16 %v295
      %v490 = vunpack.c.l.b16 %v296
      %v491 = vunpack.c.l.b16 %v297
      %v492 = vunpack.c.l.b16 %v298
      %v493 = vunpack.c.l.b16 %v299
      %v494 = vunpack.c.l.b16 %v300
      %v495 = vunpack.c.l.b16 %v301
      %v496 = vunpack.c.l.b16 %v302
      %v497 = vunpack.c.l.b16 %v303
      %v498 = vunpack.c.l.b16 %v304
      %v499 = vunpack.c.l.b16 %v305
      %v500 = vunpack.c.l.b16 %v306
      %v501 = vunpack.c.l.b16 %v307
      %v502 = vunpack.c.l.b16 %v308
      %v503 = vunpack.c.l.b16 %v309
      %v504 = vunpack.c.l.b16 %v310
      %v505 = vunpack.c.l.b16 %v311
      %v506 = vunpack.c.l.b16 %v312
      %v507 = vunpack.c.l.b16 %v313
      %v508 = vunpack.c.l.b16 %v314
      %v509 = vunpack.c.l.b16 %v315
      %v510 = vunpack.c.l.b16 %v316
      %v511 = vunpack.c.l.b16 %v317
      %v512 = vunpack.c.l.b16 %v318
      %v513 = vunpack.c.l.b16 %v319
      %v514 = vunpack.c.l.b16 %v320
      %v515 = vunpack.c.l.b16 %v321
      %v516 = vunpack.c.l.b16 %v322
      %v517 = vunpack.c.l.b16 %v323
      %v518 = vunpack.c.l.b16 %v324
      %v519 = vunpack.c.l.b16 %v325
      %v520 = vunpack.c.l.b16 %v326
      %v521 = vpack.c.b16 %v474, %v473
      %v522 = vpack.c.b16 %v475, %v475
      %v523 = vpack.c.b16 %v477, %v476
      %v524 = vpack.c.b16 %v478, %v478
      %v525 = vpack.c.b16 %v480, %v479
      %v526 = vpack.c.b16 %v481, %v481
      %v527 = vpack.c.b16 %v483, %v482
      %v528 = vpack.c.b16 %v484, %v484
      %v529 = vpack.c.b16 %v486, %v485
      %v530 = vpack.c.b16 %v487, %v487
      %v531 = vpack.c.b16 %v489, %v488
      %v532 = vpack.c.b16 %v490, %v490
      %v533 = vpack.c.b16 %v492, %v491
      %v534 = vpack.c.b16 %v493, %v493
      %v535 = vpack.c.b16 %v495, %v494
      %v536 = vpack.c.b16 %v496, %v496
      %v537 = vpack.c.b16 %v498, %v497
      %v538 = vpack.c.b16 %v499, %v499
      %v539 = vpack.c.b16 %v501, %v500
      %v540 = vpack.c.b16 %v502, %v502
      %v541 = vpack.c.b16 %v504, %v503
      %v542 = vpack.c.b16 %v505, %v505
      %v543 = vpack.c.b16 %v507, %v506
      %v544 = vpack.c.b16 %v508, %v508
      %v545 = vpack.c.b16 %v510, %v509
      %v546 = vpack.c.b16 %v511, %v511
      %v547 = vpack.c.b16 %v513, %v512
      %v548 = vpack.c.b16 %v514, %v514
      %v549 = vpack.c.b16 %v516, %v515
      %v550 = vpack.c.b16 %v517, %v517
      %v551 = vpack.c.b16 %v519, %v518
      %v552 = vpack.c.b16 %v520, %v520
      %v601 = vunpack.c.l.b16 %v328
      %v602 = vunpack.c.l.b16 %v329
      %v603 = vunpack.c.l.b16 %v330
      %v604 = vunpack.c.l.b16 %v331
      %v605 = vunpack.c.l.b16 %v332
      %v606 = vunpack.c.l.b16 %v333
      %v607 = vunpack.c.l.b16 %v334
      %v608 = vunpack.c.l.b16 %v335
      %v609 = vunpack.c.l.b16 %v336
      %v610 = vunpack.c.l.b16 %v337
      %v611 = vunpack.c.l.b16 %v338
      %v612 = vunpack.c.l.b16 %v339
      %v613 = vunpack.c.l.b16 %v340
      %v614 = vunpack.c.l.b16 %v341
      %v615 = vunpack.c.l.b16 %v342
      %v616 = vunpack.c.l.b16 %v343
      %v617 = vunpack.c.l.b16 %v344
      %v618 = vunpack.c.l.b16 %v345
      %v619 = vunpack.c.l.b16 %v346
      %v620 = vunpack.c.l.b16 %v347
      %v621 = vunpack.c.l.b16 %v348
      %v622 = vunpack.c.l.b16 %v349
      %v623 = vunpack.c.l.b16 %v350
      %v624 = vunpack.c.l.b16 %v351
      %v625 = vunpack.c.l.b16 %v352
      %v626 = vunpack.c.l.b16 %v353
      %v627 = vunpack.c.l.b16 %v354
      %v628 = vunpack.c.l.b16 %v355
      %v629 = vunpack.c.l.b16 %v356
      %v630 = vunpack.c.l.b16 %v357
      %v631 = vunpack.c.l.b16 %v358
      %v632 = vunpack.c.l.b16 %v359
      %v633 = vunpack.c.l.b16 %v360
      %v634 = vunpack.c.l.b16 %v361
      %v635 = vunpack.c.l.b16 %v362
      %v636 = vunpack.c.l.b16 %v363
      %v637 = vunpack.c.l.b16 %v364
      %v638 = vunpack.c.l.b16 %v365
      %v639 = vunpack.c.l.b16 %v366
      %v640 = vunpack.c.l.b16 %v367
      %v641 = vunpack.c.l.b16 %v368
      %v642 = vunpack.c.l.b16 %v369
      %v643 = vunpack.c.l.b16 %v370
      %v644 = vunpack.c.l.b16 %v371
      %v645 = vunpack.c.l.b16 %v372
      %v646 = vunpack.c.l.b16 %v373
      %v647 = vunpack.c.l.b16 %v374
      %v648 = vunpack.c.l.b16 %v375
      %v649 = vpack.c.b16 %v602, %v601
      %v650 = vpack.c.b16 %v603, %v603
      %v651 = vpack.c.b16 %v605, %v604
      %v652 = vpack.c.b16 %v606, %v606
      %v653 = vpack.c.b16 %v608, %v607
      %v654 = vpack.c.b16 %v609, %v609
      %v655 = vpack.c.b16 %v611, %v610
      %v656 = vpack.c.b16 %v612, %v612
      %v657 = vpack.c.b16 %v614, %v613
      %v658 = vpack.c.b16 %v615, %v615
      %v659 = vpack.c.b16 %v617, %v616
      %v660 = vpack.c.b16 %v618, %v618
      %v661 = vpack.c.b16 %v620, %v619
      %v662 = vpack.c.b16 %v621, %v621
      %v663 = vpack.c.b16 %v623, %v622
      %v664 = vpack.c.b16 %v624, %v624
      %v665 = vpack.c.b16 %v626, %v625
      %v666 = vpack.c.b16 %v627, %v627
      %v667 = vpack.c.b16 %v629, %v628
      %v668 = vpack.c.b16 %v630, %v630
      %v669 = vpack.c.b16 %v632, %v631
      %v670 = vpack.c.b16 %v633, %v633
      %v671 = vpack.c.b16 %v635, %v634
      %v672 = vpack.c.b16 %v636, %v636
      %v673 = vpack.c.b16 %v638, %v637
      %v674 = vpack.c.b16 %v639, %v639
      %v675 = vpack.c.b16 %v641, %v640
      %v676 = vpack.c.b16 %v642, %v642
      %v677 = vpack.c.b16 %v644, %v643
      %v678 = vpack.c.b16 %v645, %v645
      %v679 = vpack.c.b16 %v647, %v646
      %v680 = vpack.c.b16 %v648, %v648
      %681 = vrot.lane.b32.xlu0 %v649, 20
      %v682 = vpop.permute.xlu0 %681
      %683 = vrot.lane.b32.xlu0 %v650, 20
      %v684 = vpop.permute.xlu0 %683
      %685 = vrot.lane.b32.xlu0 %v651, 20
      %v686 = vpop.permute.xlu0 %685
      %687 = vrot.lane.b32.xlu0 %v652, 20
      %v688 = vpop.permute.xlu0 %687
      %689 = vrot.lane.b32.xlu0 %v653, 20
      %v690 = vpop.permute.xlu0 %689
      %691 = vrot.lane.b32.xlu0 %v654, 20
      %v692 = vpop.permute.xlu0 %691
      %693 = vrot.lane.b32.xlu0 %v655, 20
      %v694 = vpop.permute.xlu0 %693
      %695 = vrot.lane.b32.xlu0 %v656, 20
      %v696 = vpop.permute.xlu0 %695
      %697 = vrot.lane.b32.xlu0 %v657, 20
      %v698 = vpop.permute.xlu0 %697
      %699 = vrot.lane.b32.xlu0 %v658, 20
      %v700 = vpop.permute.xlu0 %699
      %701 = vrot.lane.b32.xlu0 %v659, 20
      %v702 = vpop.permute.xlu0 %701
      %703 = vrot.lane.b32.xlu0 %v660, 20
      %v704 = vpop.permute.xlu0 %703
      %705 = vrot.lane.b32.xlu0 %v661, 20
      %v706 = vpop.permute.xlu0 %705
      %707 = vrot.lane.b32.xlu0 %v662, 20
      %v708 = vpop.permute.xlu0 %707
      %709 = vrot.lane.b32.xlu0 %v663, 20
      %v710 = vpop.permute.xlu0 %709
      %711 = vrot.lane.b32.xlu0 %v664, 20
      %v712 = vpop.permute.xlu0 %711
      %713 = vrot.lane.b32.xlu0 %v665, 20
      %v714 = vpop.permute.xlu0 %713
      %715 = vrot.lane.b32.xlu0 %v666, 20
      %v716 = vpop.permute.xlu0 %715
      %717 = vrot.lane.b32.xlu0 %v667, 20
      %v718 = vpop.permute.xlu0 %717
      %719 = vrot.lane.b32.xlu0 %v668, 20
      %v720 = vpop.permute.xlu0 %719
      %721 = vrot.lane.b32.xlu0 %v669, 20
      %v722 = vpop.permute.xlu0 %721
      %723 = vrot.lane.b32.xlu0 %v670, 20
      %v724 = vpop.permute.xlu0 %723
      %725 = vrot.lane.b32.xlu0 %v671, 20
      %v726 = vpop.permute.xlu0 %725
      %727 = vrot.lane.b32.xlu0 %v672, 20
      %v728 = vpop.permute.xlu0 %727
      %729 = vrot.lane.b32.xlu0 %v673, 20
      %v730 = vpop.permute.xlu0 %729
      %731 = vrot.lane.b32.xlu0 %v674, 20
      %v732 = vpop.permute.xlu0 %731
      %733 = vrot.lane.b32.xlu0 %v675, 20
      %v734 = vpop.permute.xlu0 %733
      %735 = vrot.lane.b32.xlu0 %v676, 20
      %v736 = vpop.permute.xlu0 %735
      %737 = vrot.lane.b32.xlu0 %v677, 20
      %v738 = vpop.permute.xlu0 %737
      %739 = vrot.lane.b32.xlu0 %v678, 20
      %v740 = vpop.permute.xlu0 %739
      %741 = vrot.lane.b32.xlu0 %v679, 20
      %v742 = vpop.permute.xlu0 %741
      %743 = vrot.lane.b32.xlu0 %v680, 20
      %v744 = vpop.permute.xlu0 %743
      %v793 = vunpack.c.l.b16 %v377
      %v794 = vunpack.c.l.b16 %v378
      %v795 = vunpack.c.l.b16 %v379
      %v796 = vunpack.c.l.b16 %v380
      %v797 = vunpack.c.l.b16 %v381
      %v798 = vunpack.c.l.b16 %v382
      %v799 = vunpack.c.l.b16 %v383
      %v800 = vunpack.c.l.b16 %v384
      %v801 = vunpack.c.l.b16 %v385
      %v802 = vunpack.c.l.b16 %v386
      %v803 = vunpack.c.l.b16 %v387
      %v804 = vunpack.c.l.b16 %v388
      %v805 = vunpack.c.l.b16 %v389
      %v806 = vunpack.c.l.b16 %v390
      %v807 = vunpack.c.l.b16 %v391
      %v808 = vunpack.c.l.b16 %v392
      %v809 = vunpack.c.l.b16 %v393
      %v810 = vunpack.c.l.b16 %v394
      %v811 = vunpack.c.l.b16 %v395
      %v812 = vunpack.c.l.b16 %v396
      %v813 = vunpack.c.l.b16 %v397
      %v814 = vunpack.c.l.b16 %v398
      %v815 = vunpack.c.l.b16 %v399
      %v816 = vunpack.c.l.b16 %v400
      %v817 = vunpack.c.l.b16 %v401
      %v818 = vunpack.c.l.b16 %v402
      %v819 = vunpack.c.l.b16 %v403
      %v820 = vunpack.c.l.b16 %v404
      %v821 = vunpack.c.l.b16 %v405
      %v822 = vunpack.c.l.b16 %v406
      %v823 = vunpack.c.l.b16 %v407
      %v824 = vunpack.c.l.b16 %v408
      %v825 = vunpack.c.l.b16 %v409
      %v826 = vunpack.c.l.b16 %v410
      %v827 = vunpack.c.l.b16 %v411
      %v828 = vunpack.c.l.b16 %v412
      %v829 = vunpack.c.l.b16 %v413
      %v830 = vunpack.c.l.b16 %v414
      %v831 = vunpack.c.l.b16 %v415
      %v832 = vunpack.c.l.b16 %v416
      %v833 = vunpack.c.l.b16 %v417
      %v834 = vunpack.c.l.b16 %v418
      %v835 = vunpack.c.l.b16 %v419
      %v836 = vunpack.c.l.b16 %v420
      %v837 = vunpack.c.l.b16 %v421
      %v838 = vunpack.c.l.b16 %v422
      %v839 = vunpack.c.l.b16 %v423
      %v840 = vunpack.c.l.b16 %v424
      %v841 = vpack.c.b16 %v794, %v793
      %v842 = vpack.c.b16 %v795, %v795
      %v843 = vpack.c.b16 %v797, %v796
      %v844 = vpack.c.b16 %v798, %v798
      %v845 = vpack.c.b16 %v800, %v799
      %v846 = vpack.c.b16 %v801, %v801
      %v847 = vpack.c.b16 %v803, %v802
      %v848 = vpack.c.b16 %v804, %v804
      %v849 = vpack.c.b16 %v806, %v805
      %v850 = vpack.c.b16 %v807, %v807
      %v851 = vpack.c.b16 %v809, %v808
      %v852 = vpack.c.b16 %v810, %v810
      %v853 = vpack.c.b16 %v812, %v811
      %v854 = vpack.c.b16 %v813, %v813
      %v855 = vpack.c.b16 %v815, %v814
      %v856 = vpack.c.b16 %v816, %v816
      %v857 = vpack.c.b16 %v818, %v817
      %v858 = vpack.c.b16 %v819, %v819
      %v859 = vpack.c.b16 %v821, %v820
      %v860 = vpack.c.b16 %v822, %v822
      %v861 = vpack.c.b16 %v824, %v823
      %v862 = vpack.c.b16 %v825, %v825
      %v863 = vpack.c.b16 %v827, %v826
      %v864 = vpack.c.b16 %v828, %v828
      %v865 = vpack.c.b16 %v830, %v829
      %v866 = vpack.c.b16 %v831, %v831
      %v867 = vpack.c.b16 %v833, %v832
      %v868 = vpack.c.b16 %v834, %v834
      %v869 = vpack.c.b16 %v836, %v835
      %v870 = vpack.c.b16 %v837, %v837
      %v871 = vpack.c.b16 %v839, %v838
      %v872 = vpack.c.b16 %v840, %v840
      %873 = vrot.lane.b32.xlu0 %v841, 40
      %v874 = vpop.permute.xlu0 %873
      %875 = vrot.lane.b32.xlu0 %v842, 40
      %v876 = vpop.permute.xlu0 %875
      %877 = vrot.lane.b32.xlu0 %v843, 40
      %v878 = vpop.permute.xlu0 %877
      %879 = vrot.lane.b32.xlu0 %v844, 40
      %v880 = vpop.permute.xlu0 %879
      %881 = vrot.lane.b32.xlu0 %v845, 40
      %v882 = vpop.permute.xlu0 %881
      %883 = vrot.lane.b32.xlu0 %v846, 40
      %v884 = vpop.permute.xlu0 %883
      %885 = vrot.lane.b32.xlu0 %v847, 40
      %v886 = vpop.permute.xlu0 %885
      %887 = vrot.lane.b32.xlu0 %v848, 40
      %v888 = vpop.permute.xlu0 %887
      %889 = vrot.lane.b32.xlu0 %v849, 40
      %v890 = vpop.permute.xlu0 %889
      %891 = vrot.lane.b32.xlu0 %v850, 40
      %v892 = vpop.permute.xlu0 %891
      %893 = vrot.lane.b32.xlu0 %v851, 40
      %v894 = vpop.permute.xlu0 %893
      %895 = vrot.lane.b32.xlu0 %v852, 40
      %v896 = vpop.permute.xlu0 %895
      %897 = vrot.lane.b32.xlu0 %v853, 40
      %v898 = vpop.permute.xlu0 %897
      %899 = vrot.lane.b32.xlu0 %v854, 40
      %v900 = vpop.permute.xlu0 %899
      %901 = vrot.lane.b32.xlu0 %v855, 40
      %v902 = vpop.permute.xlu0 %901
      %903 = vrot.lane.b32.xlu0 %v856, 40
      %v904 = vpop.permute.xlu0 %903
      %905 = vrot.lane.b32.xlu0 %v857, 40
      %v906 = vpop.permute.xlu0 %905
      %907 = vrot.lane.b32.xlu0 %v858, 40
      %v908 = vpop.permute.xlu0 %907
      %909 = vrot.lane.b32.xlu0 %v859, 40
      %v910 = vpop.permute.xlu0 %909
      %911 = vrot.lane.b32.xlu0 %v860, 40
      %v912 = vpop.permute.xlu0 %911
      %913 = vrot.lane.b32.xlu0 %v861, 40
      %v914 = vpop.permute.xlu0 %913
      %915 = vrot.lane.b32.xlu0 %v862, 40
      %v916 = vpop.permute.xlu0 %915
      %917 = vrot.lane.b32.xlu0 %v863, 40
      %v918 = vpop.permute.xlu0 %917
      %919 = vrot.lane.b32.xlu0 %v864, 40
      %v920 = vpop.permute.xlu0 %919
      %921 = vrot.lane.b32.xlu0 %v865, 40
      %v922 = vpop.permute.xlu0 %921
      %923 = vrot.lane.b32.xlu0 %v866, 40
      %v924 = vpop.permute.xlu0 %923
      %925 = vrot.lane.b32.xlu0 %v867, 40
      %v926 = vpop.permute.xlu0 %925
      %927 = vrot.lane.b32.xlu0 %v868, 40
      %v928 = vpop.permute.xlu0 %927
      %929 = vrot.lane.b32.xlu0 %v869, 40
      %v930 = vpop.permute.xlu0 %929
      %931 = vrot.lane.b32.xlu0 %v870, 40
      %v932 = vpop.permute.xlu0 %931
      %933 = vrot.lane.b32.xlu0 %v871, 40
      %v934 = vpop.permute.xlu0 %933
      %935 = vrot.lane.b32.xlu0 %v872, 40
      %v936 = vpop.permute.xlu0 %935
      %vm937 = vcmask 162816
      %v940 = vsel %vm937, %v521, %v682
      %v943 = vsel %vm937, %v522, %v684
      %v946 = vsel %vm937, %v523, %v686
      %v949 = vsel %vm937, %v524, %v688
      %v952 = vsel %vm937, %v525, %v690
      %v955 = vsel %vm937, %v526, %v692
      %v958 = vsel %vm937, %v527, %v694
      %v961 = vsel %vm937, %v528, %v696
      %v964 = vsel %vm937, %v529, %v698
      %v967 = vsel %vm937, %v530, %v700
      %v970 = vsel %vm937, %v531, %v702
      %v973 = vsel %vm937, %v532, %v704
      %v976 = vsel %vm937, %v533, %v706
      %v979 = vsel %vm937, %v534, %v708
      %v982 = vsel %vm937, %v535, %v710
      %v985 = vsel %vm937, %v536, %v712
      %v988 = vsel %vm937, %v537, %v714
      %v991 = vsel %vm937, %v538, %v716
      %v994 = vsel %vm937, %v539, %v718
      %v997 = vsel %vm937, %v540, %v720
      %v1000 = vsel %vm937, %v541, %v722
      %v1003 = vsel %vm937, %v542, %v724
      %v1006 = vsel %vm937, %v543, %v726
      %v1009 = vsel %vm937, %v544, %v728
      %v1012 = vsel %vm937, %v545, %v730
      %v1015 = vsel %vm937, %v546, %v732
      %v1018 = vsel %vm937, %v547, %v734
      %v1021 = vsel %vm937, %v548, %v736
      %v1024 = vsel %vm937, %v549, %v738
      %v1027 = vsel %vm937, %v550, %v740
      %v1030 = vsel %vm937, %v551, %v742
      %v1033 = vsel %vm937, %v552, %v744
      %vm1034 = vcmask 326656
      %v1036 = vsel %vm1034, %v940, %v874
      %v1038 = vsel %vm1034, %v943, %v876
      %v1040 = vsel %vm1034, %v946, %v878
      %v1042 = vsel %vm1034, %v949, %v880
      %v1044 = vsel %vm1034, %v952, %v882
      %v1046 = vsel %vm1034, %v955, %v884
      %v1048 = vsel %vm1034, %v958, %v886
      %v1050 = vsel %vm1034, %v961, %v888
      %v1052 = vsel %vm1034, %v964, %v890
      %v1054 = vsel %vm1034, %v967, %v892
      %v1056 = vsel %vm1034, %v970, %v894
      %v1058 = vsel %vm1034, %v973, %v896
      %v1060 = vsel %vm1034, %v976, %v898
      %v1062 = vsel %vm1034, %v979, %v900
      %v1064 = vsel %vm1034, %v982, %v902
      %v1066 = vsel %vm1034, %v985, %v904
      %v1068 = vsel %vm1034, %v988, %v906
      %v1070 = vsel %vm1034, %v991, %v908
      %v1072 = vsel %vm1034, %v994, %v910
      %v1074 = vsel %vm1034, %v997, %v912
      %v1076 = vsel %vm1034, %v1000, %v914
      %v1078 = vsel %vm1034, %v1003, %v916
      %v1080 = vsel %vm1034, %v1006, %v918
      %v1082 = vsel %vm1034, %v1009, %v920
      %v1084 = vsel %vm1034, %v1012, %v922
      %v1086 = vsel %vm1034, %v1015, %v924
      %v1088 = vsel %vm1034, %v1018, %v926
      %v1090 = vsel %vm1034, %v1021, %v928
      %v1092 = vsel %vm1034, %v1024, %v930
      %v1094 = vsel %vm1034, %v1027, %v932
      %v1096 = vsel %vm1034, %v1030, %v934
      %v1098 = vsel %vm1034, %v1033, %v936
      %v1131 = vunpack.c.l.b16 %v1036
      %v1132 = vunpack.c.h.b16 %v1036
      %v1133 = vunpack.c.l.b16 %v1038
      %v1134 = vunpack.c.l.b16 %v1040
      %v1135 = vunpack.c.h.b16 %v1040
      %v1136 = vunpack.c.l.b16 %v1042
      %v1137 = vunpack.c.l.b16 %v1044
      %v1138 = vunpack.c.h.b16 %v1044
      %v1139 = vunpack.c.l.b16 %v1046
      %v1140 = vunpack.c.l.b16 %v1048
      %v1141 = vunpack.c.h.b16 %v1048
      %v1142 = vunpack.c.l.b16 %v1050
      %v1143 = vunpack.c.l.b16 %v1052
      %v1144 = vunpack.c.h.b16 %v1052
      %v1145 = vunpack.c.l.b16 %v1054
      %v1146 = vunpack.c.l.b16 %v1056
      %v1147 = vunpack.c.h.b16 %v1056
      %v1148 = vunpack.c.l.b16 %v1058
      %v1149 = vunpack.c.l.b16 %v1060
      %v1150 = vunpack.c.h.b16 %v1060
      %v1151 = vunpack.c.l.b16 %v1062
      %v1152 = vunpack.c.l.b16 %v1064
      %v1153 = vunpack.c.h.b16 %v1064
      %v1154 = vunpack.c.l.b16 %v1066
      %v1155 = vunpack.c.l.b16 %v1068
      %v1156 = vunpack.c.h.b16 %v1068
      %v1157 = vunpack.c.l.b16 %v1070
      %v1158 = vunpack.c.l.b16 %v1072
      %v1159 = vunpack.c.h.b16 %v1072
      %v1160 = vunpack.c.l.b16 %v1074
      %v1161 = vunpack.c.l.b16 %v1076
      %v1162 = vunpack.c.h.b16 %v1076
      %v1163 = vunpack.c.l.b16 %v1078
      %v1164 = vunpack.c.l.b16 %v1080
      %v1165 = vunpack.c.h.b16 %v1080
      %v1166 = vunpack.c.l.b16 %v1082
      %v1167 = vunpack.c.l.b16 %v1084
      %v1168 = vunpack.c.h.b16 %v1084
      %v1169 = vunpack.c.l.b16 %v1086
      %v1170 = vunpack.c.l.b16 %v1088
      %v1171 = vunpack.c.h.b16 %v1088
      %v1172 = vunpack.c.l.b16 %v1090
      %v1173 = vunpack.c.l.b16 %v1092
      %v1174 = vunpack.c.h.b16 %v1092
      %v1175 = vunpack.c.l.b16 %v1094
      %v1176 = vunpack.c.l.b16 %v1096
      %v1177 = vunpack.c.h.b16 %v1096
      %v1178 = vunpack.c.l.b16 %v1098
      %v1179 = vld [vmem:[%s210] sm:$0xf]
      %v1180 = vld [vmem:[%s210 + $0x4] sm:$0xf]
      %v1181 = vld [vmem:[%s210 + $0x8] sm:$0xf]
      %v1182 = vld [vmem:[%s210 + $0xc] sm:$0xf]
      %v1183 = vld [vmem:[%s210 + $0x10] sm:$0xf]
      %v1184 = vld [vmem:[%s210 + $0x14] sm:$0xf]
      %v1185 = vld [vmem:[%s210 + $0x18] sm:$0xf]
      %v1186 = vld [vmem:[%s210 + $0x1c] sm:$0x3]
      %v1187 = vpack.c.b16 %v1132, %v1131
      %v1188 = vpack.c.b16 %v1134, %v1133
      %v1189 = vpack.c.b16 %v1136, %v1135
      %v1190 = vpack.c.b16 %v1138, %v1137
      %v1191 = vpack.c.b16 %v1140, %v1139
      %v1192 = vpack.c.b16 %v1142, %v1141
      %v1193 = vpack.c.b16 %v1144, %v1143
      %v1194 = vpack.c.b16 %v1146, %v1145
      %v1195 = vpack.c.b16 %v1148, %v1147
      %v1196 = vpack.c.b16 %v1150, %v1149
      %v1197 = vpack.c.b16 %v1152, %v1151
      %v1198 = vpack.c.b16 %v1154, %v1153
      %v1199 = vpack.c.b16 %v1156, %v1155
      %v1200 = vpack.c.b16 %v1158, %v1157
      %v1201 = vpack.c.b16 %v1160, %v1159
      %v1202 = vpack.c.b16 %v1162, %v1161
      %v1203 = vpack.c.b16 %v1164, %v1163
      %v1204 = vpack.c.b16 %v1166, %v1165
      %v1205 = vpack.c.b16 %v1168, %v1167
      %v1206 = vpack.c.b16 %v1170, %v1169
      %v1207 = vpack.c.b16 %v1172, %v1171
      %v1208 = vpack.c.b16 %v1174, %v1173
      %v1209 = vpack.c.b16 %v1176, %v1175
      %v1210 = vpack.c.b16 %v1178, %v1177
      %v1219 = vunpack.c.l.b16 %v1179
      %v1220 = vunpack.c.l.b16 %v1180
      %v1221 = vunpack.c.l.b16 %v1181
      %v1222 = vunpack.c.l.b16 %v1182
      %v1223 = vunpack.c.l.b16 %v1183
      %v1224 = vunpack.c.l.b16 %v1184
      %v1225 = vunpack.c.l.b16 %v1185
      %v1226 = vunpack.c.l.b16 %v1186
      %v1227 = vpack.c.b16 %v1220, %v1219
      %v1228 = vpack.c.b16 %v1222, %v1221
      %v1229 = vpack.c.b16 %v1224, %v1223
      %v1230 = vpack.c.b16 %v1226, %v1225
      %vm1234 = vcmask 490496
      %v1236 = vsel %vm1234, %v1187, 0
      %v1239 = vsel %vm1234, %v1188, 0
      %v1242 = vsel %vm1234, %v1189, 0
      %v1245 = vsel %vm1234, %v1190, 0
      %v1248 = vsel %vm1234, %v1191, 0
      %v1251 = vsel %vm1234, %v1192, 0
      %v1254 = vsel %vm1234, %v1193, 0
      %v1257 = vsel %vm1234, %v1194, 0
      %v1260 = vsel %vm1234, %v1195, 0
      %v1263 = vsel %vm1234, %v1196, 0
      %v1266 = vsel %vm1234, %v1197, 0
      %v1269 = vsel %vm1234, %v1198, 0
      %v1272 = vsel %vm1234, %v1199, 0
      %v1275 = vsel %vm1234, %v1200, 0
      %v1278 = vsel %vm1234, %v1201, 0
      %v1281 = vsel %vm1234, %v1202, 0
      %v1284 = vsel %vm1234, %v1203, 0
      %v1287 = vsel %vm1234, %v1204, 0
      %v1290 = vsel %vm1234, %v1205, 0
      %v1293 = vsel %vm1234, %v1206, 0
      %v1296 = vsel %vm1234, %v1207, 0
      %v1299 = vsel %vm1234, %v1208, 0
      %v1302 = vsel %vm1234, %v1209, 0
      %v1305 = vsel %vm1234, %v1210, 0
      %vm1307 = vcmask 1045504
      %v1309 = vsel %vm1307, %v1230, 0
      %1311 = vmatprep.subr.bf16.mxu0 0
      %1312 = vmatpush1.bf16.msra.mxu0 %v1227
      %1313 = vmatprep.subr.bf16.mxu0 0
      %1314 = vmatpush1.bf16.msra.mxu0 %v1228
      %1315 = vmatprep.subr.bf16.mxu0 0
      %1316 = vmatpush1.bf16.msra.mxu0 %v1229
      %1317 = vmatprep.subr.bf16.mxu0 0
      %1318 = vmatpush1.bf16.msra.mxu0 %v1309
      %1319 = vmatprep.subr.bf16.mxu0 0
      %1320 = vmatpush1.bf16.msra.mxu0 0
      %1321 = vmatprep.subr.bf16.mxu0 0
      %1322 = vmatpush1.bf16.msra.mxu0 0
      %1323 = vmatprep.subr.bf16.mxu0 0
      %1324 = vmatpush1.bf16.msra.mxu0 0
      %1325 = vmatprep.subr.bf16.mxu0 0
      %1326 = vmatpush1.bf16.msra.mxu0 0
      %1327 = vmatprep.subr.bf16.mxu0 0
      %1328 = vmatpush1.bf16.msra.mxu0 0
      %1329 = vmatprep.subr.bf16.mxu0 0
      %1330 = vmatpush1.bf16.msra.mxu0 0
      %1331 = vmatprep.subr.bf16.mxu0 0
      %1332 = vmatpush1.bf16.msra.mxu0 0
      %1333 = vmatprep.subr.bf16.mxu0 0
      %1334 = vmatpush1.bf16.msra.mxu0 0
      %1335 = vmatprep.subr.bf16.mxu0 0
      %1336 = vmatpush1.bf16.msra.mxu0 0
      %1337 = vmatprep.subr.bf16.mxu0 0
      %1338 = vmatpush1.bf16.msra.mxu0 0
      %1339 = vmatprep.subr.bf16.mxu0 0
      %1340 = vmatpush1.bf16.msra.mxu0 0
      %1341 = vmatprep.subr.bf16.mxu0 0
      %1342 = vmatpush1.bf16.msra.mxu0 0
      %1343 = vmatprep.mubr.bf16.mxu0 0
      %1344 = vmatmul.mubr.bf16.gmra.mrb[0].mxu0 %v1236
      %v1345 = vpop.f32.mrb[0].mxu0
      %v1346 = vadd.f32 0.0, %v1345
      %v1347 = vpop.f32.mrb[0].mxu0
      %v1348 = vpop.f32.mrb[0].mxu0
      %v1349 = vadd.f32 0.0, %v1348
      %v1350 = vpop.f32.mrb[0].mxu0
      %1351 = vmatprep.mubr.bf16.mxu0 0
      %1352 = vmatmul.mubr.bf16.gmra.mrb[0].mxu0 %v1239
      %v1353 = vpop.f32.mrb[0].mxu0
      %v1354 = vpop.f32.mrb[0].mxu0
      %v1355 = vpop.f32.mrb[0].mxu0
      %v1356 = vadd.f32 0.0, %v1355
      %v1357 = vpop.f32.mrb[0].mxu0
      %1358 = vmatprep.mubr.bf16.mxu0 0
      %1359 = vmatmul.mubr.bf16.gmra.mrb[0].mxu0 %v1242
      %v1360 = vpop.f32.mrb[0].mxu0
      %v1361 = vadd.f32 0.0, %v1360
      %v1362 = vpop.f32.mrb[0].mxu0
      %v1363 = vpop.f32.mrb[0].mxu0
      %v1364 = vpop.f32.mrb[0].mxu0
      %1365 = vmatprep.mubr.bf16.mxu0 0
      %1366 = vmatmul.mubr.bf16.gmra.mrb[0].mxu0 %v1245
      %v1367 = vpop.f32.mrb[0].mxu0
      %v1368 = vadd.f32 0.0, %v1367
      %v1369 = vpop.f32.mrb[0].mxu0
      %v1370 = vpop.f32.mrb[0].mxu0
      %v1371 = vadd.f32 0.0, %v1370
      %v1372 = vpop.f32.mrb[0].mxu0
      %1373 = vmatprep.mubr.bf16.mxu0 0
      %1374 = vmatmul.mubr.bf16.gmra.mrb[0].mxu0 %v1248
      %v1375 = vpop.f32.mrb[0].mxu0
      %v1376 = vpop.f32.mrb[0].mxu0
      %v1377 = vpop.f32.mrb[0].mxu0
      %v1378 = vadd.f32 0.0, %v1377
      %v1379 = vpop.f32.mrb[0].mxu0
      %1380 = vmatprep.mubr.bf16.mxu0 0
      %1381 = vmatmul.mubr.bf16.gmra.mrb[0].mxu0 %v1251
      %v1382 = vpop.f32.mrb[0].mxu0
      %v1383 = vadd.f32 0.0, %v1382
      %v1384 = vpop.f32.mrb[0].mxu0
      %v1385 = vpop.f32.mrb[0].mxu0
      %v1386 = vpop.f32.mrb[0].mxu0
      %1387 = vmatprep.mubr.bf16.mxu0 0
      %1388 = vmatmul.mubr.bf16.gmra.mrb[0].mxu0 %v1254
      %v1389 = vpop.f32.mrb[0].mxu0
      %v1390 = vadd.f32 0.0, %v1389
      %v1391 = vpop.f32.mrb[0].mxu0
      %v1392 = vpop.f32.mrb[0].mxu0
      %v1393 = vadd.f32 0.0, %v1392
      %v1394 = vpop.f32.mrb[0].mxu0
      %1395 = vmatprep.mubr.bf16.mxu0 0
      %1396 = vmatmul.mubr.bf16.gmra.mrb[0].mxu0 %v1257
      %v1397 = vpop.f32.mrb[0].mxu0
      %v1398 = vpop.f32.mrb[0].mxu0
      %v1399 = vpop.f32.mrb[0].mxu0
      %v1400 = vadd.f32 0.0, %v1399
      %v1401 = vpop.f32.mrb[0].mxu0
      %1402 = vmatprep.mubr.bf16.mxu0 0
      %1403 = vmatmul.mubr.bf16.gmra.mrb[0].mxu0 %v1260
      %v1404 = vpop.f32.mrb[0].mxu0
      %v1405 = vadd.f32 0.0, %v1404
      %v1406 = vpop.f32.mrb[0].mxu0
      %v1407 = vpop.f32.mrb[0].mxu0
      %v1408 = vpop.f32.mrb[0].mxu0
      %1409 = vmatprep.mubr.bf16.mxu0 0
      %1410 = vmatmul.mubr.bf16.gmra.mrb[0].mxu0 %v1263
      %v1411 = vpop.f32.mrb[0].mxu0
      %v1412 = vadd.f32 0.0, %v1411
      %v1413 = vpop.f32.mrb[0].mxu0
      %v1414 = vpop.f32.mrb[0].mxu0
      %v1415 = vadd.f32 0.0, %v1414
      %v1416 = vpop.f32.mrb[0].mxu0
      %1417 = vmatprep.mubr.bf16.mxu0 0
      %1418 = vmatmul.mubr.bf16.gmra.mrb[0].mxu0 %v1266
      %v1419 = vpop.f32.mrb[0].mxu0
      %v1420 = vpop.f32.mrb[0].mxu0
      %v1421 = vpop.f32.mrb[0].mxu0
      %v1422 = vadd.f32 0.0, %v1421
      %v1423 = vpop.f32.mrb[0].mxu0
      %1424 = vmatprep.mubr.bf16.mxu0 0
      %1425 = vmatmul.mubr.bf16.gmra.mrb[0].mxu0 %v1269
      %v1426 = vpop.f32.mrb[0].mxu0
      %v1427 = vadd.f32 0.0, %v1426
      %v1428 = vpop.f32.mrb[0].mxu0
      %v1429 = vpop.f32.mrb[0].mxu0
      %v1430 = vpop.f32.mrb[0].mxu0
      %1431 = vmatprep.mubr.bf16.mxu0 0
      %1432 = vmatmul.mubr.bf16.gmra.mrb[0].mxu0 %v1272
      %v1433 = vpop.f32.mrb[0].mxu0
      %v1434 = vadd.f32 0.0, %v1433
      %v1435 = vpop.f32.mrb[0].mxu0
      %v1436 = vpop.f32.mrb[0].mxu0
      %v1437 = vadd.f32 0.0, %v1436
      %v1438 = vpop.f32.mrb[0].mxu0
      %1439 = vmatprep.mubr.bf16.mxu0 0
      %1440 = vmatmul.mubr.bf16.gmra.mrb[0].mxu0 %v1275
      %v1441 = vpop.f32.mrb[0].mxu0
      %v1442 = vpop.f32.mrb[0].mxu0
      %v1443 = vpop.f32.mrb[0].mxu0
      %v1444 = vadd.f32 0.0, %v1443
      %v1445 = vpop.f32.mrb[0].mxu0
      %1446 = vmatprep.mubr.bf16.mxu0 0
      %1447 = vmatmul.mubr.bf16.gmra.mrb[0].mxu0 %v1278
      %v1448 = vpop.f32.mrb[0].mxu0
      %v1449 = vadd.f32 0.0, %v1448
      %v1450 = vpop.f32.mrb[0].mxu0
      %v1451 = vpop.f32.mrb[0].mxu0
      %v1452 = vpop.f32.mrb[0].mxu0
      %1453 = vmatprep.mubr.bf16.mxu0 0
      %1454 = vmatmul.mubr.bf16.gmra.mrb[0].mxu0 %v1281
      %v1455 = vpop.f32.mrb[0].mxu0
      %v1456 = vadd.f32 0.0, %v1455
      %v1457 = vpop.f32.mrb[0].mxu0
      %v1458 = vpop.f32.mrb[0].mxu0
      %v1459 = vadd.f32 0.0, %v1458
      %v1460 = vpop.f32.mrb[0].mxu0
      %1461 = vmatprep.mubr.bf16.mxu0 0
      %1462 = vmatmul.mubr.bf16.gmra.mrb[0].mxu0 %v1284
      %v1463 = vpop.f32.mrb[0].mxu0
      %v1464 = vpop.f32.mrb[0].mxu0
      %v1465 = vpop.f32.mrb[0].mxu0
      %v1466 = vadd.f32 0.0, %v1465
      %v1467 = vpop.f32.mrb[0].mxu0
      %1468 = vmatprep.mubr.bf16.mxu0 0
      %1469 = vmatmul.mubr.bf16.gmra.mrb[0].mxu0 %v1287
      %v1470 = vpop.f32.mrb[0].mxu0
      %v1471 = vadd.f32 0.0, %v1470
      %v1472 = vpop.f32.mrb[0].mxu0
      %v1473 = vpop.f32.mrb[0].mxu0
      %v1474 = vpop.f32.mrb[0].mxu0
      %1475 = vmatprep.mubr.bf16.mxu0 0
      %1476 = vmatmul.mubr.bf16.gmra.mrb[0].mxu0 %v1290
      %v1477 = vpop.f32.mrb[0].mxu0
      %v1478 = vadd.f32 0.0, %v1477
      %v1479 = vpop.f32.mrb[0].mxu0
      %v1480 = vpop.f32.mrb[0].mxu0
      %v1481 = vadd.f32 0.0, %v1480
      %v1482 = vpop.f32.mrb[0].mxu0
      %1483 = vmatprep.mubr.bf16.mxu0 0
      %1484 = vmatmul.mubr.bf16.gmra.mrb[0].mxu0 %v1293
      %v1485 = vpop.f32.mrb[0].mxu0
      %v1486 = vpop.f32.mrb[0].mxu0
      %v1487 = vpop.f32.mrb[0].mxu0
      %v1488 = vadd.f32 0.0, %v1487
      %v1489 = vpop.f32.mrb[0].mxu0
      %1490 = vmatprep.mubr.bf16.mxu0 0
      %1491 = vmatmul.mubr.bf16.gmra.mrb[0].mxu0 %v1296
      %v1492 = vpop.f32.mrb[0].mxu0
      %v1493 = vadd.f32 0.0, %v1492
      %v1494 = vpop.f32.mrb[0].mxu0
      %v1495 = vpop.f32.mrb[0].mxu0
      %v1496 = vpop.f32.mrb[0].mxu0
      %1497 = vmatprep.mubr.bf16.mxu0 0
      %1498 = vmatmul.mubr.bf16.gmra.mrb[0].mxu0 %v1299
      %v1499 = vpop.f32.mrb[0].mxu0
      %v1500 = vadd.f32 0.0, %v1499
      %v1501 = vpop.f32.mrb[0].mxu0
      %v1502 = vpop.f32.mrb[0].mxu0
      %v1503 = vadd.f32 0.0, %v1502
      %v1504 = vpop.f32.mrb[0].mxu0
      %1505 = vmatprep.mubr.bf16.mxu0 0
      %1506 = vmatmul.mubr.bf16.gmra.mrb[0].mxu0 %v1302
      %v1507 = vpop.f32.mrb[0].mxu0
      %v1508 = vpop.f32.mrb[0].mxu0
      %v1509 = vpop.f32.mrb[0].mxu0
      %v1510 = vadd.f32 0.0, %v1509
      %v1511 = vpop.f32.mrb[0].mxu0
      %1512 = vmatprep.mubr.bf16.mxu0 0
      %1513 = vmatmul.mubr.bf16.gmra.mrb[0].mxu0 %v1305
      %v1514 = vpop.f32.mrb[0].mxu0
      %v1515 = vadd.f32 0.0, %v1514
      %v1516 = vpop.f32.mrb[0].mxu0
      %v1517 = vpop.f32.mrb[0].mxu0
      %v1518 = vpop.f32.mrb[0].mxu0
      %1519 = vdwg.mxu0
      %s1520 = scalar_lea.vmem %s210, 32
      %v1521 = vld [vmem:[%s1520] sm:$0xf]
      %v1522 = vld [vmem:[%s1520 + $0x4] sm:$0xf]
      %v1523 = vld [vmem:[%s1520 + $0x8] sm:$0xf]
      %v1524 = vld [vmem:[%s1520 + $0xc] sm:$0xf]
      %v1525 = vld [vmem:[%s1520 + $0x10] sm:$0xf]
      %v1526 = vld [vmem:[%s1520 + $0x14] sm:$0xf]
      %v1527 = vld [vmem:[%s1520 + $0x18] sm:$0xf]
      %v1528 = vld [vmem:[%s1520 + $0x1c] sm:$0x3]
      %v1537 = vunpack.c.l.b16 %v1521
      %v1538 = vunpack.c.l.b16 %v1522
      %v1539 = vunpack.c.l.b16 %v1523
      %v1540 = vunpack.c.l.b16 %v1524
      %v1541 = vunpack.c.l.b16 %v1525
      %v1542 = vunpack.c.l.b16 %v1526
      %v1543 = vunpack.c.l.b16 %v1527
      %v1544 = vunpack.c.l.b16 %v1528
      %v1545 = vpack.c.b16 %v1538, %v1537
      %v1546 = vpack.c.b16 %v1540, %v1539
      %v1547 = vpack.c.b16 %v1542, %v1541
      %v1548 = vpack.c.b16 %v1544, %v1543
      %v1553 = vsel %vm1307, %v1548, 0
      %1555 = vmatprep.subr.bf16.mxu0 0
      %1556 = vmatpush1.bf16.msra.mxu0 %v1545
      %1557 = vmatprep.subr.bf16.mxu0 0
      %1558 = vmatpush1.bf16.msra.mxu0 %v1546
      %1559 = vmatprep.subr.bf16.mxu0 0
      %1560 = vmatpush1.bf16.msra.mxu0 %v1547
      %1561 = vmatprep.subr.bf16.mxu0 0
      %1562 = vmatpush1.bf16.msra.mxu0 %v1553
      %1563 = vmatprep.subr.bf16.mxu0 0
      %1564 = vmatpush1.bf16.msra.mxu0 0
      %1565 = vmatprep.subr.bf16.mxu0 0
      %1566 = vmatpush1.bf16.msra.mxu0 0
      %1567 = vmatprep.subr.bf16.mxu0 0
      %1568 = vmatpush1.bf16.msra.mxu0 0
      %1569 = vmatprep.subr.bf16.mxu0 0
      %1570 = vmatpush1.bf16.msra.mxu0 0
      %1571 = vmatprep.subr.bf16.mxu0 0
      %1572 = vmatpush1.bf16.msra.mxu0 0
      %1573 = vmatprep.subr.bf16.mxu0 0
      %1574 = vmatpush1.bf16.msra.mxu0 0
      %1575 = vmatprep.subr.bf16.mxu0 0
      %1576 = vmatpush1.bf16.msra.mxu0 0
      %1577 = vmatprep.subr.bf16.mxu0 0
      %1578 = vmatpush1.bf16.msra.mxu0 0
      %1579 = vmatprep.subr.bf16.mxu0 0
      %1580 = vmatpush1.bf16.msra.mxu0 0
      %1581 = vmatprep.subr.bf16.mxu0 0
      %1582 = vmatpush1.bf16.msra.mxu0 0
      %1583 = vmatprep.subr.bf16.mxu0 0
      %1584 = vmatpush1.bf16.msra.mxu0 0
      %1585 = vmatprep.subr.bf16.mxu0 0
      %1586 = vmatpush1.bf16.msra.mxu0 0
      %1587 = vmatprep.mubr.bf16.mxu0 0
      %1588 = vmatmul.mubr.bf16.gmra.mrb[0].mxu0 %v1236
      %v1589 = vpop.f32.mrb[0].mxu0
      %v1590 = vadd.f32 0.0, %v1589
      %v1591 = vpop.f32.mrb[0].mxu0
      %v1592 = vpop.f32.mrb[0].mxu0
      %v1593 = vadd.f32 0.0, %v1592
      %v1594 = vpop.f32.mrb[0].mxu0
      %1595 = vmatprep.mubr.bf16.mxu0 0
      %1596 = vmatmul.mubr.bf16.gmra.mrb[0].mxu0 %v1239
      %v1597 = vpop.f32.mrb[0].mxu0
      %v1598 = vadd.f32 0.0, %v1597
      %v1599 = vpop.f32.mrb[0].mxu0
      %v1600 = vpop.f32.mrb[0].mxu0
      %v1601 = vadd.f32 0.0, %v1600
      %v1602 = vpop.f32.mrb[0].mxu0
      %1603 = vmatprep.mubr.bf16.mxu0 0
      %1604 = vmatmul.mubr.bf16.gmra.mrb[0].mxu0 %v1242
      %v1605 = vpop.f32.mrb[0].mxu0
      %v1606 = vadd.f32 0.0, %v1605
      %v1607 = vpop.f32.mrb[0].mxu0
      %v1608 = vpop.f32.mrb[0].mxu0
      %v1609 = vadd.f32 0.0, %v1608
      %v1610 = vpop.f32.mrb[0].mxu0
      %1611 = vmatprep.mubr.bf16.mxu0 0
      %1612 = vmatmul.mubr.bf16.gmra.mrb[0].mxu0 %v1245
      %v1613 = vpop.f32.mrb[0].mxu0
      %v1614 = vadd.f32 0.0, %v1613
      %v1615 = vpop.f32.mrb[0].mxu0
      %v1616 = vpop.f32.mrb[0].mxu0
      %v1617 = vadd.f32 0.0, %v1616
      %v1618 = vpop.f32.mrb[0].mxu0
      %1619 = vmatprep.mubr.bf16.mxu0 0
      %1620 = vmatmul.mubr.bf16.gmra.mrb[0].mxu0 %v1248
      %v1621 = vpop.f32.mrb[0].mxu0
      %v1622 = vadd.f32 0.0, %v1621
      %v1623 = vpop.f32.mrb[0].mxu0
      %v1624 = vpop.f32.mrb[0].mxu0
      %v1625 = vadd.f32 0.0, %v1624
      %v1626 = vpop.f32.mrb[0].mxu0
      %1627 = vmatprep.mubr.bf16.mxu0 0
      %1628 = vmatmul.mubr.bf16.gmra.mrb[0].mxu0 %v1251
      %v1629 = vpop.f32.mrb[0].mxu0
      %v1630 = vadd.f32 0.0, %v1629
      %v1631 = vpop.f32.mrb[0].mxu0
      %v1632 = vpop.f32.mrb[0].mxu0
      %v1633 = vadd.f32 0.0, %v1632
      %v1634 = vpop.f32.mrb[0].mxu0
      %1635 = vmatprep.mubr.bf16.mxu0 0
      %1636 = vmatmul.mubr.bf16.gmra.mrb[0].mxu0 %v1254
      %v1637 = vpop.f32.mrb[0].mxu0
      %v1638 = vadd.f32 0.0, %v1637
      %v1639 = vpop.f32.mrb[0].mxu0
      %v1640 = vpop.f32.mrb[0].mxu0
      %v1641 = vadd.f32 0.0, %v1640
      %v1642 = vpop.f32.mrb[0].mxu0
      %1643 = vmatprep.mubr.bf16.mxu0 0
      %1644 = vmatmul.mubr.bf16.gmra.mrb[0].mxu0 %v1257
      %v1645 = vpop.f32.mrb[0].mxu0
      %v1646 = vadd.f32 0.0, %v1645
      %v1647 = vpop.f32.mrb[0].mxu0
      %v1648 = vpop.f32.mrb[0].mxu0
      %v1649 = vadd.f32 0.0, %v1648
      %v1650 = vpop.f32.mrb[0].mxu0
      %1651 = vmatprep.mubr.bf16.mxu0 0
      %1652 = vmatmul.mubr.bf16.gmra.mrb[0].mxu0 %v1260
      %v1653 = vpop.f32.mrb[0].mxu0
      %v1654 = vadd.f32 0.0, %v1653
      %v1655 = vpop.f32.mrb[0].mxu0
      %v1656 = vpop.f32.mrb[0].mxu0
      %v1657 = vadd.f32 0.0, %v1656
      %v1658 = vpop.f32.mrb[0].mxu0
      %1659 = vmatprep.mubr.bf16.mxu0 0
      %1660 = vmatmul.mubr.bf16.gmra.mrb[0].mxu0 %v1263
      %v1661 = vpop.f32.mrb[0].mxu0
      %v1662 = vadd.f32 0.0, %v1661
      %v1663 = vpop.f32.mrb[0].mxu0
      %v1664 = vpop.f32.mrb[0].mxu0
      %v1665 = vadd.f32 0.0, %v1664
      %v1666 = vpop.f32.mrb[0].mxu0
      %1667 = vmatprep.mubr.bf16.mxu0 0
      %1668 = vmatmul.mubr.bf16.gmra.mrb[0].mxu0 %v1266
      %v1669 = vpop.f32.mrb[0].mxu0
      %v1670 = vadd.f32 0.0, %v1669
      %v1671 = vpop.f32.mrb[0].mxu0
      %v1672 = vpop.f32.mrb[0].mxu0
      %v1673 = vadd.f32 0.0, %v1672
      %v1674 = vpop.f32.mrb[0].mxu0
      %1675 = vmatprep.mubr.bf16.mxu0 0
      %1676 = vmatmul.mubr.bf16.gmra.mrb[0].mxu0 %v1269
      %v1677 = vpop.f32.mrb[0].mxu0
      %v1678 = vadd.f32 0.0, %v1677
      %v1679 = vpop.f32.mrb[0].mxu0
      %v1680 = vpop.f32.mrb[0].mxu0
      %v1681 = vadd.f32 0.0, %v1680
      %v1682 = vpop.f32.mrb[0].mxu0
      %1683 = vmatprep.mubr.bf16.mxu0 0
      %1684 = vmatmul.mubr.bf16.gmra.mrb[0].mxu0 %v1272
      %v1685 = vpop.f32.mrb[0].mxu0
      %v1686 = vadd.f32 0.0, %v1685
      %v1687 = vpop.f32.mrb[0].mxu0
      %v1688 = vpop.f32.mrb[0].mxu0
      %v1689 = vadd.f32 0.0, %v1688
      %v1690 = vpop.f32.mrb[0].mxu0
      %1691 = vmatprep.mubr.bf16.mxu0 0
      %1692 = vmatmul.mubr.bf16.gmra.mrb[0].mxu0 %v1275
      %v1693 = vpop.f32.mrb[0].mxu0
      %v1694 = vadd.f32 0.0, %v1693
      %v1695 = vpop.f32.mrb[0].mxu0
      %v1696 = vpop.f32.mrb[0].mxu0
      %v1697 = vadd.f32 0.0, %v1696
      %v1698 = vpop.f32.mrb[0].mxu0
      %1699 = vmatprep.mubr.bf16.mxu0 0
      %1700 = vmatmul.mubr.bf16.gmra.mrb[0].mxu0 %v1278
      %v1701 = vpop.f32.mrb[0].mxu0
      %v1702 = vadd.f32 0.0, %v1701
      %v1703 = vpop.f32.mrb[0].mxu0
      %v1704 = vpop.f32.mrb[0].mxu0
      %v1705 = vadd.f32 0.0, %v1704
      %v1706 = vpop.f32.mrb[0].mxu0
      %1707 = vmatprep.mubr.bf16.mxu0 0
      %1708 = vmatmul.mubr.bf16.gmra.mrb[0].mxu0 %v1281
      %v1709 = vpop.f32.mrb[0].mxu0
      %v1710 = vadd.f32 0.0, %v1709
      %v1711 = vpop.f32.mrb[0].mxu0
      %v1712 = vpop.f32.mrb[0].mxu0
      %v1713 = vadd.f32 0.0, %v1712
      %v1714 = vpop.f32.mrb[0].mxu0
      %1715 = vmatprep.mubr.bf16.mxu0 0
      %1716 = vmatmul.mubr.bf16.gmra.mrb[0].mxu0 %v1284
      %v1717 = vpop.f32.mrb[0].mxu0
      %v1718 = vadd.f32 0.0, %v1717
      %v1719 = vpop.f32.mrb[0].mxu0
      %v1720 = vpop.f32.mrb[0].mxu0
      %v1721 = vadd.f32 0.0, %v1720
      %v1722 = vpop.f32.mrb[0].mxu0
      %1723 = vmatprep.mubr.bf16.mxu0 0
      %1724 = vmatmul.mubr.bf16.gmra.mrb[0].mxu0 %v1287
      %v1725 = vpop.f32.mrb[0].mxu0
      %v1726 = vadd.f32 0.0, %v1725
      %v1727 = vpop.f32.mrb[0].mxu0
      %v1728 = vpop.f32.mrb[0].mxu0
      %v1729 = vadd.f32 0.0, %v1728
      %v1730 = vpop.f32.mrb[0].mxu0
      %1731 = vmatprep.mubr.bf16.mxu0 0
      %1732 = vmatmul.mubr.bf16.gmra.mrb[0].mxu0 %v1290
      %v1733 = vpop.f32.mrb[0].mxu0
      %v1734 = vadd.f32 0.0, %v1733
      %v1735 = vpop.f32.mrb[0].mxu0
      %v1736 = vpop.f32.mrb[0].mxu0
      %v1737 = vadd.f32 0.0, %v1736
      %v1738 = vpop.f32.mrb[0].mxu0
      %1739 = vmatprep.mubr.bf16.mxu0 0
      %1740 = vmatmul.mubr.bf16.gmra.mrb[0].mxu0 %v1293
      %v1741 = vpop.f32.mrb[0].mxu0
      %v1742 = vadd.f32 0.0, %v1741
      %v1743 = vpop.f32.mrb[0].mxu0
      %v1744 = vpop.f32.mrb[0].mxu0
      %v1745 = vadd.f32 0.0, %v1744
      %v1746 = vpop.f32.mrb[0].mxu0
      %1747 = vmatprep.mubr.bf16.mxu0 0
      %1748 = vmatmul.mubr.bf16.gmra.mrb[0].mxu0 %v1296
      %v1749 = vpop.f32.mrb[0].mxu0
      %v1750 = vadd.f32 0.0, %v1749
      %v1751 = vpop.f32.mrb[0].mxu0
      %v1752 = vpop.f32.mrb[0].mxu0
      %v1753 = vadd.f32 0.0, %v1752
      %v1754 = vpop.f32.mrb[0].mxu0
      %1755 = vmatprep.mubr.bf16.mxu0 0
      %1756 = vmatmul.mubr.bf16.gmra.mrb[0].mxu0 %v1299
      %v1757 = vpop.f32.mrb[0].mxu0
      %v1758 = vadd.f32 0.0, %v1757
      %v1759 = vpop.f32.mrb[0].mxu0
      %v1760 = vpop.f32.mrb[0].mxu0
      %v1761 = vadd.f32 0.0, %v1760
      %v1762 = vpop.f32.mrb[0].mxu0
      %1763 = vmatprep.mubr.bf16.mxu0 0
      %1764 = vmatmul.mubr.bf16.gmra.mrb[0].mxu0 %v1302
      %v1765 = vpop.f32.mrb[0].mxu0
      %v1766 = vadd.f32 0.0, %v1765
      %v1767 = vpop.f32.mrb[0].mxu0
      %v1768 = vpop.f32.mrb[0].mxu0
      %v1769 = vadd.f32 0.0, %v1768
      %v1770 = vpop.f32.mrb[0].mxu0
      %1771 = vmatprep.mubr.bf16.mxu0 0
      %1772 = vmatmul.mubr.bf16.gmra.mrb[0].mxu0 %v1305
      %v1773 = vpop.f32.mrb[0].mxu0
      %v1774 = vadd.f32 0.0, %v1773
      %v1775 = vpop.f32.mrb[0].mxu0
      %v1776 = vpop.f32.mrb[0].mxu0
      %v1777 = vadd.f32 0.0, %v1776
      %v1778 = vpop.f32.mrb[0].mxu0
      %1779 = vdwg.mxu0
      %vm1828 = vcmask 1046528
      %v1829 = vrot.slane %v1590, 1
      %v1830 = vrot.slane %v1593, 1
      %v1831 = vsel %vm1828, %v1829, %v1830
      %v1832 = vrot.slane %v1598, 1
      %v1833 = vsel %vm1828, %v1830, %v1832
      %v1834 = vrot.slane %v1601, 1
      %v1835 = vrot.slane %v1606, 1
      %v1836 = vsel %vm1828, %v1834, %v1835
      %v1837 = vrot.slane %v1609, 1
      %v1838 = vsel %vm1828, %v1835, %v1837
      %v1839 = vrot.slane %v1614, 1
      %v1840 = vrot.slane %v1617, 1
      %v1841 = vsel %vm1828, %v1839, %v1840
      %v1842 = vrot.slane %v1622, 1
      %v1843 = vsel %vm1828, %v1840, %v1842
      %v1844 = vrot.slane %v1625, 1
      %v1845 = vrot.slane %v1630, 1
      %v1846 = vsel %vm1828, %v1844, %v1845
      %v1847 = vrot.slane %v1633, 1
      %v1848 = vsel %vm1828, %v1845, %v1847
      %v1849 = vrot.slane %v1638, 1
      %v1850 = vrot.slane %v1641, 1
      %v1851 = vsel %vm1828, %v1849, %v1850
      %v1852 = vrot.slane %v1646, 1
      %v1853 = vsel %vm1828, %v1850, %v1852
      %v1854 = vrot.slane %v1649, 1
      %v1855 = vrot.slane %v1654, 1
      %v1856 = vsel %vm1828, %v1854, %v1855
      %v1857 = vrot.slane %v1657, 1
      %v1858 = vsel %vm1828, %v1855, %v1857
      %v1859 = vrot.slane %v1662, 1
      %v1860 = vrot.slane %v1665, 1
      %v1861 = vsel %vm1828, %v1859, %v1860
      %v1862 = vrot.slane %v1670, 1
      %v1863 = vsel %vm1828, %v1860, %v1862
      %v1864 = vrot.slane %v1673, 1
      %v1865 = vrot.slane %v1678, 1
      %v1866 = vsel %vm1828, %v1864, %v1865
      %v1867 = vrot.slane %v1681, 1
      %v1868 = vsel %vm1828, %v1865, %v1867
      %v1869 = vrot.slane %v1686, 1
      %v1870 = vrot.slane %v1689, 1
      %v1871 = vsel %vm1828, %v1869, %v1870
      %v1872 = vrot.slane %v1694, 1
      %v1873 = vsel %vm1828, %v1870, %v1872
      %v1874 = vrot.slane %v1697, 1
      %v1875 = vrot.slane %v1702, 1
      %v1876 = vsel %vm1828, %v1874, %v1875
      %v1877 = vrot.slane %v1705, 1
      %v1878 = vsel %vm1828, %v1875, %v1877
      %v1879 = vrot.slane %v1710, 1
      %v1880 = vrot.slane %v1713, 1
      %v1881 = vsel %vm1828, %v1879, %v1880
      %v1882 = vrot.slane %v1718, 1
      %v1883 = vsel %vm1828, %v1880, %v1882
      %v1884 = vrot.slane %v1721, 1
      %v1885 = vrot.slane %v1726, 1
      %v1886 = vsel %vm1828, %v1884, %v1885
      %v1887 = vrot.slane %v1729, 1
      %v1888 = vsel %vm1828, %v1885, %v1887
      %v1889 = vrot.slane %v1734, 1
      %v1890 = vrot.slane %v1737, 1
      %v1891 = vsel %vm1828, %v1889, %v1890
      %v1892 = vrot.slane %v1742, 1
      %v1893 = vsel %vm1828, %v1890, %v1892
      %v1894 = vrot.slane %v1745, 1
      %v1895 = vrot.slane %v1750, 1
      %v1896 = vsel %vm1828, %v1894, %v1895
      %v1897 = vrot.slane %v1753, 1
      %v1898 = vsel %vm1828, %v1895, %v1897
      %v1899 = vrot.slane %v1758, 1
      %v1900 = vrot.slane %v1761, 1
      %v1901 = vsel %vm1828, %v1899, %v1900
      %v1902 = vrot.slane %v1766, 1
      %v1903 = vsel %vm1828, %v1900, %v1902
      %v1904 = vrot.slane %v1769, 1
      %v1905 = vrot.slane %v1774, 1
      %v1906 = vsel %vm1828, %v1904, %v1905
      %v1907 = vrot.slane %v1777, 1
      %v1908 = vsel %vm1828, %v1905, %v1907
      %v1941 = vadd.f32 %v1346, %v1831
      %v1942 = vadd.f32 %v1349, %v1833
      %v1943 = vadd.f32 %v1356, %v1836
      %v1944 = vadd.f32 %v1361, %v1838
      %v1945 = vadd.f32 %v1368, %v1841
      %v1946 = vadd.f32 %v1371, %v1843
      %v1947 = vadd.f32 %v1378, %v1846
      %v1948 = vadd.f32 %v1383, %v1848
      %v1949 = vadd.f32 %v1390, %v1851
      %v1950 = vadd.f32 %v1393, %v1853
      %v1951 = vadd.f32 %v1400, %v1856
      %v1952 = vadd.f32 %v1405, %v1858
      %v1953 = vadd.f32 %v1412, %v1861
      %v1954 = vadd.f32 %v1415, %v1863
      %v1955 = vadd.f32 %v1422, %v1866
      %v1956 = vadd.f32 %v1427, %v1868
      %v1957 = vadd.f32 %v1434, %v1871
      %v1958 = vadd.f32 %v1437, %v1873
      %v1959 = vadd.f32 %v1444, %v1876
      %v1960 = vadd.f32 %v1449, %v1878
      %v1961 = vadd.f32 %v1456, %v1881
      %v1962 = vadd.f32 %v1459, %v1883
      %v1963 = vadd.f32 %v1466, %v1886
      %v1964 = vadd.f32 %v1471, %v1888
      %v1965 = vadd.f32 %v1478, %v1891
      %v1966 = vadd.f32 %v1481, %v1893
      %v1967 = vadd.f32 %v1488, %v1896
      %v1968 = vadd.f32 %v1493, %v1898
      %v1969 = vadd.f32 %v1500, %v1901
      %v1970 = vadd.f32 %v1503, %v1903
      %v1971 = vadd.f32 %v1510, %v1906
      %v1972 = vadd.f32 %v1515, %v1908
      %s1973 = scalar_lea.vmem %s210, 64
      %v1974 = vld [vmem:[%s1973] sm:$0xf]
      %v1975 = vld [vmem:[%s1973 + $0x4] sm:$0xf]
      %v1976 = vld [vmem:[%s1973 + $0x8] sm:$0xf]
      %v1977 = vld [vmem:[%s1973 + $0xc] sm:$0xf]
      %v1978 = vld [vmem:[%s1973 + $0x10] sm:$0xf]
      %v1979 = vld [vmem:[%s1973 + $0x14] sm:$0xf]
      %v1980 = vld [vmem:[%s1973 + $0x18] sm:$0xf]
      %v1981 = vld [vmem:[%s1973 + $0x1c] sm:$0x3]
      %v1990 = vunpack.c.l.b16 %v1974
      %v1991 = vunpack.c.l.b16 %v1975
      %v1992 = vunpack.c.l.b16 %v1976
      %v1993 = vunpack.c.l.b16 %v1977
      %v1994 = vunpack.c.l.b16 %v1978
      %v1995 = vunpack.c.l.b16 %v1979
      %v1996 = vunpack.c.l.b16 %v1980
      %v1997 = vunpack.c.l.b16 %v1981
      %v1998 = vpack.c.b16 %v1991, %v1990
      %v1999 = vpack.c.b16 %v1993, %v1992
      %v2000 = vpack.c.b16 %v1995, %v1994
      %v2001 = vpack.c.b16 %v1997, %v1996
      %v2006 = vsel %vm1307, %v2001, 0
      %2008 = vmatprep.subr.bf16.mxu0 0
      %2009 = vmatpush1.bf16.msra.mxu0 %v1998
      %2010 = vmatprep.subr.bf16.mxu0 0
      %2011 = vmatpush1.bf16.msra.mxu0 %v1999
      %2012 = vmatprep.subr.bf16.mxu0 0
      %2013 = vmatpush1.bf16.msra.mxu0 %v2000
      %2014 = vmatprep.subr.bf16.mxu0 0
      %2015 = vmatpush1.bf16.msra.mxu0 %v2006
      %2016 = vmatprep.subr.bf16.mxu0 0
      %2017 = vmatpush1.bf16.msra.mxu0 0
      %2018 = vmatprep.subr.bf16.mxu0 0
      %2019 = vmatpush1.bf16.msra.mxu0 0
      %2020 = vmatprep.subr.bf16.mxu0 0
      %2021 = vmatpush1.bf16.msra.mxu0 0
      %2022 = vmatprep.subr.bf16.mxu0 0
      %2023 = vmatpush1.bf16.msra.mxu0 0
      %2024 = vmatprep.subr.bf16.mxu0 0
      %2025 = vmatpush1.bf16.msra.mxu0 0
      %2026 = vmatprep.subr.bf16.mxu0 0
      %2027 = vmatpush1.bf16.msra.mxu0 0
      %2028 = vmatprep.subr.bf16.mxu0 0
      %2029 = vmatpush1.bf16.msra.mxu0 0
      %2030 = vmatprep.subr.bf16.mxu0 0
      %2031 = vmatpush1.bf16.msra.mxu0 0
      %2032 = vmatprep.subr.bf16.mxu0 0
      %2033 = vmatpush1.bf16.msra.mxu0 0
      %2034 = vmatprep.subr.bf16.mxu0 0
      %2035 = vmatpush1.bf16.msra.mxu0 0
      %2036 = vmatprep.subr.bf16.mxu0 0
      %2037 = vmatpush1.bf16.msra.mxu0 0
      %2038 = vmatprep.subr.bf16.mxu0 0
      %2039 = vmatpush1.bf16.msra.mxu0 0
      %2040 = vmatprep.mubr.bf16.mxu0 0
      %2041 = vmatmul.mubr.bf16.gmra.mrb[0].mxu0 %v1236
      %v2042 = vpop.f32.mrb[0].mxu0
      %v2043 = vadd.f32 0.0, %v2042
      %v2044 = vpop.f32.mrb[0].mxu0
      %v2045 = vpop.f32.mrb[0].mxu0
      %v2046 = vadd.f32 0.0, %v2045
      %v2047 = vpop.f32.mrb[0].mxu0
      %2048 = vmatprep.mubr.bf16.mxu0 0
      %2049 = vmatmul.mubr.bf16.gmra.mrb[0].mxu0 %v1239
      %v2050 = vpop.f32.mrb[0].mxu0
      %v2051 = vadd.f32 0.0, %v2050
      %v2052 = vpop.f32.mrb[0].mxu0
      %v2053 = vpop.f32.mrb[0].mxu0
      %v2054 = vadd.f32 0.0, %v2053
      %v2055 = vpop.f32.mrb[0].mxu0
      %2056 = vmatprep.mubr.bf16.mxu0 0
      %2057 = vmatmul.mubr.bf16.gmra.mrb[0].mxu0 %v1242
      %v2058 = vpop.f32.mrb[0].mxu0
      %v2059 = vadd.f32 0.0, %v2058
      %v2060 = vpop.f32.mrb[0].mxu0
      %v2061 = vpop.f32.mrb[0].mxu0
      %v2062 = vadd.f32 0.0, %v2061
      %v2063 = vpop.f32.mrb[0].mxu0
      %2064 = vmatprep.mubr.bf16.mxu0 0
      %2065 = vmatmul.mubr.bf16.gmra.mrb[0].mxu0 %v1245
      %v2066 = vpop.f32.mrb[0].mxu0
      %v2067 = vadd.f32 0.0, %v2066
      %v2068 = vpop.f32.mrb[0].mxu0
      %v2069 = vpop.f32.mrb[0].mxu0
      %v2070 = vadd.f32 0.0, %v2069
      %v2071 = vpop.f32.mrb[0].mxu0
      %2072 = vmatprep.mubr.bf16.mxu0 0
      %2073 = vmatmul.mubr.bf16.gmra.mrb[0].mxu0 %v1248
      %v2074 = vpop.f32.mrb[0].mxu0
      %v2075 = vadd.f32 0.0, %v2074
      %v2076 = vpop.f32.mrb[0].mxu0
      %v2077 = vpop.f32.mrb[0].mxu0
      %v2078 = vadd.f32 0.0, %v2077
      %v2079 = vpop.f32.mrb[0].mxu0
      %2080 = vmatprep.mubr.bf16.mxu0 0
      %2081 = vmatmul.mubr.bf16.gmra.mrb[0].mxu0 %v1251
      %v2082 = vpop.f32.mrb[0].mxu0
      %v2083 = vadd.f32 0.0, %v2082
      %v2084 = vpop.f32.mrb[0].mxu0
      %v2085 = vpop.f32.mrb[0].mxu0
      %v2086 = vadd.f32 0.0, %v2085
      %v2087 = vpop.f32.mrb[0].mxu0
      %2088 = vmatprep.mubr.bf16.mxu0 0
      %2089 = vmatmul.mubr.bf16.gmra.mrb[0].mxu0 %v1254
      %v2090 = vpop.f32.mrb[0].mxu0
      %v2091 = vadd.f32 0.0, %v2090
      %v2092 = vpop.f32.mrb[0].mxu0
      %v2093 = vpop.f32.mrb[0].mxu0
      %v2094 = vadd.f32 0.0, %v2093
      %v2095 = vpop.f32.mrb[0].mxu0
      %2096 = vmatprep.mubr.bf16.mxu0 0
      %2097 = vmatmul.mubr.bf16.gmra.mrb[0].mxu0 %v1257
      %v2098 = vpop.f32.mrb[0].mxu0
      %v2099 = vadd.f32 0.0, %v2098
      %v2100 = vpop.f32.mrb[0].mxu0
      %v2101 = vpop.f32.mrb[0].mxu0
      %v2102 = vadd.f32 0.0, %v2101
      %v2103 = vpop.f32.mrb[0].mxu0
      %2104 = vmatprep.mubr.bf16.mxu0 0
      %2105 = vmatmul.mubr.bf16.gmra.mrb[0].mxu0 %v1260
      %v2106 = vpop.f32.mrb[0].mxu0
      %v2107 = vadd.f32 0.0, %v2106
      %v2108 = vpop.f32.mrb[0].mxu0
      %v2109 = vpop.f32.mrb[0].mxu0
      %v2110 = vadd.f32 0.0, %v2109
      %v2111 = vpop.f32.mrb[0].mxu0
      %2112 = vmatprep.mubr.bf16.mxu0 0
      %2113 = vmatmul.mubr.bf16.gmra.mrb[0].mxu0 %v1263
      %v2114 = vpop.f32.mrb[0].mxu0
      %v2115 = vadd.f32 0.0, %v2114
      %v2116 = vpop.f32.mrb[0].mxu0
      %v2117 = vpop.f32.mrb[0].mxu0
      %v2118 = vadd.f32 0.0, %v2117
      %v2119 = vpop.f32.mrb[0].mxu0
      %2120 = vmatprep.mubr.bf16.mxu0 0
      %2121 = vmatmul.mubr.bf16.gmra.mrb[0].mxu0 %v1266
      %v2122 = vpop.f32.mrb[0].mxu0
      %v2123 = vadd.f32 0.0, %v2122
      %v2124 = vpop.f32.mrb[0].mxu0
      %v2125 = vpop.f32.mrb[0].mxu0
      %v2126 = vadd.f32 0.0, %v2125
      %v2127 = vpop.f32.mrb[0].mxu0
      %2128 = vmatprep.mubr.bf16.mxu0 0
      %2129 = vmatmul.mubr.bf16.gmra.mrb[0].mxu0 %v1269
      %v2130 = vpop.f32.mrb[0].mxu0
      %v2131 = vadd.f32 0.0, %v2130
      %v2132 = vpop.f32.mrb[0].mxu0
      %v2133 = vpop.f32.mrb[0].mxu0
      %v2134 = vadd.f32 0.0, %v2133
      %v2135 = vpop.f32.mrb[0].mxu0
      %2136 = vmatprep.mubr.bf16.mxu0 0
      %2137 = vmatmul.mubr.bf16.gmra.mrb[0].mxu0 %v1272
      %v2138 = vpop.f32.mrb[0].mxu0
      %v2139 = vadd.f32 0.0, %v2138
      %v2140 = vpop.f32.mrb[0].mxu0
      %v2141 = vpop.f32.mrb[0].mxu0
      %v2142 = vadd.f32 0.0, %v2141
      %v2143 = vpop.f32.mrb[0].mxu0
      %2144 = vmatprep.mubr.bf16.mxu0 0
      %2145 = vmatmul.mubr.bf16.gmra.mrb[0].mxu0 %v1275
      %v2146 = vpop.f32.mrb[0].mxu0
      %v2147 = vadd.f32 0.0, %v2146
      %v2148 = vpop.f32.mrb[0].mxu0
      %v2149 = vpop.f32.mrb[0].mxu0
      %v2150 = vadd.f32 0.0, %v2149
      %v2151 = vpop.f32.mrb[0].mxu0
      %2152 = vmatprep.mubr.bf16.mxu0 0
      %2153 = vmatmul.mubr.bf16.gmra.mrb[0].mxu0 %v1278
      %v2154 = vpop.f32.mrb[0].mxu0
      %v2155 = vadd.f32 0.0, %v2154
      %v2156 = vpop.f32.mrb[0].mxu0
      %v2157 = vpop.f32.mrb[0].mxu0
      %v2158 = vadd.f32 0.0, %v2157
      %v2159 = vpop.f32.mrb[0].mxu0
      %2160 = vmatprep.mubr.bf16.mxu0 0
      %2161 = vmatmul.mubr.bf16.gmra.mrb[0].mxu0 %v1281
      %v2162 = vpop.f32.mrb[0].mxu0
      %v2163 = vadd.f32 0.0, %v2162
      %v2164 = vpop.f32.mrb[0].mxu0
      %v2165 = vpop.f32.mrb[0].mxu0
      %v2166 = vadd.f32 0.0, %v2165
      %v2167 = vpop.f32.mrb[0].mxu0
      %2168 = vmatprep.mubr.bf16.mxu0 0
      %2169 = vmatmul.mubr.bf16.gmra.mrb[0].mxu0 %v1284
      %v2170 = vpop.f32.mrb[0].mxu0
      %v2171 = vadd.f32 0.0, %v2170
      %v2172 = vpop.f32.mrb[0].mxu0
      %v2173 = vpop.f32.mrb[0].mxu0
      %v2174 = vadd.f32 0.0, %v2173
      %v2175 = vpop.f32.mrb[0].mxu0
      %2176 = vmatprep.mubr.bf16.mxu0 0
      %2177 = vmatmul.mubr.bf16.gmra.mrb[0].mxu0 %v1287
      %v2178 = vpop.f32.mrb[0].mxu0
      %v2179 = vadd.f32 0.0, %v2178
      %v2180 = vpop.f32.mrb[0].mxu0
      %v2181 = vpop.f32.mrb[0].mxu0
      %v2182 = vadd.f32 0.0, %v2181
      %v2183 = vpop.f32.mrb[0].mxu0
      %2184 = vmatprep.mubr.bf16.mxu0 0
      %2185 = vmatmul.mubr.bf16.gmra.mrb[0].mxu0 %v1290
      %v2186 = vpop.f32.mrb[0].mxu0
      %v2187 = vadd.f32 0.0, %v2186
      %v2188 = vpop.f32.mrb[0].mxu0
      %v2189 = vpop.f32.mrb[0].mxu0
      %v2190 = vadd.f32 0.0, %v2189
      %v2191 = vpop.f32.mrb[0].mxu0
      %2192 = vmatprep.mubr.bf16.mxu0 0
      %2193 = vmatmul.mubr.bf16.gmra.mrb[0].mxu0 %v1293
      %v2194 = vpop.f32.mrb[0].mxu0
      %v2195 = vadd.f32 0.0, %v2194
      %v2196 = vpop.f32.mrb[0].mxu0
      %v2197 = vpop.f32.mrb[0].mxu0
      %v2198 = vadd.f32 0.0, %v2197
      %v2199 = vpop.f32.mrb[0].mxu0
      %2200 = vmatprep.mubr.bf16.mxu0 0
      %2201 = vmatmul.mubr.bf16.gmra.mrb[0].mxu0 %v1296
      %v2202 = vpop.f32.mrb[0].mxu0
      %v2203 = vadd.f32 0.0, %v2202
      %v2204 = vpop.f32.mrb[0].mxu0
      %v2205 = vpop.f32.mrb[0].mxu0
      %v2206 = vadd.f32 0.0, %v2205
      %v2207 = vpop.f32.mrb[0].mxu0
      %2208 = vmatprep.mubr.bf16.mxu0 0
      %2209 = vmatmul.mubr.bf16.gmra.mrb[0].mxu0 %v1299
      %v2210 = vpop.f32.mrb[0].mxu0
      %v2211 = vadd.f32 0.0, %v2210
      %v2212 = vpop.f32.mrb[0].mxu0
      %v2213 = vpop.f32.mrb[0].mxu0
      %v2214 = vadd.f32 0.0, %v2213
      %v2215 = vpop.f32.mrb[0].mxu0
      %2216 = vmatprep.mubr.bf16.mxu0 0
      %2217 = vmatmul.mubr.bf16.gmra.mrb[0].mxu0 %v1302
      %v2218 = vpop.f32.mrb[0].mxu0
      %v2219 = vadd.f32 0.0, %v2218
      %v2220 = vpop.f32.mrb[0].mxu0
      %v2221 = vpop.f32.mrb[0].mxu0
      %v2222 = vadd.f32 0.0, %v2221
      %v2223 = vpop.f32.mrb[0].mxu0
      %2224 = vmatprep.mubr.bf16.mxu0 0
      %2225 = vmatmul.mubr.bf16.gmra.mrb[0].mxu0 %v1305
      %v2226 = vpop.f32.mrb[0].mxu0
      %v2227 = vadd.f32 0.0, %v2226
      %v2228 = vpop.f32.mrb[0].mxu0
      %v2229 = vpop.f32.mrb[0].mxu0
      %v2230 = vadd.f32 0.0, %v2229
      %v2231 = vpop.f32.mrb[0].mxu0
      %2232 = vdwg.mxu0
      %v2281 = vrot.slane %v2043, 2
      %v2282 = vrot.slane %v2046, 2
      %v2283 = vsel %vm1307, %v2281, %v2282
      %v2284 = vrot.slane %v2051, 2
      %v2285 = vsel %vm1307, %v2282, %v2284
      %v2286 = vrot.slane %v2054, 2
      %v2287 = vrot.slane %v2059, 2
      %v2288 = vsel %vm1307, %v2286, %v2287
      %v2289 = vrot.slane %v2062, 2
      %v2290 = vsel %vm1307, %v2287, %v2289
      %v2291 = vrot.slane %v2067, 2
      %v2292 = vrot.slane %v2070, 2
      %v2293 = vsel %vm1307, %v2291, %v2292
      %v2294 = vrot.slane %v2075, 2
      %v2295 = vsel %vm1307, %v2292, %v2294
      %v2296 = vrot.slane %v2078, 2
      %v2297 = vrot.slane %v2083, 2
      %v2298 = vsel %vm1307, %v2296, %v2297
      %v2299 = vrot.slane %v2086, 2
      %v2300 = vsel %vm1307, %v2297, %v2299
      %v2301 = vrot.slane %v2091, 2
      %v2302 = vrot.slane %v2094, 2
      %v2303 = vsel %vm1307, %v2301, %v2302
      %v2304 = vrot.slane %v2099, 2
      %v2305 = vsel %vm1307, %v2302, %v2304
      %v2306 = vrot.slane %v2102, 2
      %v2307 = vrot.slane %v2107, 2
      %v2308 = vsel %vm1307, %v2306, %v2307
      %v2309 = vrot.slane %v2110, 2
      %v2310 = vsel %vm1307, %v2307, %v2309
      %v2311 = vrot.slane %v2115, 2
      %v2312 = vrot.slane %v2118, 2
      %v2313 = vsel %vm1307, %v2311, %v2312
      %v2314 = vrot.slane %v2123, 2
      %v2315 = vsel %vm1307, %v2312, %v2314
      %v2316 = vrot.slane %v2126, 2
      %v2317 = vrot.slane %v2131, 2
      %v2318 = vsel %vm1307, %v2316, %v2317
      %v2319 = vrot.slane %v2134, 2
      %v2320 = vsel %vm1307, %v2317, %v2319
      %v2321 = vrot.slane %v2139, 2
      %v2322 = vrot.slane %v2142, 2
      %v2323 = vsel %vm1307, %v2321, %v2322
      %v2324 = vrot.slane %v2147, 2
      %v2325 = vsel %vm1307, %v2322, %v2324
      %v2326 = vrot.slane %v2150, 2
      %v2327 = vrot.slane %v2155, 2
      %v2328 = vsel %vm1307, %v2326, %v2327
      %v2329 = vrot.slane %v2158, 2
      %v2330 = vsel %vm1307, %v2327, %v2329
      %v2331 = vrot.slane %v2163, 2
      %v2332 = vrot.slane %v2166, 2
      %v2333 = vsel %vm1307, %v2331, %v2332
      %v2334 = vrot.slane %v2171, 2
      %v2335 = vsel %vm1307, %v2332, %v2334
      %v2336 = vrot.slane %v2174, 2
      %v2337 = vrot.slane %v2179, 2
      %v2338 = vsel %vm1307, %v2336, %v2337
      %v2339 = vrot.slane %v2182, 2
      %v2340 = vsel %vm1307, %v2337, %v2339
      %v2341 = vrot.slane %v2187, 2
      %v2342 = vrot.slane %v2190, 2
      %v2343 = vsel %vm1307, %v2341, %v2342
      %v2344 = vrot.slane %v2195, 2
      %v2345 = vsel %vm1307, %v2342, %v2344
      %v2346 = vrot.slane %v2198, 2
      %v2347 = vrot.slane %v2203, 2
      %v2348 = vsel %vm1307, %v2346, %v2347
      %v2349 = vrot.slane %v2206, 2
      %v2350 = vsel %vm1307, %v2347, %v2349
      %v2351 = vrot.slane %v2211, 2
      %v2352 = vrot.slane %v2214, 2
      %v2353 = vsel %vm1307, %v2351, %v2352
      %v2354 = vrot.slane %v2219, 2
      %v2355 = vsel %vm1307, %v2352, %v2354
      %v2356 = vrot.slane %v2222, 2
      %v2357 = vrot.slane %v2227, 2
      %v2358 = vsel %vm1307, %v2356, %v2357
      %v2359 = vrot.slane %v2230, 2
      %v2360 = vsel %vm1307, %v2357, %v2359
      %v2393 = vadd.f32 %v1941, %v2283
      %v2394 = vadd.f32 %v1942, %v2285
      %v2395 = vadd.f32 %v1943, %v2288
      %v2396 = vadd.f32 %v1944, %v2290
      %v2397 = vadd.f32 %v1945, %v2293
      %v2398 = vadd.f32 %v1946, %v2295
      %v2399 = vadd.f32 %v1947, %v2298
      %v2400 = vadd.f32 %v1948, %v2300
      %v2401 = vadd.f32 %v1949, %v2303
      %v2402 = vadd.f32 %v1950, %v2305
      %v2403 = vadd.f32 %v1951, %v2308
      %v2404 = vadd.f32 %v1952, %v2310
      %v2405 = vadd.f32 %v1953, %v2313
      %v2406 = vadd.f32 %v1954, %v2315
      %v2407 = vadd.f32 %v1955, %v2318
      %v2408 = vadd.f32 %v1956, %v2320
      %v2409 = vadd.f32 %v1957, %v2323
      %v2410 = vadd.f32 %v1958, %v2325
      %v2411 = vadd.f32 %v1959, %v2328
      %v2412 = vadd.f32 %v1960, %v2330
      %v2413 = vadd.f32 %v1961, %v2333
      %v2414 = vadd.f32 %v1962, %v2335
      %v2415 = vadd.f32 %v1963, %v2338
      %v2416 = vadd.f32 %v1964, %v2340
      %v2417 = vadd.f32 %v1965, %v2343
      %v2418 = vadd.f32 %v1966, %v2345
      %v2419 = vadd.f32 %v1967, %v2348
      %v2420 = vadd.f32 %v1968, %v2350
      %v2421 = vadd.f32 %v1969, %v2353
      %v2422 = vadd.f32 %v1970, %v2355
      %v2423 = vadd.f32 %v1971, %v2358
      %v2424 = vadd.f32 %v1972, %v2360
      %v2426 = vlaneseq
      %v2427 = vshrl.u32 %v2426, 7
      %v2428 = vsub.s32 0, %v2427
      %v2429 = vrot.slane %v278, %v2428
      %v2431 = vadd.f32 %v2393, %v2429
      %v2432 = vadd.f32 %v2394, %v2429
      %v2433 = vadd.f32 %v2395, %v2429
      %v2434 = vadd.f32 %v2396, %v2429
      %v2435 = vadd.f32 %v2397, %v2429
      %v2436 = vadd.f32 %v2398, %v2429
      %v2437 = vadd.f32 %v2399, %v2429
      %v2438 = vadd.f32 %v2400, %v2429
      %v2439 = vadd.f32 %v2401, %v2429
      %v2440 = vadd.f32 %v2402, %v2429
      %v2441 = vadd.f32 %v2403, %v2429
      %v2442 = vadd.f32 %v2404, %v2429
      %v2443 = vadd.f32 %v2405, %v2429
      %v2444 = vadd.f32 %v2406, %v2429
      %v2445 = vadd.f32 %v2407, %v2429
      %v2446 = vadd.f32 %v2408, %v2429
      %v2447 = vadd.f32 %v2409, %v2429
      %v2448 = vadd.f32 %v2410, %v2429
      %v2449 = vadd.f32 %v2411, %v2429
      %v2450 = vadd.f32 %v2412, %v2429
      %v2451 = vadd.f32 %v2413, %v2429
      %v2452 = vadd.f32 %v2414, %v2429
      %v2453 = vadd.f32 %v2415, %v2429
      %v2454 = vadd.f32 %v2416, %v2429
      %v2455 = vadd.f32 %v2417, %v2429
      %v2456 = vadd.f32 %v2418, %v2429
      %v2457 = vadd.f32 %v2419, %v2429
      %v2458 = vadd.f32 %v2420, %v2429
      %v2459 = vadd.f32 %v2421, %v2429
      %v2460 = vadd.f32 %v2422, %v2429
      %v2461 = vadd.f32 %v2423, %v2429
      %v2462 = vadd.f32 %v2424, %v2429
      %vm2463 = vcmp.gt.f32.partialorder %v2431, 0.0
      %vm2464 = vcmp.gt.f32.partialorder %v2432, 0.0
      %vm2465 = vcmp.gt.f32.partialorder %v2433, 0.0
      %vm2466 = vcmp.gt.f32.partialorder %v2434, 0.0
      %vm2467 = vcmp.gt.f32.partialorder %v2435, 0.0
      %vm2468 = vcmp.gt.f32.partialorder %v2436, 0.0
      %vm2469 = vcmp.gt.f32.partialorder %v2437, 0.0
      %vm2470 = vcmp.gt.f32.partialorder %v2438, 0.0
      %vm2471 = vcmp.gt.f32.partialorder %v2439, 0.0
      %vm2472 = vcmp.gt.f32.partialorder %v2440, 0.0
      %vm2473 = vcmp.gt.f32.partialorder %v2441, 0.0
      %vm2474 = vcmp.gt.f32.partialorder %v2442, 0.0
      %vm2475 = vcmp.gt.f32.partialorder %v2443, 0.0
      %vm2476 = vcmp.gt.f32.partialorder %v2444, 0.0
      %vm2477 = vcmp.gt.f32.partialorder %v2445, 0.0
      %vm2478 = vcmp.gt.f32.partialorder %v2446, 0.0
      %vm2479 = vcmp.gt.f32.partialorder %v2447, 0.0
      %vm2480 = vcmp.gt.f32.partialorder %v2448, 0.0
      %vm2481 = vcmp.gt.f32.partialorder %v2449, 0.0
      %vm2482 = vcmp.gt.f32.partialorder %v2450, 0.0
      %vm2483 = vcmp.gt.f32.partialorder %v2451, 0.0
      %vm2484 = vcmp.gt.f32.partialorder %v2452, 0.0
      %vm2485 = vcmp.gt.f32.partialorder %v2453, 0.0
      %vm2486 = vcmp.gt.f32.partialorder %v2454, 0.0
      %vm2487 = vcmp.gt.f32.partialorder %v2455, 0.0
      %vm2488 = vcmp.gt.f32.partialorder %v2456, 0.0
      %vm2489 = vcmp.gt.f32.partialorder %v2457, 0.0
      %vm2490 = vcmp.gt.f32.partialorder %v2458, 0.0
      %vm2491 = vcmp.gt.f32.partialorder %v2459, 0.0
      %vm2492 = vcmp.gt.f32.partialorder %v2460, 0.0
      %vm2493 = vcmp.gt.f32.partialorder %v2461, 0.0
      %vm2494 = vcmp.gt.f32.partialorder %v2462, 0.0
      %v2495 = vmul.f32 %v2431, 0.2
      %v2496 = vmul.f32 %v2432, 0.2
      %v2497 = vmul.f32 %v2433, 0.2
      %v2498 = vmul.f32 %v2434, 0.2
      %v2499 = vmul.f32 %v2435, 0.2
      %v2500 = vmul.f32 %v2436, 0.2
      %v2501 = vmul.f32 %v2437, 0.2
      %v2502 = vmul.f32 %v2438, 0.2
      %v2503 = vmul.f32 %v2439, 0.2
      %v2504 = vmul.f32 %v2440, 0.2
      %v2505 = vmul.f32 %v2441, 0.2
      %v2506 = vmul.f32 %v2442, 0.2
      %v2507 = vmul.f32 %v2443, 0.2
      %v2508 = vmul.f32 %v2444, 0.2
      %v2509 = vmul.f32 %v2445, 0.2
      %v2510 = vmul.f32 %v2446, 0.2
      %v2511 = vmul.f32 %v2447, 0.2
      %v2512 = vmul.f32 %v2448, 0.2
      %v2513 = vmul.f32 %v2449, 0.2
      %v2514 = vmul.f32 %v2450, 0.2
      %v2515 = vmul.f32 %v2451, 0.2
      %v2516 = vmul.f32 %v2452, 0.2
      %v2517 = vmul.f32 %v2453, 0.2
      %v2518 = vmul.f32 %v2454, 0.2
      %v2519 = vmul.f32 %v2455, 0.2
      %v2520 = vmul.f32 %v2456, 0.2
      %v2521 = vmul.f32 %v2457, 0.2
      %v2522 = vmul.f32 %v2458, 0.2
      %v2523 = vmul.f32 %v2459, 0.2
      %v2524 = vmul.f32 %v2460, 0.2
      %v2525 = vmul.f32 %v2461, 0.2
      %v2526 = vmul.f32 %v2462, 0.2
      %v2527 = vsel %vm2463, %v2431, %v2495
      %v2528 = vsel %vm2464, %v2432, %v2496
      %v2529 = vsel %vm2465, %v2433, %v2497
      %v2530 = vsel %vm2466, %v2434, %v2498
      %v2531 = vsel %vm2467, %v2435, %v2499
      %v2532 = vsel %vm2468, %v2436, %v2500
      %v2533 = vsel %vm2469, %v2437, %v2501
      %v2534 = vsel %vm2470, %v2438, %v2502
      %v2535 = vsel %vm2471, %v2439, %v2503
      %v2536 = vsel %vm2472, %v2440, %v2504
      %v2537 = vsel %vm2473, %v2441, %v2505
      %v2538 = vsel %vm2474, %v2442, %v2506
      %v2539 = vsel %vm2475, %v2443, %v2507
      %v2540 = vsel %vm2476, %v2444, %v2508
      %v2541 = vsel %vm2477, %v2445, %v2509
      %v2542 = vsel %vm2478, %v2446, %v2510
      %v2543 = vsel %vm2479, %v2447, %v2511
      %v2544 = vsel %vm2480, %v2448, %v2512
      %v2545 = vsel %vm2481, %v2449, %v2513
      %v2546 = vsel %vm2482, %v2450, %v2514
      %v2547 = vsel %vm2483, %v2451, %v2515
      %v2548 = vsel %vm2484, %v2452, %v2516
      %v2549 = vsel %vm2485, %v2453, %v2517
      %v2550 = vsel %vm2486, %v2454, %v2518
      %v2551 = vsel %vm2487, %v2455, %v2519
      %v2552 = vsel %vm2488, %v2456, %v2520
      %v2553 = vsel %vm2489, %v2457, %v2521
      %v2554 = vsel %vm2490, %v2458, %v2522
      %v2555 = vsel %vm2491, %v2459, %v2523
      %v2556 = vsel %vm2492, %v2460, %v2524
      %v2557 = vsel %vm2493, %v2461, %v2525
      %v2558 = vsel %vm2494, %v2462, %v2526
      %v2559 = vpack.c.bf16 %v2528, %v2527
      %v2560 = vpack.c.bf16 %v2530, %v2529
      %v2561 = vpack.c.bf16 %v2532, %v2531
      %v2562 = vpack.c.bf16 %v2534, %v2533
      %v2563 = vpack.c.bf16 %v2536, %v2535
      %v2564 = vpack.c.bf16 %v2538, %v2537
      %v2565 = vpack.c.bf16 %v2540, %v2539
      %v2566 = vpack.c.bf16 %v2542, %v2541
      %v2567 = vpack.c.bf16 %v2544, %v2543
      %v2568 = vpack.c.bf16 %v2546, %v2545
      %v2569 = vpack.c.bf16 %v2548, %v2547
      %v2570 = vpack.c.bf16 %v2550, %v2549
      %v2571 = vpack.c.bf16 %v2552, %v2551
      %v2572 = vpack.c.bf16 %v2554, %v2553
      %v2573 = vpack.c.bf16 %v2556, %v2555
      %v2574 = vpack.c.bf16 %v2558, %v2557
      %v2591 = vunpack.c.l.b16 %v2559
      %v2592 = vunpack.c.h.b16 %v2559
      %v2593 = vunpack.c.l.b16 %v2560
      %v2594 = vunpack.c.h.b16 %v2560
      %v2595 = vunpack.c.l.b16 %v2561
      %v2596 = vunpack.c.h.b16 %v2561
      %v2597 = vunpack.c.l.b16 %v2562
      %v2598 = vunpack.c.h.b16 %v2562
      %v2599 = vunpack.c.l.b16 %v2563
      %v2600 = vunpack.c.h.b16 %v2563
      %v2601 = vunpack.c.l.b16 %v2564
      %v2602 = vunpack.c.h.b16 %v2564
      %v2603 = vunpack.c.l.b16 %v2565
      %v2604 = vunpack.c.h.b16 %v2565
      %v2605 = vunpack.c.l.b16 %v2566
      %v2606 = vunpack.c.h.b16 %v2566
      %v2607 = vunpack.c.l.b16 %v2567
      %v2608 = vunpack.c.h.b16 %v2567
      %v2609 = vunpack.c.l.b16 %v2568
      %v2610 = vunpack.c.h.b16 %v2568
      %v2611 = vunpack.c.l.b16 %v2569
      %v2612 = vunpack.c.h.b16 %v2569
      %v2613 = vunpack.c.l.b16 %v2570
      %v2614 = vunpack.c.h.b16 %v2570
      %v2615 = vunpack.c.l.b16 %v2571
      %v2616 = vunpack.c.h.b16 %v2571
      %v2617 = vunpack.c.l.b16 %v2572
      %v2618 = vunpack.c.h.b16 %v2572
      %v2619 = vunpack.c.l.b16 %v2573
      %v2620 = vunpack.c.h.b16 %v2573
      %v2621 = vunpack.c.l.b16 %v2574
      %v2622 = vunpack.c.h.b16 %v2574
      %v2623 = vpack.c.b16 %v2591, %v2591
      %v2624 = vpack.c.b16 %v2592, %v2592
      %v2625 = vpack.c.b16 %v2593, %v2593
      %v2626 = vpack.c.b16 %v2594, %v2594
      %v2627 = vpack.c.b16 %v2595, %v2595
      %v2628 = vpack.c.b16 %v2596, %v2596
      %v2629 = vpack.c.b16 %v2597, %v2597
      %v2630 = vpack.c.b16 %v2598, %v2598
      %v2631 = vpack.c.b16 %v2599, %v2599
      %v2632 = vpack.c.b16 %v2600, %v2600
      %v2633 = vpack.c.b16 %v2601, %v2601
      %v2634 = vpack.c.b16 %v2602, %v2602
      %v2635 = vpack.c.b16 %v2603, %v2603
      %v2636 = vpack.c.b16 %v2604, %v2604
      %v2637 = vpack.c.b16 %v2605, %v2605
      %v2638 = vpack.c.b16 %v2606, %v2606
      %v2639 = vpack.c.b16 %v2607, %v2607
      %v2640 = vpack.c.b16 %v2608, %v2608
      %v2641 = vpack.c.b16 %v2609, %v2609
      %v2642 = vpack.c.b16 %v2610, %v2610
      %v2643 = vpack.c.b16 %v2611, %v2611
      %v2644 = vpack.c.b16 %v2612, %v2612
      %v2645 = vpack.c.b16 %v2613, %v2613
      %v2646 = vpack.c.b16 %v2614, %v2614
      %v2647 = vpack.c.b16 %v2615, %v2615
      %v2648 = vpack.c.b16 %v2616, %v2616
      %v2649 = vpack.c.b16 %v2617, %v2617
      %v2650 = vpack.c.b16 %v2618, %v2618
      %v2651 = vpack.c.b16 %v2619, %v2619
      %v2652 = vpack.c.b16 %v2620, %v2620
      %v2653 = vpack.c.b16 %v2621, %v2621
      %v2654 = vpack.c.b16 %v2622, %v2622
      %vm2655 = vsmask.f32 256
      %vm2656 = vsmask.f32 4368
      %vm2657 = vmor %vm2655, %vm2656
      %v2659 = vshrl.u32 %v2623, 16
      %v2661 = vrot.slane %v2659, 7
      %v2662 = vshll.u32 %v2623, 16
      %v2664 = vor.u32 %v2661, %v2662
      %v2665 = vrot.slane %v2661, 4
      %v2667 = vshrl.u32 %v2624, 16
      %v2669 = vrot.slane %v2667, 7
      %v2670 = vshll.u32 %v2624, 16
      %v2672 = vor.u32 %v2669, %v2670
      %v2673 = vsel %vm2657, %v2665, %v2672
      %v2674 = vrot.slane %v2669, 4
      %v2676 = vshrl.u32 %v2625, 16
      %v2678 = vrot.slane %v2676, 7
      %v2679 = vshll.u32 %v2625, 16
      %v2681 = vor.u32 %v2678, %v2679
      %v2682 = vrot.slane %v2678, 4
      %v2684 = vshrl.u32 %v2626, 16
      %v2686 = vrot.slane %v2684, 7
      %v2687 = vshll.u32 %v2626, 16
      %v2689 = vor.u32 %v2686, %v2687
      %v2690 = vsel %vm2657, %v2682, %v2689
      %v2691 = vrot.slane %v2686, 4
      %v2693 = vshrl.u32 %v2627, 16
      %v2695 = vrot.slane %v2693, 7
      %v2696 = vshll.u32 %v2627, 16
      %v2698 = vor.u32 %v2695, %v2696
      %v2699 = vrot.slane %v2695, 4
      %v2701 = vshrl.u32 %v2628, 16
      %v2703 = vrot.slane %v2701, 7
      %v2704 = vshll.u32 %v2628, 16
      %v2706 = vor.u32 %v2703, %v2704
      %v2707 = vsel %vm2657, %v2699, %v2706
      %v2708 = vrot.slane %v2703, 4
      %v2710 = vshrl.u32 %v2629, 16
      %v2712 = vrot.slane %v2710, 7
      %v2713 = vshll.u32 %v2629, 16
      %v2715 = vor.u32 %v2712, %v2713
      %v2716 = vrot.slane %v2712, 4
      %v2718 = vshrl.u32 %v2630, 16
      %v2720 = vrot.slane %v2718, 7
      %v2721 = vshll.u32 %v2630, 16
      %v2723 = vor.u32 %v2720, %v2721
      %v2724 = vsel %vm2657, %v2716, %v2723
      %v2725 = vrot.slane %v2720, 4
      %v2727 = vshrl.u32 %v2631, 16
      %v2729 = vrot.slane %v2727, 7
      %v2730 = vshll.u32 %v2631, 16
      %v2732 = vor.u32 %v2729, %v2730
      %v2733 = vrot.slane %v2729, 4
      %v2735 = vshrl.u32 %v2632, 16
      %v2737 = vrot.slane %v2735, 7
      %v2738 = vshll.u32 %v2632, 16
      %v2740 = vor.u32 %v2737, %v2738
      %v2741 = vsel %vm2657, %v2733, %v2740
      %v2742 = vrot.slane %v2737, 4
      %v2744 = vshrl.u32 %v2633, 16
      %v2746 = vrot.slane %v2744, 7
      %v2747 = vshll.u32 %v2633, 16
      %v2749 = vor.u32 %v2746, %v2747
      %v2750 = vrot.slane %v2746, 4
      %v2752 = vshrl.u32 %v2634, 16
      %v2754 = vrot.slane %v2752, 7
      %v2755 = vshll.u32 %v2634, 16
      %v2757 = vor.u32 %v2754, %v2755
      %v2758 = vsel %vm2657, %v2750, %v2757
      %v2759 = vrot.slane %v2754, 4
      %v2761 = vshrl.u32 %v2635, 16
      %v2763 = vrot.slane %v2761, 7
      %v2764 = vshll.u32 %v2635, 16
      %v2766 = vor.u32 %v2763, %v2764
      %v2767 = vrot.slane %v2763, 4
      %v2769 = vshrl.u32 %v2636, 16
      %v2771 = vrot.slane %v2769, 7
      %v2772 = vshll.u32 %v2636, 16
      %v2774 = vor.u32 %v2771, %v2772
      %v2775 = vsel %vm2657, %v2767, %v2774
      %v2776 = vrot.slane %v2771, 4
      %v2778 = vshrl.u32 %v2637, 16
      %v2780 = vrot.slane %v2778, 7
      %v2781 = vshll.u32 %v2637, 16
      %v2783 = vor.u32 %v2780, %v2781
      %v2784 = vrot.slane %v2780, 4
      %v2786 = vshrl.u32 %v2638, 16
      %v2788 = vrot.slane %v2786, 7
      %v2789 = vshll.u32 %v2638, 16
      %v2791 = vor.u32 %v2788, %v2789
      %v2792 = vsel %vm2657, %v2784, %v2791
      %v2793 = vrot.slane %v2788, 4
      %v2795 = vshrl.u32 %v2639, 16
      %v2797 = vrot.slane %v2795, 7
      %v2798 = vshll.u32 %v2639, 16
      %v2800 = vor.u32 %v2797, %v2798
      %v2801 = vrot.slane %v2797, 4
      %v2803 = vshrl.u32 %v2640, 16
      %v2805 = vrot.slane %v2803, 7
      %v2806 = vshll.u32 %v2640, 16
      %v2808 = vor.u32 %v2805, %v2806
      %v2809 = vsel %vm2657, %v2801, %v2808
      %v2810 = vrot.slane %v2805, 4
      %v2812 = vshrl.u32 %v2641, 16
      %v2814 = vrot.slane %v2812, 7
      %v2815 = vshll.u32 %v2641, 16
      %v2817 = vor.u32 %v2814, %v2815
      %v2818 = vrot.slane %v2814, 4
      %v2820 = vshrl.u32 %v2642, 16
      %v2822 = vrot.slane %v2820, 7
      %v2823 = vshll.u32 %v2642, 16
      %v2825 = vor.u32 %v2822, %v2823
      %v2826 = vsel %vm2657, %v2818, %v2825
      %v2827 = vrot.slane %v2822, 4
      %v2829 = vshrl.u32 %v2643, 16
      %v2831 = vrot.slane %v2829, 7
      %v2832 = vshll.u32 %v2643, 16
      %v2834 = vor.u32 %v2831, %v2832
      %v2835 = vrot.slane %v2831, 4
      %v2837 = vshrl.u32 %v2644, 16
      %v2839 = vrot.slane %v2837, 7
      %v2840 = vshll.u32 %v2644, 16
      %v2842 = vor.u32 %v2839, %v2840
      %v2843 = vsel %vm2657, %v2835, %v2842
      %v2844 = vrot.slane %v2839, 4
      %v2846 = vshrl.u32 %v2645, 16
      %v2848 = vrot.slane %v2846, 7
      %v2849 = vshll.u32 %v2645, 16
      %v2851 = vor.u32 %v2848, %v2849
      %v2852 = vrot.slane %v2848, 4
      %v2854 = vshrl.u32 %v2646, 16
      %v2856 = vrot.slane %v2854, 7
      %v2857 = vshll.u32 %v2646, 16
      %v2859 = vor.u32 %v2856, %v2857
      %v2860 = vsel %vm2657, %v2852, %v2859
      %v2861 = vrot.slane %v2856, 4
      %v2863 = vshrl.u32 %v2647, 16
      %v2865 = vrot.slane %v2863, 7
      %v2866 = vshll.u32 %v2647, 16
      %v2868 = vor.u32 %v2865, %v2866
      %v2869 = vrot.slane %v2865, 4
      %v2871 = vshrl.u32 %v2648, 16
      %v2873 = vrot.slane %v2871, 7
      %v2874 = vshll.u32 %v2648, 16
      %v2876 = vor.u32 %v2873, %v2874
      %v2877 = vsel %vm2657, %v2869, %v2876
      %v2878 = vrot.slane %v2873, 4
      %v2880 = vshrl.u32 %v2649, 16
      %v2882 = vrot.slane %v2880, 7
      %v2883 = vshll.u32 %v2649, 16
      %v2885 = vor.u32 %v2882, %v2883
      %v2886 = vrot.slane %v2882, 4
      %v2888 = vshrl.u32 %v2650, 16
      %v2890 = vrot.slane %v2888, 7
      %v2891 = vshll.u32 %v2650, 16
      %v2893 = vor.u32 %v2890, %v2891
      %v2894 = vsel %vm2657, %v2886, %v2893
      %v2895 = vrot.slane %v2890, 4
      %v2897 = vshrl.u32 %v2651, 16
      %v2899 = vrot.slane %v2897, 7
      %v2900 = vshll.u32 %v2651, 16
      %v2902 = vor.u32 %v2899, %v2900
      %v2903 = vrot.slane %v2899, 4
      %v2905 = vshrl.u32 %v2652, 16
      %v2907 = vrot.slane %v2905, 7
      %v2908 = vshll.u32 %v2652, 16
      %v2910 = vor.u32 %v2907, %v2908
      %v2911 = vsel %vm2657, %v2903, %v2910
      %v2912 = vrot.slane %v2907, 4
      %v2914 = vshrl.u32 %v2653, 16
      %v2916 = vrot.slane %v2914, 7
      %v2917 = vshll.u32 %v2653, 16
      %v2919 = vor.u32 %v2916, %v2917
      %v2920 = vrot.slane %v2916, 4
      %v2922 = vshrl.u32 %v2654, 16
      %v2924 = vrot.slane %v2922, 7
      %v2925 = vshll.u32 %v2654, 16
      %v2927 = vor.u32 %v2924, %v2925
      %v2928 = vsel %vm2657, %v2920, %v2927
      %v2929 = vrot.slane %v2924, 4
      %s2978 = scalar_lea.vmem %s221, 12
      %vm2979 = vcmask 125952
      %vm2980 = vsmask.f32 7938
      %vm2981 = vmand %vm2979, %vm2980
      %v2982 = vld [vmem:[%s2978] sm:$0xf]
      %v2983 = vsel %vm2981, %v2664, %v2982
      %2984 = vst [vmem:[%s2978] sm:$0xf] %v2983
      %2985 = vst.msk [vmem:[%s2978 + $0x4] sm:$0xf] %vm223, %v2673
      %vm2986 = vcmask 122880
      %vm2987 = vmand %vm2986, %vm2655
      %v2988 = vld [vmem:[%s2978 + $0x8] sm:$0x1]
      %v2989 = vsel %vm2987, %v2674, %v2988
      %2990 = vst [vmem:[%s2978 + $0x8] sm:$0x1] %v2989
      %v2991 = vld [vmem:[%s2978 + $0xc] sm:$0xf]
      %v2992 = vsel %vm2981, %v2681, %v2991
      %2993 = vst [vmem:[%s2978 + $0xc] sm:$0xf] %v2992
      %2994 = vst.msk [vmem:[%s2978 + $0x10] sm:$0xf] %vm223, %v2690
      %v2995 = vld [vmem:[%s2978 + $0x14] sm:$0x1]
      %v2996 = vsel %vm2987, %v2691, %v2995
      %2997 = vst [vmem:[%s2978 + $0x14] sm:$0x1] %v2996
      %v2998 = vld [vmem:[%s2978 + $0x18] sm:$0xf]
      %v2999 = vsel %vm2981, %v2698, %v2998
      %3000 = vst [vmem:[%s2978 + $0x18] sm:$0xf] %v2999
      %3001 = vst.msk [vmem:[%s2978 + $0x1c] sm:$0xf] %vm223, %v2707
      %v3002 = vld [vmem:[%s2978 + $0x20] sm:$0x1]
      %v3003 = vsel %vm2987, %v2708, %v3002
      %3004 = vst [vmem:[%s2978 + $0x20] sm:$0x1] %v3003
      %v3005 = vld [vmem:[%s2978 + $0x24] sm:$0xf]
      %v3006 = vsel %vm2981, %v2715, %v3005
      %3007 = vst [vmem:[%s2978 + $0x24] sm:$0xf] %v3006
      %3008 = vst.msk [vmem:[%s2978 + $0x28] sm:$0xf] %vm223, %v2724
      %v3009 = vld [vmem:[%s2978 + $0x2c] sm:$0x1]
      %v3010 = vsel %vm2987, %v2725, %v3009
      %3011 = vst [vmem:[%s2978 + $0x2c] sm:$0x1] %v3010
      %v3012 = vld [vmem:[%s2978 + $0x30] sm:$0xf]
      %v3013 = vsel %vm2981, %v2732, %v3012
      %3014 = vst [vmem:[%s2978 + $0x30] sm:$0xf] %v3013
      %3015 = vst.msk [vmem:[%s2978 + $0x34] sm:$0xf] %vm223, %v2741
      %v3016 = vld [vmem:[%s2978 + $0x38] sm:$0x1]
      %v3017 = vsel %vm2987, %v2742, %v3016
      %3018 = vst [vmem:[%s2978 + $0x38] sm:$0x1] %v3017
      %v3019 = vld [vmem:[%s2978 + $0x3c] sm:$0xf]
      %v3020 = vsel %vm2981, %v2749, %v3019
      %3021 = vst [vmem:[%s2978 + $0x3c] sm:$0xf] %v3020
      %3022 = vst.msk [vmem:[%s2978 + $0x40] sm:$0xf] %vm223, %v2758
      %v3023 = vld [vmem:[%s2978 + $0x44] sm:$0x1]
      %v3024 = vsel %vm2987, %v2759, %v3023
      %3025 = vst [vmem:[%s2978 + $0x44] sm:$0x1] %v3024
      %v3026 = vld [vmem:[%s2978 + $0x48] sm:$0xf]
      %v3027 = vsel %vm2981, %v2766, %v3026
      %3028 = vst [vmem:[%s2978 + $0x48] sm:$0xf] %v3027
      %3029 = vst.msk [vmem:[%s2978 + $0x4c] sm:$0xf] %vm223, %v2775
      %v3030 = vld [vmem:[%s2978 + $0x50] sm:$0x1]
      %v3031 = vsel %vm2987, %v2776, %v3030
      %3032 = vst [vmem:[%s2978 + $0x50] sm:$0x1] %v3031
      %v3033 = vld [vmem:[%s2978 + $0x54] sm:$0xf]
      %v3034 = vsel %vm2981, %v2783, %v3033
      %3035 = vst [vmem:[%s2978 + $0x54] sm:$0xf] %v3034
      %3036 = vst.msk [vmem:[%s2978 + $0x58] sm:$0xf] %vm223, %v2792
      %v3037 = vld [vmem:[%s2978 + $0x5c] sm:$0x1]
      %v3038 = vsel %vm2987, %v2793, %v3037
      %3039 = vst [vmem:[%s2978 + $0x5c] sm:$0x1] %v3038
      %v3040 = vld [vmem:[%s2978 + $0x60] sm:$0xf]
      %v3041 = vsel %vm2981, %v2800, %v3040
      %3042 = vst [vmem:[%s2978 + $0x60] sm:$0xf] %v3041
      %3043 = vst.msk [vmem:[%s2978 + $0x64] sm:$0xf] %vm223, %v2809
      %v3044 = vld [vmem:[%s2978 + $0x68] sm:$0x1]
      %v3045 = vsel %vm2987, %v2810, %v3044
      %3046 = vst [vmem:[%s2978 + $0x68] sm:$0x1] %v3045
      %v3047 = vld [vmem:[%s2978 + $0x6c] sm:$0xf]
      %v3048 = vsel %vm2981, %v2817, %v3047
      %3049 = vst [vmem:[%s2978 + $0x6c] sm:$0xf] %v3048
      %3050 = vst.msk [vmem:[%s2978 + $0x70] sm:$0xf] %vm223, %v2826
      %v3051 = vld [vmem:[%s2978 + $0x74] sm:$0x1]
      %v3052 = vsel %vm2987, %v2827, %v3051
      %3053 = vst [vmem:[%s2978 + $0x74] sm:$0x1] %v3052
      %v3054 = vld [vmem:[%s2978 + $0x78] sm:$0xf]
      %v3055 = vsel %vm2981, %v2834, %v3054
      %3056 = vst [vmem:[%s2978 + $0x78] sm:$0xf] %v3055
      %3057 = vst.msk [vmem:[%s2978 + $0x7c] sm:$0xf] %vm223, %v2843
      %v3058 = vld [vmem:[%s2978 + $0x80] sm:$0x1]
      %v3059 = vsel %vm2987, %v2844, %v3058
      %3060 = vst [vmem:[%s2978 + $0x80] sm:$0x1] %v3059
      %v3061 = vld [vmem:[%s2978 + $0x84] sm:$0xf]
      %v3062 = vsel %vm2981, %v2851, %v3061
      %3063 = vst [vmem:[%s2978 + $0x84] sm:$0xf] %v3062
      %3064 = vst.msk [vmem:[%s2978 + $0x88] sm:$0xf] %vm223, %v2860
      %v3065 = vld [vmem:[%s2978 + $0x8c] sm:$0x1]
      %v3066 = vsel %vm2987, %v2861, %v3065
      %3067 = vst [vmem:[%s2978 + $0x8c] sm:$0x1] %v3066
      %v3068 = vld [vmem:[%s2978 + $0x90] sm:$0xf]
      %v3069 = vsel %vm2981, %v2868, %v3068
      %3070 = vst [vmem:[%s2978 + $0x90] sm:$0xf] %v3069
      %3071 = vst.msk [vmem:[%s2978 + $0x94] sm:$0xf] %vm223, %v2877
      %v3072 = vld [vmem:[%s2978 + $0x98] sm:$0x1]
      %v3073 = vsel %vm2987, %v2878, %v3072
      %3074 = vst [vmem:[%s2978 + $0x98] sm:$0x1] %v3073
      %v3075 = vld [vmem:[%s2978 + $0x9c] sm:$0xf]
      %v3076 = vsel %vm2981, %v2885, %v3075
      %3077 = vst [vmem:[%s2978 + $0x9c] sm:$0xf] %v3076
      %3078 = vst.msk [vmem:[%s2978 + $0xa0] sm:$0xf] %vm223, %v2894
      %v3079 = vld [vmem:[%s2978 + $0xa4] sm:$0x1]
      %v3080 = vsel %vm2987, %v2895, %v3079
      %3081 = vst [vmem:[%s2978 + $0xa4] sm:$0x1] %v3080
      %v3082 = vld [vmem:[%s2978 + $0xa8] sm:$0xf]
      %v3083 = vsel %vm2981, %v2902, %v3082
      %3084 = vst [vmem:[%s2978 + $0xa8] sm:$0xf] %v3083
      %3085 = vst.msk [vmem:[%s2978 + $0xac] sm:$0xf] %vm223, %v2911
      %v3086 = vld [vmem:[%s2978 + $0xb0] sm:$0x1]
      %v3087 = vsel %vm2987, %v2912, %v3086
      %3088 = vst [vmem:[%s2978 + $0xb0] sm:$0x1] %v3087
      %v3089 = vld [vmem:[%s2978 + $0xb4] sm:$0xf]
      %v3090 = vsel %vm2981, %v2919, %v3089
      %3091 = vst [vmem:[%s2978 + $0xb4] sm:$0xf] %v3090
      %3092 = vst.msk [vmem:[%s2978 + $0xb8] sm:$0xf] %vm223, %v2928
      %v3093 = vld [vmem:[%s2978 + $0xbc] sm:$0x1]
      %v3094 = vsel %vm2987, %v2929, %v3093
      %3095 = vst [vmem:[%s2978 + $0xbc] sm:$0x1] %v3094
      %p3096 = scmp.lt.s32.totalorder %s18, 1
      %s3097 = scalar_select %p3096, %s18, 1
      %p3098 = scmp.lt.s32.totalorder %s19, 0
      %s3099 = scalar_select %p3098, %s19, 0
      %s3100 = smul.addr %s3097, 54
      %s3101 = sadd.s32 %s3099, %s3100
      %s3102 = smul.addr %s3101, 4
      %s3103 = scalar_lea.vmem %s3, %s3102
      // Predicated region
      $region33: #{discriminator_mid_block.2} parent=31 // pred_check
        %p3104 = pneg %p124
      $region34: #{discriminator_mid_block.2} parent=31 // pred_check_branch
        %3106 = sbr.rel (%p3104) target = $region36
      $region35: #{discriminator_mid_block.2} parent=31 // pred_region
        _
      $region36: #{discriminator_mid_block.2} parent=31 // pred_fallthru
        _
    $region32: #{discriminator_mid_block.2} parent=5 // pred_fallthru
      _
    %p3107 = scmp.le.s32.totalorder 2, %s9
    // Predicated region
    $region37: #{discriminator_mid_block.2} parent=5 // pred_check
      %p3108 = pneg %p3107
    $region38: #{discriminator_mid_block.2} parent=5 // pred_check_branch
      %3110 = sbr.rel (%p3108) target = $region40
    $region39: #{discriminator_mid_block.2} parent=5 // pred_region
      %s3111 = ssub.s32 %s9, 2
      // Predicated region
      $region41: #{discriminator_mid_block.2} parent=39 // pred_check
        %p3112 = pneg %p130
      $region42: #{discriminator_mid_block.2} parent=39 // pred_check_branch
        %3114 = sbr.rel (%p3112) target = $region44
      $region43: #{discriminator_mid_block.2} parent=39 // pred_region
        %p3115 = scmp.lt.s32.totalorder %s20, 1
        %s3116 = scalar_select %p3115, %s20, 1
        %p3117 = scmp.lt.s32.totalorder %s21, 0
        %s3118 = scalar_select %p3117, %s21, 0
        %s3119 = smul.addr %s3116, 54
        %s3120 = sadd.s32 %s3118, %s3119
        %s3121 = smul.addr %s3120, 4
        %s3122 = scalar_lea.vmem %s3, %s3121
      $region44: #{discriminator_mid_block.2} parent=39 // pred_fallthru
        _
    $region40: #{discriminator_mid_block.2} parent=5 // pred_fallthru
      _
  $region6: #{discriminator_mid_block.2} parent=0 // loop_footer
    %s13 = sadd.s32 1, %s9
  $region7: #{discriminator_mid_block.2} parent=0 // loop_footer_branch
    %8 = sbr.rel target = $region3
  $region8: #{discriminator_mid_block.2} parent=0 // loop_exit
    _

</llo_original>
